<compile_context>
chip_gen: v7x
topology: tpu7x:2x2x1
jax: 0.10.0
libtpu: 0.0.40
codegen_flags: <defaults>
</compile_context>

<pallas_src>
import jax
import jax.numpy as jnp
import numpy as np
from jax import lax
from jax.experimental import pallas as pl
from jax.experimental.pallas import tpu as pltpu

PAD = 8                                   # max dilation (== conv padding in torch)
DILATIONS = (1, 2, 4, 8)
# distinct time offsets contributed by the 3-tap dilated convs (+ offset-0 residual)
OFFSETS = (0, -8, -4, -2, -1, 1, 2, 4, 8)


# --------------------------------------------------------------------------- #
# Kernel                                                                      #
# --------------------------------------------------------------------------- #
def hybrid_encoder_kernel(
    xpad_ref,  # [1, T+2*PAD, E] f32   padded token embeddings (one batch row)
    Kt_ref,    # [T, T]          bf16  composite causal-Toeplitz SSM kernel
    Wb_ref,    # [9, E, E]       bf16  folded conv-pyramid blocks (per offset)
    bcv_ref,   # [1, E]          f32   folded conv bias
    g_ref,     # [1, E]          f32   LayerNorm gamma
    be_ref,    # [1, E]          f32   LayerNorm beta
    W1a_ref,   # [E, H]          bf16  fusion Linear-1 weight (forward half)
    W1b_ref,   # [E, H]          bf16  fusion Linear-1 weight (backward half)
    b1_ref,    # [1, H]          f32
    W2_ref,    # [H, E]          bf16  fusion Linear-2 weight
    b2_ref,    # [1, E]          f32
    out_ref,   # [1, T, E]       f32
):
    _, T, E = out_ref.shape
    cdt = Kt_ref.dtype                     # matmul compute dtype (bf16 or f32)

    x = xpad_ref[0, PAD:PAD + T, :]        # [T, E] f32, un-shifted window

    # ---- forward path: all 3 SSM layers folded into ONE composite causal
    #      Toeplitz; RHS is u broadcast across the E lanes so the MXU matmul is
    #      lane-dense (N = E) instead of the old N = 1 column product.
    # TODO(synk): for long T add a T-chunk grid axis with a block-banded
    # lower-triangular Kt + f32 carry so the [T,T] kernel fits v7x's 64 MiB VMEM.
    u = jnp.mean(x, axis=-1, keepdims=True)                   # [T, 1] f32 (XLU)
    u_b = jnp.broadcast_to(u, (T, E)).astype(cdt)             # [T, E]
    y = jnp.dot(Kt_ref[...], u_b, preferred_element_type=jnp.float32)   # [T, E]
    ff = x + y                                                # f32

    # ---- backward path: grouped dilated convs + pointwise conv + residual,
    #      folded host-side into nine [E,E] blocks; nine shifted-window matmuls
    #      over the single padded activation block (no 9x lane-stacked HBM input).
    bw = jnp.zeros((T, E), jnp.float32)
    for i, off in enumerate(OFFSETS):
        xo = xpad_ref[0, PAD + off:PAD + off + T, :]          # shifted window
        bw = bw + jnp.dot(xo.astype(cdt), Wb_ref[i],
                          preferred_element_type=jnp.float32)
    bw = bw + bcv_ref[...]

    # LayerNorm (statistics in f32)
    mu = jnp.mean(bw, axis=-1, keepdims=True)
    var = jnp.mean((bw - mu) ** 2, axis=-1, keepdims=True)
    bw = (bw - mu) * lax.rsqrt(var + 1e-5) * g_ref[...] + be_ref[...]

    # ---- fusion MLP (dropout = identity in eval); W1 split host-side so no
    #      in-kernel [T, 2E] lane concat is materialized.
    h1 = (jnp.dot(ff.astype(cdt), W1a_ref[...], preferred_element_type=jnp.float32)
          + jnp.dot(bw.astype(cdt), W1b_ref[...], preferred_element_type=jnp.float32)
          + b1_ref[...])
    h1 = h1 * jax.nn.sigmoid(h1)                              # SiLU (EUP)
    out = jnp.dot(h1.astype(cdt), W2_ref[...],
                  preferred_element_type=jnp.float32) + b2_ref[...]
    # TODO(synk): production E(=256)/H(=512) are lane-dense multiples of 128; the
    # toy E=32 test shape produces masked partial stores on v5e.
    out_ref[...] = out.reshape(1, T, E)


# --------------------------------------------------------------------------- #
# Parameters (torch-equivalent) and host-side folding                         #
# --------------------------------------------------------------------------- #
def init_params(key, vocab, E, Hd):
    Eq = E // 4
    groups = 4
    in_pg = E // groups
    out_pg = Eq // groups
    ks = jax.random.split(key, 12)
    p = {}
    p["embed"] = jax.random.normal(ks[0], (vocab, E), jnp.float32)
    A = jax.random.normal(ks[1], (3, E, E), jnp.float32) * (E ** -0.5)
    p["At"] = jnp.transpose(A, (0, 2, 1))                       # A^T per layer
    p["Bv"] = jax.random.normal(ks[2], (3, 1, E), jnp.float32) * (E ** -0.5)
    p["Cv"] = jax.random.normal(ks[3], (3, 1, E), jnp.float32) * (E ** -0.5)
    p["D"] = jnp.zeros((3,), jnp.float32)                       # torch init: zeros
    # grouped dilated convs: torch weight (Eq, E/groups, 3) -> dense [4, 3, E, Eq]
    Wg = jax.random.normal(ks[4], (4, Eq, in_pg, 3), jnp.float32) * 0.1
    p["bc"] = (jax.random.normal(ks[5], (4, Eq), jnp.float32) * 0.1).reshape(4, 1, Eq)
    Wc = jnp.zeros((4, 3, E, Eq), jnp.float32)
    for di in range(4):
        for gi in range(groups):
            blk = Wg[di, gi * out_pg:(gi + 1) * out_pg, :, :]   # [out_pg, in_pg, 3]
            blk = jnp.transpose(blk, (2, 1, 0))                 # [3, in_pg, out_pg]
            Wc = Wc.at[di, :, gi * in_pg:(gi + 1) * in_pg,
                       gi * out_pg:(gi + 1) * out_pg].set(blk)
    p["Wc"] = Wc
    p["Wpw"] = jax.random.normal(ks[6], (E, E), jnp.float32) * (E ** -0.5)
    p["bpw"] = jax.random.normal(ks[7], (1, E), jnp.float32) * 0.05
    p["ln_g"] = jnp.ones((1, E), jnp.float32)
    p["ln_b"] = jnp.zeros((1, E), jnp.float32)
    p["W1"] = jax.random.normal(ks[8], (2 * E, Hd), jnp.float32) * ((2 * E) ** -0.5)
    p["b1"] = jnp.zeros((1, Hd), jnp.float32)
    p["W2"] = jax.random.normal(ks[9], (Hd, E), jnp.float32) * (Hd ** -0.5)
    p["b2"] = jnp.zeros((1, E), jnp.float32)
    return p


def fold_params(p, T, dtype=jnp.bfloat16):
    """Param-only host-side folding (runs once, numpy float64, zero runtime cost).

    * 3 SSM layers -> ONE composite causal-Toeplitz K_total (D on each diagonal),
      exact because every y_l broadcasts uniformly over E.
    * Grouped dilated convs + pointwise conv + residual identity + biases -> nine
      dense [E, E] blocks (one per distinct time offset) and one bias [1, E].
    * Matmul weights are cast to `dtype` (bf16 for deployment); biases / LN params
      stay f32 because they feed f32 accumulators.
    """
    E = p["Wpw"].shape[0]
    Eq = E // 4

    # ----- SSM composite Toeplitz (float64: powers of A^T are not contractive)
    At = np.asarray(p["At"], np.float64)
    Bv = np.asarray(p["Bv"], np.float64)
    Cv = np.asarray(p["Cv"], np.float64)
    Dv = np.asarray(p["D"], np.float64)
    ti = np.arange(T)[:, None]
    si = np.arange(T)[None, :]
    eye_T = np.eye(T)
    Ktot = np.eye(T)
    for l in range(3):
        v = Bv[l, 0].copy()
        kvec = np.empty((T,), np.float64)
        for d in range(T):                       # kvec[d] = Bv (A^T)^d . Cv
            kvec[d] = v @ Cv[l, 0]
            v = v @ At[l]
        Kl = np.where(ti >= si, kvec[np.clip(ti - si, 0, T - 1)], 0.0)
        Kl = Kl + Dv[l] * eye_T
        Ktot = (eye_T + Kl) @ Ktot               # u_{l+1} = (I + K_l) u_l
    Ktot = Ktot - eye_T                          # ff = x + (Ktot @ u0) bcast over E

    # ----- backward conv pyramid + pointwise + residual -> nine [E, E] blocks
    Wc = np.asarray(p["Wc"], np.float64)         # [4, 3, E, Eq]
    Wpw = np.asarray(p["Wpw"], np.float64)       # [E, E]
    bcg = np.asarray(p["bc"], np.float64)        # [4, 1, Eq]
    bcat = np.asarray(p["bpw"], np.float64)      # [1, E]
    acc = {o: np.zeros((E, E), np.float64) for o in OFFSETS}
    for g, dil in enumerate(DILATIONS):
        Wpw_g = Wpw[g * Eq:(g + 1) * Eq, :]      # [Eq, E]
        bcat = bcat + bcg[g] @ Wpw_g
        for k in range(3):
            o = (k - 1) * dil
            acc[o] = acc[o] + Wc[g, k] @ Wpw_g
    acc[0] = acc[0] + np.eye(E)                  # residual connection
    Wb = np.stack([acc[o] for o in OFFSETS], axis=0)   # [9, E, E]

    return {
        "embed": p["embed"],                                  # f32 (XLA gather)
        "Kt": jnp.asarray(Ktot, dtype=dtype),                 # [T, T]
        "Wb": jnp.asarray(Wb, dtype=dtype),                   # [9, E, E]
        "bcv": jnp.asarray(bcat, dtype=jnp.float32),          # [1, E]
        "ln_g": p["ln_g"].astype(jnp.float32),
        "ln_b": p["ln_b"].astype(jnp.float32),
        "W1a": p["W1"][:E].astype(dtype),                     # [E, H]
        "W1b": p["W1"][E:].astype(dtype),                     # [E, H]
        "b1": p["b1"].astype(jnp.float32),
        "W2": p["W2"].astype(dtype),                          # [H, E]
        "b2": p["b2"].astype(jnp.float32),
    }


# --------------------------------------------------------------------------- #
# Wrapper                                                                     #
# --------------------------------------------------------------------------- #
def _vmem_limit_bytes():
    # v5e/v6e: 128 MiB physical VMEM -> raise the 32 MiB scoped default to ~100 MiB;
    # v7x: only 64 MiB per TensorCore -> stay at <= ~48 MiB.
    try:
        cap = pltpu.get_tpu_info().vmem_capacity_bytes
    except Exception:
        cap = 64 * 1024 * 1024
    return max(32 * 1024 * 1024,
               min(100 * 1024 * 1024, int(cap) - 16 * 1024 * 1024))


def _encoder_impl(tokens, fp, *, single_buffer=True):
    B, T = tokens.shape
    E = fp["ln_g"].shape[1]
    H = fp["b1"].shape[1]
    Tp = T + 2 * PAD
    nf = len(OFFSETS)

    # Embedding row-gather stays in XLA glue; pad once so every kernel access to
    # the 9 time-shifted windows is a plain in-kernel ref load (no 9x HBM stack).
    # TODO(synk): ship the activation block in bf16 too (another ~2x on activation
    # HBM); needs packed-dtype sublane-misaligned window loads, kept f32 here.
    emb = jnp.take(fp["embed"], tokens, axis=0)                # [B, T, E] f32
    xpad = jnp.pad(emb, ((0, 0), (PAD, PAD), (0, 0)))          # [B, T+16, E]

    def const_spec(shape):
        imap = {2: (lambda b: (0, 0)), 3: (lambda b: (0, 0, 0))}[len(shape)]
        if single_buffer:
            # grid-invariant operand: fetched once, no double-buffer VMEM waste
            return pl.BlockSpec(shape, imap, pipeline_mode=pl.Buffered(1))
        return pl.BlockSpec(shape, imap)

    # TODO(synk): tile Bt>1 batch rows per grid step (flatten to [Bt*T, .]) once B
    # is large, sized per-generation from the VMEM budget.
    return pl.pallas_call(
        hybrid_encoder_kernel,
        out_shape=jax.ShapeDtypeStruct((B, T, E), jnp.float32),
        grid=(B,),
        in_specs=[
            pl.BlockSpec((1, Tp, E), lambda b: (b, 0, 0)),     # activations
            const_spec((T, T)),                                # composite SSM Toeplitz
            const_spec((nf, E, E)),                            # folded conv blocks
            const_spec((1, E)),                                # folded conv bias
            const_spec((1, E)),                                # LN gamma
            const_spec((1, E)),                                # LN beta
            const_spec((E, H)),                                # W1a
            const_spec((E, H)),                                # W1b
            const_spec((1, H)),                                # b1
            const_spec((H, E)),                                # W2
            const_spec((1, E)),                                # b2
        ],
        out_specs=pl.BlockSpec((1, T, E), lambda b: (b, 0, 0)),
        compiler_params=pltpu.CompilerParams(
            dimension_semantics=("parallel",),                 # megacore over batch
            vmem_limit_bytes=_vmem_limit_bytes()),
    )(xpad, fp["Kt"], fp["Wb"], fp["bcv"], fp["ln_g"], fp["ln_b"],
      fp["W1a"], fp["W1b"], fp["b1"], fp["W2"], fp["b2"])


run_encoder = jax.jit(_encoder_impl, static_argnames=("single_buffer",))

_SINGLE_BUFFER_OK = [True]


def call_encoder(tokens, fp):
    if _SINGLE_BUFFER_OK[0]:
        try:
            return jax.block_until_ready(run_encoder(tokens, fp, single_buffer=True))
        except Exception:
            # pl.Buffered(1) single-buffering not available on this jax build:
            # fall back to default (double-buffered) specs.
            _SINGLE_BUFFER_OK[0] = False
    return jax.block_until_ready(run_encoder(tokens, fp, single_buffer=False))


# --------------------------------------------------------------------------- #
# Pure-JAX reference mirroring the PyTorch forward (return_sequence=True)     #
# --------------------------------------------------------------------------- #
def reference(tokens, p):
    with jax.default_matmul_precision("highest"):
        emb = jnp.take(p["embed"], tokens, axis=0)
        B, T, E = emb.shape
        Eq = E // 4
        ff = emb
        for l in range(3):
            u = jnp.mean(ff, axis=-1)                           # [B, T]

            def step(h, u_t, l=l):
                h = h @ p["At"][l] + u_t[:, None] * p["Bv"][l]
                return h, jnp.sum(h * p["Cv"][l], axis=-1)

            _, ys = lax.scan(step, jnp.zeros((B, E), jnp.float32), u.T)
            y = ys.T + u * p["D"][l]
            ff = ff + y[:, :, None]
        xpad = jnp.pad(emb, ((0, 0), (PAD, PAD), (0, 0)))
        scales = []
        for g, dil in enumerate(DILATIONS):
            acc = jnp.zeros((B, T, Eq), jnp.float32) + p["bc"][g]
            for k in range(3):
                off = PAD + (k - 1) * dil
                acc = acc + jnp.einsum("bte,ec->btc",
                                       xpad[:, off:off + T, :], p["Wc"][g, k])
            scales.append(acc)
        ms = jnp.concatenate(scales, axis=-1)
        bw = ms @ p["Wpw"] + p["bpw"]
        bw = bw + emb
        mu = bw.mean(-1, keepdims=True)
        var = ((bw - mu) ** 2).mean(-1, keepdims=True)
        bw = (bw - mu) / jnp.sqrt(var + 1e-5) * p["ln_g"] + p["ln_b"]
        comb = jnp.concatenate([ff, bw], axis=-1)
        h1 = jax.nn.silu(comb @ p["W1"] + p["b1"])
        return h1 @ p["W2"] + p["b2"]


if __name__ == "__main__":
    key = jax.random.PRNGKey(0)
    vocab, E, Hd = 50, 32, 64
    B, T = 2, 8
    pkey, tkey = jax.random.split(key)
    params = init_params(pkey, vocab, E, Hd)
    tokens = jax.random.randint(tkey, (B, T), 0, vocab)

    ref = reference(tokens, params)

    # f32 mode: validates the host-side folding + kernel math against the scan ref
    out32 = call_encoder(tokens, fold_params(params, T, dtype=jnp.float32))
    assert out32.shape == (B, T, E), out32.shape
    err32 = float(jnp.max(jnp.abs(out32 - ref)))
    assert jnp.allclose(out32, ref, atol=5e-3, rtol=5e-3), f"f32 max abs err {err32}"

    # bf16 deployment mode (weights bf16, f32 accumulation + LayerNorm stats)
    out16 = call_encoder(tokens, fold_params(params, T, dtype=jnp.bfloat16))
    err16 = float(jnp.max(jnp.abs(out16 - ref)))
    assert jnp.allclose(out16, ref, atol=1e-1, rtol=1e-1), f"bf16 max abs err {err16}"

    print("KERNEL_OK")
</pallas_src>

<mosaic_0001>
module attributes {stable_mosaic.version = 11 : i64} {
  func.func @hybrid_encoder_kernel(%arg0: i32, %arg1: memref<1x24x32xf32, #tpu.memory_space<vmem>>, %arg2: memref<8x8xf32, #tpu.memory_space<vmem>>, %arg3: memref<9x32x32xf32, #tpu.memory_space<vmem>>, %arg4: memref<1x32xf32, #tpu.memory_space<vmem>>, %arg5: memref<1x32xf32, #tpu.memory_space<vmem>>, %arg6: memref<1x32xf32, #tpu.memory_space<vmem>>, %arg7: memref<32x64xf32, #tpu.memory_space<vmem>>, %arg8: memref<32x64xf32, #tpu.memory_space<vmem>>, %arg9: memref<1x64xf32, #tpu.memory_space<vmem>>, %arg10: memref<64x32xf32, #tpu.memory_space<vmem>>, %arg11: memref<1x32xf32, #tpu.memory_space<vmem>>, %arg12: memref<1x8x32xf32, #tpu.memory_space<vmem>>) attributes {dimension_semantics = [#tpu.dimension_semantics<parallel>], iteration_bounds = array<i64: 2>, scalar_prefetch = 0 : i64, scratch_operands = 0 : i64, tpu.core_type = #tpu.core_type<tc>, window_params = [{transform_indices = @transform_0, window_bounds = array<i64: 1, 24, 32>}, {pipeline_mode = #tpu.pipeline_mode<synchronous>, transform_indices = @transform_1, window_bounds = array<i64: 8, 8>}, {pipeline_mode = #tpu.pipeline_mode<synchronous>, transform_indices = @transform_2, window_bounds = array<i64: 9, 32, 32>}, {pipeline_mode = #tpu.pipeline_mode<synchronous>, transform_indices = @transform_3, window_bounds = array<i64: 1, 32>}, {pipeline_mode = #tpu.pipeline_mode<synchronous>, transform_indices = @transform_4, window_bounds = array<i64: 1, 32>}, {pipeline_mode = #tpu.pipeline_mode<synchronous>, transform_indices = @transform_5, window_bounds = array<i64: 1, 32>}, {pipeline_mode = #tpu.pipeline_mode<synchronous>, transform_indices = @transform_6, window_bounds = array<i64: 32, 64>}, {pipeline_mode = #tpu.pipeline_mode<synchronous>, transform_indices = @transform_7, window_bounds = array<i64: 32, 64>}, {pipeline_mode = #tpu.pipeline_mode<synchronous>, transform_indices = @transform_8, window_bounds = array<i64: 1, 64>}, {pipeline_mode = #tpu.pipeline_mode<synchronous>, transform_indices = @transform_9, window_bounds = array<i64: 64, 32>}, {pipeline_mode = #tpu.pipeline_mode<synchronous>, transform_indices = @transform_10, window_bounds = array<i64: 1, 32>}, {transform_indices = @transform_11, window_bounds = array<i64: 1, 8, 32>}]} {
    %c0 = arith.constant 0 : index
    %c8 = arith.constant 8 : index
    %c0_0 = arith.constant 0 : index
    %0 = vector.load %arg1[%c0, %c8, %c0_0] : memref<1x24x32xf32, #tpu.memory_space<vmem>>, vector<1x8x32xf32>
    %1 = vector.shape_cast %0 : vector<1x8x32xf32> to vector<8x32xf32>
    %cst = arith.constant dense<0.000000e+00> : vector<8xf32>
    %2 = vector.multi_reduction <add>, %1, %cst [1] : vector<8x32xf32> to vector<8xf32>
    %3 = vector.shape_cast %2 : vector<8xf32> to vector<8x1xf32>
    %cst_1 = arith.constant 3.200000e+01 : f32
    %4 = vector.broadcast %cst_1 : f32 to vector<8x1xf32>
    %5 = arith.divf %3, %4 : vector<8x1xf32>
    %6 = vector.shape_cast %5 : vector<8x1xf32> to vector<8x1xf32>
    %7 = vector.broadcast %6 : vector<8x1xf32> to vector<8x32xf32>
    %c0_2 = arith.constant 0 : index
    %c0_3 = arith.constant 0 : index
    %8 = vector.load %arg2[%c0_2, %c0_3] : memref<8x8xf32, #tpu.memory_space<vmem>>, vector<8x8xf32>
    %cst_4 = arith.constant dense<0.000000e+00> : vector<8x32xf32>
    %9 = tpu.matmul %8, %7, %cst_4 {dimension_numbers = #tpu.dot_dimension_numbers<[1], [0], [0], [1], [0, 0, 1, 1], [], []>} : vector<8x8xf32>, vector<8x32xf32>, vector<8x32xf32> -> vector<8x32xf32>
    %10 = arith.addf %1, %9 : vector<8x32xf32>
    %cst_5 = arith.constant 0.000000e+00 : f32
    %11 = vector.broadcast %cst_5 : f32 to vector<8x32xf32>
    %c0_6 = arith.constant 0 : index
    %c8_7 = arith.constant 8 : index
    %c0_8 = arith.constant 0 : index
    %12 = vector.load %arg1[%c0_6, %c8_7, %c0_8] : memref<1x24x32xf32, #tpu.memory_space<vmem>>, vector<1x8x32xf32>
    %13 = vector.shape_cast %12 : vector<1x8x32xf32> to vector<8x32xf32>
    %c0_9 = arith.constant 0 : index
    %c0_10 = arith.constant 0 : index
    %c0_11 = arith.constant 0 : index
    %14 = vector.load %arg3[%c0_9, %c0_10, %c0_11] : memref<9x32x32xf32, #tpu.memory_space<vmem>>, vector<1x32x32xf32>
    %15 = vector.shape_cast %14 : vector<1x32x32xf32> to vector<32x32xf32>
    %cst_12 = arith.constant dense<0.000000e+00> : vector<8x32xf32>
    %16 = tpu.matmul %13, %15, %cst_12 {dimension_numbers = #tpu.dot_dimension_numbers<[1], [0], [0], [1], [0, 0, 1, 1], [], []>} : vector<8x32xf32>, vector<32x32xf32>, vector<8x32xf32> -> vector<8x32xf32>
    %17 = arith.addf %11, %16 : vector<8x32xf32>
    %c0_13 = arith.constant 0 : index
    %c0_14 = arith.constant 0 : index
    %c0_15 = arith.constant 0 : index
    %18 = vector.load %arg1[%c0_13, %c0_14, %c0_15] : memref<1x24x32xf32, #tpu.memory_space<vmem>>, vector<1x8x32xf32>
    %19 = vector.shape_cast %18 : vector<1x8x32xf32> to vector<8x32xf32>
    %c1 = arith.constant 1 : index
    %c0_16 = arith.constant 0 : index
    %c0_17 = arith.constant 0 : index
    %20 = vector.load %arg3[%c1, %c0_16, %c0_17] : memref<9x32x32xf32, #tpu.memory_space<vmem>>, vector<1x32x32xf32>
    %21 = vector.shape_cast %20 : vector<1x32x32xf32> to vector<32x32xf32>
    %cst_18 = arith.constant dense<0.000000e+00> : vector<8x32xf32>
    %22 = tpu.matmul %19, %21, %cst_18 {dimension_numbers = #tpu.dot_dimension_numbers<[1], [0], [0], [1], [0, 0, 1, 1], [], []>} : vector<8x32xf32>, vector<32x32xf32>, vector<8x32xf32> -> vector<8x32xf32>
    %23 = arith.addf %17, %22 : vector<8x32xf32>
    %c0_19 = arith.constant 0 : index
    %c4 = arith.constant 4 : index
    %c0_20 = arith.constant 0 : index
    %24 = vector.load %arg1[%c0_19, %c4, %c0_20] : memref<1x24x32xf32, #tpu.memory_space<vmem>>, vector<1x8x32xf32>
    %25 = vector.shape_cast %24 : vector<1x8x32xf32> to vector<8x32xf32>
    %c2 = arith.constant 2 : index
    %c0_21 = arith.constant 0 : index
    %c0_22 = arith.constant 0 : index
    %26 = vector.load %arg3[%c2, %c0_21, %c0_22] : memref<9x32x32xf32, #tpu.memory_space<vmem>>, vector<1x32x32xf32>
    %27 = vector.shape_cast %26 : vector<1x32x32xf32> to vector<32x32xf32>
    %cst_23 = arith.constant dense<0.000000e+00> : vector<8x32xf32>
    %28 = tpu.matmul %25, %27, %cst_23 {dimension_numbers = #tpu.dot_dimension_numbers<[1], [0], [0], [1], [0, 0, 1, 1], [], []>} : vector<8x32xf32>, vector<32x32xf32>, vector<8x32xf32> -> vector<8x32xf32>
    %29 = arith.addf %23, %28 : vector<8x32xf32>
    %c0_24 = arith.constant 0 : index
    %c6 = arith.constant 6 : index
    %c0_25 = arith.constant 0 : index
    %30 = vector.load %arg1[%c0_24, %c6, %c0_25] : memref<1x24x32xf32, #tpu.memory_space<vmem>>, vector<1x8x32xf32>
    %31 = vector.shape_cast %30 : vector<1x8x32xf32> to vector<8x32xf32>
    %c3 = arith.constant 3 : index
    %c0_26 = arith.constant 0 : index
    %c0_27 = arith.constant 0 : index
    %32 = vector.load %arg3[%c3, %c0_26, %c0_27] : memref<9x32x32xf32, #tpu.memory_space<vmem>>, vector<1x32x32xf32>
    %33 = vector.shape_cast %32 : vector<1x32x32xf32> to vector<32x32xf32>
    %cst_28 = arith.constant dense<0.000000e+00> : vector<8x32xf32>
    %34 = tpu.matmul %31, %33, %cst_28 {dimension_numbers = #tpu.dot_dimension_numbers<[1], [0], [0], [1], [0, 0, 1, 1], [], []>} : vector<8x32xf32>, vector<32x32xf32>, vector<8x32xf32> -> vector<8x32xf32>
    %35 = arith.addf %29, %34 : vector<8x32xf32>
    %c0_29 = arith.constant 0 : index
    %c7 = arith.constant 7 : index
    %c0_30 = arith.constant 0 : index
    %36 = vector.load %arg1[%c0_29, %c7, %c0_30] : memref<1x24x32xf32, #tpu.memory_space<vmem>>, vector<1x8x32xf32>
    %37 = vector.shape_cast %36 : vector<1x8x32xf32> to vector<8x32xf32>
    %c4_31 = arith.constant 4 : index
    %c0_32 = arith.constant 0 : index
    %c0_33 = arith.constant 0 : index
    %38 = vector.load %arg3[%c4_31, %c0_32, %c0_33] : memref<9x32x32xf32, #tpu.memory_space<vmem>>, vector<1x32x32xf32>
    %39 = vector.shape_cast %38 : vector<1x32x32xf32> to vector<32x32xf32>
    %cst_34 = arith.constant dense<0.000000e+00> : vector<8x32xf32>
    %40 = tpu.matmul %37, %39, %cst_34 {dimension_numbers = #tpu.dot_dimension_numbers<[1], [0], [0], [1], [0, 0, 1, 1], [], []>} : vector<8x32xf32>, vector<32x32xf32>, vector<8x32xf32> -> vector<8x32xf32>
    %41 = arith.addf %35, %40 : vector<8x32xf32>
    %c0_35 = arith.constant 0 : index
    %c9 = arith.constant 9 : index
    %c0_36 = arith.constant 0 : index
    %42 = vector.load %arg1[%c0_35, %c9, %c0_36] : memref<1x24x32xf32, #tpu.memory_space<vmem>>, vector<1x8x32xf32>
    %43 = vector.shape_cast %42 : vector<1x8x32xf32> to vector<8x32xf32>
    %c5 = arith.constant 5 : index
    %c0_37 = arith.constant 0 : index
    %c0_38 = arith.constant 0 : index
    %44 = vector.load %arg3[%c5, %c0_37, %c0_38] : memref<9x32x32xf32, #tpu.memory_space<vmem>>, vector<1x32x32xf32>
    %45 = vector.shape_cast %44 : vector<1x32x32xf32> to vector<32x32xf32>
    %cst_39 = arith.constant dense<0.000000e+00> : vector<8x32xf32>
    %46 = tpu.matmul %43, %45, %cst_39 {dimension_numbers = #tpu.dot_dimension_numbers<[1], [0], [0], [1], [0, 0, 1, 1], [], []>} : vector<8x32xf32>, vector<32x32xf32>, vector<8x32xf32> -> vector<8x32xf32>
    %47 = arith.addf %41, %46 : vector<8x32xf32>
    %c0_40 = arith.constant 0 : index
    %c10 = arith.constant 10 : index
    %c0_41 = arith.constant 0 : index
    %48 = vector.load %arg1[%c0_40, %c10, %c0_41] : memref<1x24x32xf32, #tpu.memory_space<vmem>>, vector<1x8x32xf32>
    %49 = vector.shape_cast %48 : vector<1x8x32xf32> to vector<8x32xf32>
    %c6_42 = arith.constant 6 : index
    %c0_43 = arith.constant 0 : index
    %c0_44 = arith.constant 0 : index
    %50 = vector.load %arg3[%c6_42, %c0_43, %c0_44] : memref<9x32x32xf32, #tpu.memory_space<vmem>>, vector<1x32x32xf32>
    %51 = vector.shape_cast %50 : vector<1x32x32xf32> to vector<32x32xf32>
    %cst_45 = arith.constant dense<0.000000e+00> : vector<8x32xf32>
    %52 = tpu.matmul %49, %51, %cst_45 {dimension_numbers = #tpu.dot_dimension_numbers<[1], [0], [0], [1], [0, 0, 1, 1], [], []>} : vector<8x32xf32>, vector<32x32xf32>, vector<8x32xf32> -> vector<8x32xf32>
    %53 = arith.addf %47, %52 : vector<8x32xf32>
    %c0_46 = arith.constant 0 : index
    %c12 = arith.constant 12 : index
    %c0_47 = arith.constant 0 : index
    %54 = vector.load %arg1[%c0_46, %c12, %c0_47] : memref<1x24x32xf32, #tpu.memory_space<vmem>>, vector<1x8x32xf32>
    %55 = vector.shape_cast %54 : vector<1x8x32xf32> to vector<8x32xf32>
    %c7_48 = arith.constant 7 : index
    %c0_49 = arith.constant 0 : index
    %c0_50 = arith.constant 0 : index
    %56 = vector.load %arg3[%c7_48, %c0_49, %c0_50] : memref<9x32x32xf32, #tpu.memory_space<vmem>>, vector<1x32x32xf32>
    %57 = vector.shape_cast %56 : vector<1x32x32xf32> to vector<32x32xf32>
    %cst_51 = arith.constant dense<0.000000e+00> : vector<8x32xf32>
    %58 = tpu.matmul %55, %57, %cst_51 {dimension_numbers = #tpu.dot_dimension_numbers<[1], [0], [0], [1], [0, 0, 1, 1], [], []>} : vector<8x32xf32>, vector<32x32xf32>, vector<8x32xf32> -> vector<8x32xf32>
    %59 = arith.addf %53, %58 : vector<8x32xf32>
    %c0_52 = arith.constant 0 : index
    %c16 = arith.constant 16 : index
    %c0_53 = arith.constant 0 : index
    %60 = vector.load %arg1[%c0_52, %c16, %c0_53] : memref<1x24x32xf32, #tpu.memory_space<vmem>>, vector<1x8x32xf32>
    %61 = vector.shape_cast %60 : vector<1x8x32xf32> to vector<8x32xf32>
    %c8_54 = arith.constant 8 : index
    %c0_55 = arith.constant 0 : index
    %c0_56 = arith.constant 0 : index
    %62 = vector.load %arg3[%c8_54, %c0_55, %c0_56] : memref<9x32x32xf32, #tpu.memory_space<vmem>>, vector<1x32x32xf32>
    %63 = vector.shape_cast %62 : vector<1x32x32xf32> to vector<32x32xf32>
    %cst_57 = arith.constant dense<0.000000e+00> : vector<8x32xf32>
    %64 = tpu.matmul %61, %63, %cst_57 {dimension_numbers = #tpu.dot_dimension_numbers<[1], [0], [0], [1], [0, 0, 1, 1], [], []>} : vector<8x32xf32>, vector<32x32xf32>, vector<8x32xf32> -> vector<8x32xf32>
    %65 = arith.addf %59, %64 : vector<8x32xf32>
    %c0_58 = arith.constant 0 : index
    %c0_59 = arith.constant 0 : index
    %66 = vector.load %arg4[%c0_58, %c0_59] : memref<1x32xf32, #tpu.memory_space<vmem>>, vector<1x32xf32>
    %67 = vector.broadcast %66 : vector<1x32xf32> to vector<8x32xf32>
    %68 = arith.addf %65, %67 : vector<8x32xf32>
    %cst_60 = arith.constant dense<0.000000e+00> : vector<8xf32>
    %69 = vector.multi_reduction <add>, %68, %cst_60 [1] : vector<8x32xf32> to vector<8xf32>
    %70 = vector.shape_cast %69 : vector<8xf32> to vector<8x1xf32>
    %cst_61 = arith.constant 3.200000e+01 : f32
    %71 = vector.broadcast %cst_61 : f32 to vector<8x1xf32>
    %72 = arith.divf %70, %71 : vector<8x1xf32>
    %73 = vector.broadcast %72 : vector<8x1xf32> to vector<8x32xf32>
    %74 = arith.subf %68, %73 : vector<8x32xf32>
    %75 = arith.mulf %74, %74 : vector<8x32xf32>
    %cst_62 = arith.constant dense<0.000000e+00> : vector<8xf32>
    %76 = vector.multi_reduction <add>, %75, %cst_62 [1] : vector<8x32xf32> to vector<8xf32>
    %77 = vector.shape_cast %76 : vector<8xf32> to vector<8x1xf32>
    %cst_63 = arith.constant 3.200000e+01 : f32
    %78 = vector.broadcast %cst_63 : f32 to vector<8x1xf32>
    %79 = arith.divf %77, %78 : vector<8x1xf32>
    %80 = vector.broadcast %72 : vector<8x1xf32> to vector<8x32xf32>
    %81 = arith.subf %68, %80 : vector<8x32xf32>
    %cst_64 = arith.constant 9.99999974E-6 : f32
    %82 = vector.broadcast %cst_64 : f32 to vector<8x1xf32>
    %83 = arith.addf %79, %82 : vector<8x1xf32>
    %84 = math.rsqrt %83 : vector<8x1xf32>
    %85 = vector.broadcast %84 : vector<8x1xf32> to vector<8x32xf32>
    %86 = arith.mulf %81, %85 : vector<8x32xf32>
    %c0_65 = arith.constant 0 : index
    %c0_66 = arith.constant 0 : index
    %87 = vector.load %arg5[%c0_65, %c0_66] : memref<1x32xf32, #tpu.memory_space<vmem>>, vector<1x32xf32>
    %88 = vector.broadcast %87 : vector<1x32xf32> to vector<8x32xf32>
    %89 = arith.mulf %86, %88 : vector<8x32xf32>
    %c0_67 = arith.constant 0 : index
    %c0_68 = arith.constant 0 : index
    %90 = vector.load %arg6[%c0_67, %c0_68] : memref<1x32xf32, #tpu.memory_space<vmem>>, vector<1x32xf32>
    %91 = vector.broadcast %90 : vector<1x32xf32> to vector<8x32xf32>
    %92 = arith.addf %89, %91 : vector<8x32xf32>
    %c0_69 = arith.constant 0 : index
    %c0_70 = arith.constant 0 : index
    %93 = vector.load %arg7[%c0_69, %c0_70] : memref<32x64xf32, #tpu.memory_space<vmem>>, vector<32x64xf32>
    %cst_71 = arith.constant dense<0.000000e+00> : vector<8x64xf32>
    %94 = tpu.matmul %10, %93, %cst_71 {dimension_numbers = #tpu.dot_dimension_numbers<[1], [0], [0], [1], [0, 0, 1, 1], [], []>} : vector<8x32xf32>, vector<32x64xf32>, vector<8x64xf32> -> vector<8x64xf32>
    %c0_72 = arith.constant 0 : index
    %c0_73 = arith.constant 0 : index
    %95 = vector.load %arg8[%c0_72, %c0_73] : memref<32x64xf32, #tpu.memory_space<vmem>>, vector<32x64xf32>
    %cst_74 = arith.constant dense<0.000000e+00> : vector<8x64xf32>
    %96 = tpu.matmul %92, %95, %cst_74 {dimension_numbers = #tpu.dot_dimension_numbers<[1], [0], [0], [1], [0, 0, 1, 1], [], []>} : vector<8x32xf32>, vector<32x64xf32>, vector<8x64xf32> -> vector<8x64xf32>
    %97 = arith.addf %94, %96 : vector<8x64xf32>
    %c0_75 = arith.constant 0 : index
    %c0_76 = arith.constant 0 : index
    %98 = vector.load %arg9[%c0_75, %c0_76] : memref<1x64xf32, #tpu.memory_space<vmem>>, vector<1x64xf32>
    %99 = vector.broadcast %98 : vector<1x64xf32> to vector<8x64xf32>
    %100 = arith.addf %97, %99 : vector<8x64xf32>
    %101 = arith.negf %100 : vector<8x64xf32>
    %102 = math.exp %101 : vector<8x64xf32>
    %cst_77 = arith.constant 1.000000e+00 : f32
    %103 = vector.broadcast %cst_77 : f32 to vector<8x64xf32>
    %104 = arith.addf %103, %102 : vector<8x64xf32>
    %105 = arith.divf %103, %104 : vector<8x64xf32>
    %106 = arith.mulf %100, %105 : vector<8x64xf32>
    %c0_78 = arith.constant 0 : index
    %c0_79 = arith.constant 0 : index
    %107 = vector.load %arg10[%c0_78, %c0_79] : memref<64x32xf32, #tpu.memory_space<vmem>>, vector<64x32xf32>
    %cst_80 = arith.constant dense<0.000000e+00> : vector<8x32xf32>
    %108 = tpu.matmul %106, %107, %cst_80 {dimension_numbers = #tpu.dot_dimension_numbers<[1], [0], [0], [1], [0, 0, 1, 1], [], []>} : vector<8x64xf32>, vector<64x32xf32>, vector<8x32xf32> -> vector<8x32xf32>
    %c0_81 = arith.constant 0 : index
    %c0_82 = arith.constant 0 : index
    %109 = vector.load %arg11[%c0_81, %c0_82] : memref<1x32xf32, #tpu.memory_space<vmem>>, vector<1x32xf32>
    %110 = vector.broadcast %109 : vector<1x32xf32> to vector<8x32xf32>
    %111 = arith.addf %108, %110 : vector<8x32xf32>
    %112 = vector.shape_cast %111 : vector<8x32xf32> to vector<1x8x32xf32>
    %c0_83 = arith.constant 0 : index
    %c0_84 = arith.constant 0 : index
    %c0_85 = arith.constant 0 : index
    %113 = vector.load %arg12[%c0_83, %c0_84, %c0_85] : memref<1x8x32xf32, #tpu.memory_space<vmem>>, vector<1x8x32xf32>
    tpu.vector_store %arg12[%c0_83, %c0_84, %c0_85], %112 {strides = array<i32>} : memref<1x8x32xf32, #tpu.memory_space<vmem>>, vector<1x8x32xf32>,
    return
  }
  func.func @transform_0(%arg0: i32) -> (i32, i32, i32) {
    %c0_i32 = arith.constant 0 : i32
    %c0_i32_0 = arith.constant 0 : i32
    %c0_i32_1 = arith.constant 0 : i32
    return %arg0, %c0_i32, %c0_i32_0 : i32, i32, i32
  }
  func.func @transform_1(%arg0: i32) -> (i32, i32) {
    %c0_i32 = arith.constant 0 : i32
    %c0_i32_0 = arith.constant 0 : i32
    %c0_i32_1 = arith.constant 0 : i32
    return %c0_i32, %c0_i32_0 : i32, i32
  }
  func.func @transform_2(%arg0: i32) -> (i32, i32, i32) {
    %c0_i32 = arith.constant 0 : i32
    %c0_i32_0 = arith.constant 0 : i32
    %c0_i32_1 = arith.constant 0 : i32
    %c0_i32_2 = arith.constant 0 : i32
    return %c0_i32, %c0_i32_0, %c0_i32_1 : i32, i32, i32
  }
  func.func @transform_3(%arg0: i32) -> (i32, i32) {
    %c0_i32 = arith.constant 0 : i32
    %c0_i32_0 = arith.constant 0 : i32
    %c0_i32_1 = arith.constant 0 : i32
    return %c0_i32, %c0_i32_0 : i32, i32
  }
  func.func @transform_4(%arg0: i32) -> (i32, i32) {
    %c0_i32 = arith.constant 0 : i32
    %c0_i32_0 = arith.constant 0 : i32
    %c0_i32_1 = arith.constant 0 : i32
    return %c0_i32, %c0_i32_0 : i32, i32
  }
  func.func @transform_5(%arg0: i32) -> (i32, i32) {
    %c0_i32 = arith.constant 0 : i32
    %c0_i32_0 = arith.constant 0 : i32
    %c0_i32_1 = arith.constant 0 : i32
    return %c0_i32, %c0_i32_0 : i32, i32
  }
  func.func @transform_6(%arg0: i32) -> (i32, i32) {
    %c0_i32 = arith.constant 0 : i32
    %c0_i32_0 = arith.constant 0 : i32
    %c0_i32_1 = arith.constant 0 : i32
    return %c0_i32, %c0_i32_0 : i32, i32
  }
  func.func @transform_7(%arg0: i32) -> (i32, i32) {
    %c0_i32 = arith.constant 0 : i32
    %c0_i32_0 = arith.constant 0 : i32
    %c0_i32_1 = arith.constant 0 : i32
    return %c0_i32, %c0_i32_0 : i32, i32
  }
  func.func @transform_8(%arg0: i32) -> (i32, i32) {
    %c0_i32 = arith.constant 0 : i32
    %c0_i32_0 = arith.constant 0 : i32
    %c0_i32_1 = arith.constant 0 : i32
    return %c0_i32, %c0_i32_0 : i32, i32
  }
  func.func @transform_9(%arg0: i32) -> (i32, i32) {
    %c0_i32 = arith.constant 0 : i32
    %c0_i32_0 = arith.constant 0 : i32
    %c0_i32_1 = arith.constant 0 : i32
    return %c0_i32, %c0_i32_0 : i32, i32
  }
  func.func @transform_10(%arg0: i32) -> (i32, i32) {
    %c0_i32 = arith.constant 0 : i32
    %c0_i32_0 = arith.constant 0 : i32
    %c0_i32_1 = arith.constant 0 : i32
    return %c0_i32, %c0_i32_0 : i32, i32
  }
  func.func @transform_11(%arg0: i32) -> (i32, i32, i32) {
    %c0_i32 = arith.constant 0 : i32
    %c0_i32_0 = arith.constant 0 : i32
    %c0_i32_1 = arith.constant 0 : i32
    return %arg0, %c0_i32, %c0_i32_0 : i32, i32, i32
  }
}

module attributes {stable_mosaic.version = 11 : i64} {
  func.func @hybrid_encoder_kernel(%arg0: i32, %arg1: memref<1x24x32xf32, #tpu.memory_space<vmem>>, %arg2: memref<8x8xf32, #tpu.memory_space<vmem>>, %arg3: memref<9x32x32xf32, #tpu.memory_space<vmem>>, %arg4: memref<1x32xf32, #tpu.memory_space<vmem>>, %arg5: memref<1x32xf32, #tpu.memory_space<vmem>>, %arg6: memref<1x32xf32, #tpu.memory_space<vmem>>, %arg7: memref<32x64xf32, #tpu.memory_space<vmem>>, %arg8: memref<32x64xf32, #tpu.memory_space<vmem>>, %arg9: memref<1x64xf32, #tpu.memory_space<vmem>>, %arg10: memref<64x32xf32, #tpu.memory_space<vmem>>, %arg11: memref<1x32xf32, #tpu.memory_space<vmem>>, %arg12: memref<1x8x32xf32, #tpu.memory_space<vmem>>) attributes {dimension_semantics = [#tpu.dimension_semantics<parallel>], iteration_bounds = array<i64: 2>, scalar_prefetch = 0 : i64, scratch_operands = 0 : i64, tpu.core_type = #tpu.core_type<tc>, window_params = [{transform_indices = @transform_0, window_bounds = array<i64: 1, 24, 32>}, {pipeline_mode = #tpu.pipeline_mode<synchronous>, transform_indices = @transform_1, window_bounds = array<i64: 8, 8>}, {pipeline_mode = #tpu.pipeline_mode<synchronous>, transform_indices = @transform_2, window_bounds = array<i64: 9, 32, 32>}, {pipeline_mode = #tpu.pipeline_mode<synchronous>, transform_indices = @transform_3, window_bounds = array<i64: 1, 32>}, {pipeline_mode = #tpu.pipeline_mode<synchronous>, transform_indices = @transform_4, window_bounds = array<i64: 1, 32>}, {pipeline_mode = #tpu.pipeline_mode<synchronous>, transform_indices = @transform_5, window_bounds = array<i64: 1, 32>}, {pipeline_mode = #tpu.pipeline_mode<synchronous>, transform_indices = @transform_6, window_bounds = array<i64: 32, 64>}, {pipeline_mode = #tpu.pipeline_mode<synchronous>, transform_indices = @transform_7, window_bounds = array<i64: 32, 64>}, {pipeline_mode = #tpu.pipeline_mode<synchronous>, transform_indices = @transform_8, window_bounds = array<i64: 1, 64>}, {pipeline_mode = #tpu.pipeline_mode<synchronous>, transform_indices = @transform_9, window_bounds = array<i64: 64, 32>}, {pipeline_mode = #tpu.pipeline_mode<synchronous>, transform_indices = @transform_10, window_bounds = array<i64: 1, 32>}, {transform_indices = @transform_11, window_bounds = array<i64: 1, 8, 32>}]} {
    %c0 = arith.constant 0 : index
    %c8 = arith.constant 8 : index
    %c0_0 = arith.constant 0 : index
    %0 = vector.load %arg1[%c0, %c8, %c0_0] : memref<1x24x32xf32, #tpu.memory_space<vmem>>, vector<1x8x32xf32>
    %1 = vector.shape_cast %0 : vector<1x8x32xf32> to vector<8x32xf32>
    %cst = arith.constant dense<0.000000e+00> : vector<8xf32>
    %2 = vector.multi_reduction <add>, %1, %cst [1] : vector<8x32xf32> to vector<8xf32>
    %3 = vector.shape_cast %2 : vector<8xf32> to vector<8x1xf32>
    %cst_1 = arith.constant 3.200000e+01 : f32
    %4 = vector.broadcast %cst_1 : f32 to vector<8x1xf32>
    %5 = arith.divf %3, %4 : vector<8x1xf32>
    %6 = vector.shape_cast %5 : vector<8x1xf32> to vector<8x1xf32>
    %7 = vector.broadcast %6 : vector<8x1xf32> to vector<8x32xf32>
    %c0_2 = arith.constant 0 : index
    %c0_3 = arith.constant 0 : index
    %8 = vector.load %arg2[%c0_2, %c0_3] : memref<8x8xf32, #tpu.memory_space<vmem>>, vector<8x8xf32>
    %cst_4 = arith.constant dense<0.000000e+00> : vector<8x32xf32>
    %9 = tpu.matmul %8, %7, %cst_4 {dimension_numbers = #tpu.dot_dimension_numbers<[1], [0], [0], [1], [0, 0, 1, 1], [], []>} : vector<8x8xf32>, vector<8x32xf32>, vector<8x32xf32> -> vector<8x32xf32>
    %10 = arith.addf %1, %9 : vector<8x32xf32>
    %cst_5 = arith.constant 0.000000e+00 : f32
    %11 = vector.broadcast %cst_5 : f32 to vector<8x32xf32>
    %c0_6 = arith.constant 0 : index
    %c8_7 = arith.constant 8 : index
    %c0_8 = arith.constant 0 : index
    %12 = vector.load %arg1[%c0_6, %c8_7, %c0_8] : memref<1x24x32xf32, #tpu.memory_space<vmem>>, vector<1x8x32xf32>
    %13 = vector.shape_cast %12 : vector<1x8x32xf32> to vector<8x32xf32>
    %c0_9 = arith.constant 0 : index
    %c0_10 = arith.constant 0 : index
    %c0_11 = arith.constant 0 : index
    %14 = vector.load %arg3[%c0_9, %c0_10, %c0_11] : memref<9x32x32xf32, #tpu.memory_space<vmem>>, vector<1x32x32xf32>
    %15 = vector.shape_cast %14 : vector<1x32x32xf32> to vector<32x32xf32>
    %cst_12 = arith.constant dense<0.000000e+00> : vector<8x32xf32>
    %16 = tpu.matmul %13, %15, %cst_12 {dimension_numbers = #tpu.dot_dimension_numbers<[1], [0], [0], [1], [0, 0, 1, 1], [], []>} : vector<8x32xf32>, vector<32x32xf32>, vector<8x32xf32> -> vector<8x32xf32>
    %17 = arith.addf %11, %16 : vector<8x32xf32>
    %c0_13 = arith.constant 0 : index
    %c0_14 = arith.constant 0 : index
    %c0_15 = arith.constant 0 : index
    %18 = vector.load %arg1[%c0_13, %c0_14, %c0_15] : memref<1x24x32xf32, #tpu.memory_space<vmem>>, vector<1x8x32xf32>
    %19 = vector.shape_cast %18 : vector<1x8x32xf32> to vector<8x32xf32>
    %c1 = arith.constant 1 : index
    %c0_16 = arith.constant 0 : index
    %c0_17 = arith.constant 0 : index
    %20 = vector.load %arg3[%c1, %c0_16, %c0_17] : memref<9x32x32xf32, #tpu.memory_space<vmem>>, vector<1x32x32xf32>
    %21 = vector.shape_cast %20 : vector<1x32x32xf32> to vector<32x32xf32>
    %cst_18 = arith.constant dense<0.000000e+00> : vector<8x32xf32>
    %22 = tpu.matmul %19, %21, %cst_18 {dimension_numbers = #tpu.dot_dimension_numbers<[1], [0], [0], [1], [0, 0, 1, 1], [], []>} : vector<8x32xf32>, vector<32x32xf32>, vector<8x32xf32> -> vector<8x32xf32>
    %23 = arith.addf %17, %22 : vector<8x32xf32>
    %c0_19 = arith.constant 0 : index
    %c4 = arith.constant 4 : index
    %c0_20 = arith.constant 0 : index
    %24 = vector.load %arg1[%c0_19, %c4, %c0_20] : memref<1x24x32xf32, #tpu.memory_space<vmem>>, vector<1x8x32xf32>
    %25 = vector.shape_cast %24 : vector<1x8x32xf32> to vector<8x32xf32>
    %c2 = arith.constant 2 : index
    %c0_21 = arith.constant 0 : index
    %c0_22 = arith.constant 0 : index
    %26 = vector.load %arg3[%c2, %c0_21, %c0_22] : memref<9x32x32xf32, #tpu.memory_space<vmem>>, vector<1x32x32xf32>
    %27 = vector.shape_cast %26 : vector<1x32x32xf32> to vector<32x32xf32>
    %cst_23 = arith.constant dense<0.000000e+00> : vector<8x32xf32>
    %28 = tpu.matmul %25, %27, %cst_23 {dimension_numbers = #tpu.dot_dimension_numbers<[1], [0], [0], [1], [0, 0, 1, 1], [], []>} : vector<8x32xf32>, vector<32x32xf32>, vector<8x32xf32> -> vector<8x32xf32>
    %29 = arith.addf %23, %28 : vector<8x32xf32>
    %c0_24 = arith.constant 0 : index
    %c6 = arith.constant 6 : index
    %c0_25 = arith.constant 0 : index
    %30 = vector.load %arg1[%c0_24, %c6, %c0_25] : memref<1x24x32xf32, #tpu.memory_space<vmem>>, vector<1x8x32xf32>
    %31 = vector.shape_cast %30 : vector<1x8x32xf32> to vector<8x32xf32>
    %c3 = arith.constant 3 : index
    %c0_26 = arith.constant 0 : index
    %c0_27 = arith.constant 0 : index
    %32 = vector.load %arg3[%c3, %c0_26, %c0_27] : memref<9x32x32xf32, #tpu.memory_space<vmem>>, vector<1x32x32xf32>
    %33 = vector.shape_cast %32 : vector<1x32x32xf32> to vector<32x32xf32>
    %cst_28 = arith.constant dense<0.000000e+00> : vector<8x32xf32>
    %34 = tpu.matmul %31, %33, %cst_28 {dimension_numbers = #tpu.dot_dimension_numbers<[1], [0], [0], [1], [0, 0, 1, 1], [], []>} : vector<8x32xf32>, vector<32x32xf32>, vector<8x32xf32> -> vector<8x32xf32>
    %35 = arith.addf %29, %34 : vector<8x32xf32>
    %c0_29 = arith.constant 0 : index
    %c7 = arith.constant 7 : index
    %c0_30 = arith.constant 0 : index
    %36 = vector.load %arg1[%c0_29, %c7, %c0_30] : memref<1x24x32xf32, #tpu.memory_space<vmem>>, vector<1x8x32xf32>
    %37 = vector.shape_cast %36 : vector<1x8x32xf32> to vector<8x32xf32>
    %c4_31 = arith.constant 4 : index
    %c0_32 = arith.constant 0 : index
    %c0_33 = arith.constant 0 : index
    %38 = vector.load %arg3[%c4_31, %c0_32, %c0_33] : memref<9x32x32xf32, #tpu.memory_space<vmem>>, vector<1x32x32xf32>
    %39 = vector.shape_cast %38 : vector<1x32x32xf32> to vector<32x32xf32>
    %cst_34 = arith.constant dense<0.000000e+00> : vector<8x32xf32>
    %40 = tpu.matmul %37, %39, %cst_34 {dimension_numbers = #tpu.dot_dimension_numbers<[1], [0], [0], [1], [0, 0, 1, 1], [], []>} : vector<8x32xf32>, vector<32x32xf32>, vector<8x32xf32> -> vector<8x32xf32>
    %41 = arith.addf %35, %40 : vector<8x32xf32>
    %c0_35 = arith.constant 0 : index
    %c9 = arith.constant 9 : index
    %c0_36 = arith.constant 0 : index
    %42 = vector.load %arg1[%c0_35, %c9, %c0_36] : memref<1x24x32xf32, #tpu.memory_space<vmem>>, vector<1x8x32xf32>
    %43 = vector.shape_cast %42 : vector<1x8x32xf32> to vector<8x32xf32>
    %c5 = arith.constant 5 : index
    %c0_37 = arith.constant 0 : index
    %c0_38 = arith.constant 0 : index
    %44 = vector.load %arg3[%c5, %c0_37, %c0_38] : memref<9x32x32xf32, #tpu.memory_space<vmem>>, vector<1x32x32xf32>
    %45 = vector.shape_cast %44 : vector<1x32x32xf32> to vector<32x32xf32>
    %cst_39 = arith.constant dense<0.000000e+00> : vector<8x32xf32>
    %46 = tpu.matmul %43, %45, %cst_39 {dimension_numbers = #tpu.dot_dimension_numbers<[1], [0], [0], [1], [0, 0, 1, 1], [], []>} : vector<8x32xf32>, vector<32x32xf32>, vector<8x32xf32> -> vector<8x32xf32>
    %47 = arith.addf %41, %46 : vector<8x32xf32>
    %c0_40 = arith.constant 0 : index
    %c10 = arith.constant 10 : index
    %c0_41 = arith.constant 0 : index
    %48 = vector.load %arg1[%c0_40, %c10, %c0_41] : memref<1x24x32xf32, #tpu.memory_space<vmem>>, vector<1x8x32xf32>
    %49 = vector.shape_cast %48 : vector<1x8x32xf32> to vector<8x32xf32>
    %c6_42 = arith.constant 6 : index
    %c0_43 = arith.constant 0 : index
    %c0_44 = arith.constant 0 : index
    %50 = vector.load %arg3[%c6_42, %c0_43, %c0_44] : memref<9x32x32xf32, #tpu.memory_space<vmem>>, vector<1x32x32xf32>
    %51 = vector.shape_cast %50 : vector<1x32x32xf32> to vector<32x32xf32>
    %cst_45 = arith.constant dense<0.000000e+00> : vector<8x32xf32>
    %52 = tpu.matmul %49, %51, %cst_45 {dimension_numbers = #tpu.dot_dimension_numbers<[1], [0], [0], [1], [0, 0, 1, 1], [], []>} : vector<8x32xf32>, vector<32x32xf32>, vector<8x32xf32> -> vector<8x32xf32>
    %53 = arith.addf %47, %52 : vector<8x32xf32>
    %c0_46 = arith.constant 0 : index
    %c12 = arith.constant 12 : index
    %c0_47 = arith.constant 0 : index
    %54 = vector.load %arg1[%c0_46, %c12, %c0_47] : memref<1x24x32xf32, #tpu.memory_space<vmem>>, vector<1x8x32xf32>
    %55 = vector.shape_cast %54 : vector<1x8x32xf32> to vector<8x32xf32>
    %c7_48 = arith.constant 7 : index
    %c0_49 = arith.constant 0 : index
    %c0_50 = arith.constant 0 : index
    %56 = vector.load %arg3[%c7_48, %c0_49, %c0_50] : memref<9x32x32xf32, #tpu.memory_space<vmem>>, vector<1x32x32xf32>
    %57 = vector.shape_cast %56 : vector<1x32x32xf32> to vector<32x32xf32>
    %cst_51 = arith.constant dense<0.000000e+00> : vector<8x32xf32>
    %58 = tpu.matmul %55, %57, %cst_51 {dimension_numbers = #tpu.dot_dimension_numbers<[1], [0], [0], [1], [0, 0, 1, 1], [], []>} : vector<8x32xf32>, vector<32x32xf32>, vector<8x32xf32> -> vector<8x32xf32>
    %59 = arith.addf %53, %58 : vector<8x32xf32>
    %c0_52 = arith.constant 0 : index
    %c16 = arith.constant 16 : index
    %c0_53 = arith.constant 0 : index
    %60 = vector.load %arg1[%c0_52, %c16, %c0_53] : memref<1x24x32xf32, #tpu.memory_space<vmem>>, vector<1x8x32xf32>
    %61 = vector.shape_cast %60 : vector<1x8x32xf32> to vector<8x32xf32>
    %c8_54 = arith.constant 8 : index
    %c0_55 = arith.constant 0 : index
    %c0_56 = arith.constant 0 : index
    %62 = vector.load %arg3[%c8_54, %c0_55, %c0_56] : memref<9x32x32xf32, #tpu.memory_space<vmem>>, vector<1x32x32xf32>
    %63 = vector.shape_cast %62 : vector<1x32x32xf32> to vector<32x32xf32>
    %cst_57 = arith.constant dense<0.000000e+00> : vector<8x32xf32>
    %64 = tpu.matmul %61, %63, %cst_57 {dimension_numbers = #tpu.dot_dimension_numbers<[1], [0], [0], [1], [0, 0, 1, 1], [], []>} : vector<8x32xf32>, vector<32x32xf32>, vector<8x32xf32> -> vector<8x32xf32>
    %65 = arith.addf %59, %64 : vector<8x32xf32>
    %c0_58 = arith.constant 0 : index
    %c0_59 = arith.constant 0 : index
    %66 = vector.load %arg4[%c0_58, %c0_59] : memref<1x32xf32, #tpu.memory_space<vmem>>, vector<1x32xf32>
    %67 = vector.broadcast %66 : vector<1x32xf32> to vector<8x32xf32>
    %68 = arith.addf %65, %67 : vector<8x32xf32>
    %cst_60 = arith.constant dense<0.000000e+00> : vector<8xf32>
    %69 = vector.multi_reduction <add>, %68, %cst_60 [1] : vector<8x32xf32> to vector<8xf32>
    %70 = vector.shape_cast %69 : vector<8xf32> to vector<8x1xf32>
    %cst_61 = arith.constant 3.200000e+01 : f32
    %71 = vector.broadcast %cst_61 : f32 to vector<8x1xf32>
    %72 = arith.divf %70, %71 : vector<8x1xf32>
    %73 = vector.broadcast %72 : vector<8x1xf32> to vector<8x32xf32>
    %74 = arith.subf %68, %73 : vector<8x32xf32>
    %75 = arith.mulf %74, %74 : vector<8x32xf32>
    %cst_62 = arith.constant dense<0.000000e+00> : vector<8xf32>
    %76 = vector.multi_reduction <add>, %75, %cst_62 [1] : vector<8x32xf32> to vector<8xf32>
    %77 = vector.shape_cast %76 : vector<8xf32> to vector<8x1xf32>
    %cst_63 = arith.constant 3.200000e+01 : f32
    %78 = vector.broadcast %cst_63 : f32 to vector<8x1xf32>
    %79 = arith.divf %77, %78 : vector<8x1xf32>
    %80 = vector.broadcast %72 : vector<8x1xf32> to vector<8x32xf32>
    %81 = arith.subf %68, %80 : vector<8x32xf32>
    %cst_64 = arith.constant 9.99999974E-6 : f32
    %82 = vector.broadcast %cst_64 : f32 to vector<8x1xf32>
    %83 = arith.addf %79, %82 : vector<8x1xf32>
    %84 = math.rsqrt %83 : vector<8x1xf32>
    %85 = vector.broadcast %84 : vector<8x1xf32> to vector<8x32xf32>
    %86 = arith.mulf %81, %85 : vector<8x32xf32>
    %c0_65 = arith.constant 0 : index
    %c0_66 = arith.constant 0 : index
    %87 = vector.load %arg5[%c0_65, %c0_66] : memref<1x32xf32, #tpu.memory_space<vmem>>, vector<1x32xf32>
    %88 = vector.broadcast %87 : vector<1x32xf32> to vector<8x32xf32>
    %89 = arith.mulf %86, %88 : vector<8x32xf32>
    %c0_67 = arith.constant 0 : index
    %c0_68 = arith.constant 0 : index
    %90 = vector.load %arg6[%c0_67, %c0_68] : memref<1x32xf32, #tpu.memory_space<vmem>>, vector<1x32xf32>
    %91 = vector.broadcast %90 : vector<1x32xf32> to vector<8x32xf32>
    %92 = arith.addf %89, %91 : vector<8x32xf32>
    %c0_69 = arith.constant 0 : index
    %c0_70 = arith.constant 0 : index
    %93 = vector.load %arg7[%c0_69, %c0_70] : memref<32x64xf32, #tpu.memory_space<vmem>>, vector<32x64xf32>
    %cst_71 = arith.constant dense<0.000000e+00> : vector<8x64xf32>
    %94 = tpu.matmul %10, %93, %cst_71 {dimension_numbers = #tpu.dot_dimension_numbers<[1], [0], [0], [1], [0, 0, 1, 1], [], []>} : vector<8x32xf32>, vector<32x64xf32>, vector<8x64xf32> -> vector<8x64xf32>
    %c0_72 = arith.constant 0 : index
    %c0_73 = arith.constant 0 : index
    %95 = vector.load %arg8[%c0_72, %c0_73] : memref<32x64xf32, #tpu.memory_space<vmem>>, vector<32x64xf32>
    %cst_74 = arith.constant dense<0.000000e+00> : vector<8x64xf32>
    %96 = tpu.matmul %92, %95, %cst_74 {dimension_numbers = #tpu.dot_dimension_numbers<[1], [0], [0], [1], [0, 0, 1, 1], [], []>} : vector<8x32xf32>, vector<32x64xf32>, vector<8x64xf32> -> vector<8x64xf32>
    %97 = arith.addf %94, %96 : vector<8x64xf32>
    %c0_75 = arith.constant 0 : index
    %c0_76 = arith.constant 0 : index
    %98 = vector.load %arg9[%c0_75, %c0_76] : memref<1x64xf32, #tpu.memory_space<vmem>>, vector<1x64xf32>
    %99 = vector.broadcast %98 : vector<1x64xf32> to vector<8x64xf32>
    %100 = arith.addf %97, %99 : vector<8x64xf32>
    %101 = arith.negf %100 : vector<8x64xf32>
    %102 = math.exp %101 : vector<8x64xf32>
    %cst_77 = arith.constant 1.000000e+00 : f32
    %103 = vector.broadcast %cst_77 : f32 to vector<8x64xf32>
    %104 = arith.addf %103, %102 : vector<8x64xf32>
    %105 = arith.divf %103, %104 : vector<8x64xf32>
    %106 = arith.mulf %100, %105 : vector<8x64xf32>
    %c0_78 = arith.constant 0 : index
    %c0_79 = arith.constant 0 : index
    %107 = vector.load %arg10[%c0_78, %c0_79] : memref<64x32xf32, #tpu.memory_space<vmem>>, vector<64x32xf32>
    %cst_80 = arith.constant dense<0.000000e+00> : vector<8x32xf32>
    %108 = tpu.matmul %106, %107, %cst_80 {dimension_numbers = #tpu.dot_dimension_numbers<[1], [0], [0], [1], [0, 0, 1, 1], [], []>} : vector<8x64xf32>, vector<64x32xf32>, vector<8x32xf32> -> vector<8x32xf32>
    %c0_81 = arith.constant 0 : index
    %c0_82 = arith.constant 0 : index
    %109 = vector.load %arg11[%c0_81, %c0_82] : memref<1x32xf32, #tpu.memory_space<vmem>>, vector<1x32xf32>
    %110 = vector.broadcast %109 : vector<1x32xf32> to vector<8x32xf32>
    %111 = arith.addf %108, %110 : vector<8x32xf32>
    %112 = vector.shape_cast %111 : vector<8x32xf32> to vector<1x8x32xf32>
    %c0_83 = arith.constant 0 : index
    %c0_84 = arith.constant 0 : index
    %c0_85 = arith.constant 0 : index
    %113 = vector.load %arg12[%c0_83, %c0_84, %c0_85] : memref<1x8x32xf32, #tpu.memory_space<vmem>>, vector<1x8x32xf32>
    tpu.vector_store %arg12[%c0_83, %c0_84, %c0_85], %112 {strides = array<i32>} : memref<1x8x32xf32, #tpu.memory_space<vmem>>, vector<1x8x32xf32>,
    return
  }
  func.func @transform_0(%arg0: i32) -> (i32, i32, i32) {
    %c0_i32 = arith.constant 0 : i32
    %c0_i32_0 = arith.constant 0 : i32
    %c0_i32_1 = arith.constant 0 : i32
    return %arg0, %c0_i32, %c0_i32_0 : i32, i32, i32
  }
  func.func @transform_1(%arg0: i32) -> (i32, i32) {
    %c0_i32 = arith.constant 0 : i32
    %c0_i32_0 = arith.constant 0 : i32
    %c0_i32_1 = arith.constant 0 : i32
    return %c0_i32, %c0_i32_0 : i32, i32
  }
  func.func @transform_2(%arg0: i32) -> (i32, i32, i32) {
    %c0_i32 = arith.constant 0 : i32
    %c0_i32_0 = arith.constant 0 : i32
    %c0_i32_1 = arith.constant 0 : i32
    %c0_i32_2 = arith.constant 0 : i32
    return %c0_i32, %c0_i32_0, %c0_i32_1 : i32, i32, i32
  }
  func.func @transform_3(%arg0: i32) -> (i32, i32) {
    %c0_i32 = arith.constant 0 : i32
    %c0_i32_0 = arith.constant 0 : i32
    %c0_i32_1 = arith.constant 0 : i32
    return %c0_i32, %c0_i32_0 : i32, i32
  }
  func.func @transform_4(%arg0: i32) -> (i32, i32) {
    %c0_i32 = arith.constant 0 : i32
    %c0_i32_0 = arith.constant 0 : i32
    %c0_i32_1 = arith.constant 0 : i32
    return %c0_i32, %c0_i32_0 : i32, i32
  }
  func.func @transform_5(%arg0: i32) -> (i32, i32) {
    %c0_i32 = arith.constant 0 : i32
    %c0_i32_0 = arith.constant 0 : i32
    %c0_i32_1 = arith.constant 0 : i32
    return %c0_i32, %c0_i32_0 : i32, i32
  }
  func.func @transform_6(%arg0: i32) -> (i32, i32) {
    %c0_i32 = arith.constant 0 : i32
    %c0_i32_0 = arith.constant 0 : i32
    %c0_i32_1 = arith.constant 0 : i32
    return %c0_i32, %c0_i32_0 : i32, i32
  }
  func.func @transform_7(%arg0: i32) -> (i32, i32) {
    %c0_i32 = arith.constant 0 : i32
    %c0_i32_0 = arith.constant 0 : i32
    %c0_i32_1 = arith.constant 0 : i32
    return %c0_i32, %c0_i32_0 : i32, i32
  }
  func.func @transform_8(%arg0: i32) -> (i32, i32) {
    %c0_i32 = arith.constant 0 : i32
    %c0_i32_0 = arith.constant 0 : i32
    %c0_i32_1 = arith.constant 0 : i32
    return %c0_i32, %c0_i32_0 : i32, i32
  }
  func.func @transform_9(%arg0: i32) -> (i32, i32) {
    %c0_i32 = arith.constant 0 : i32
    %c0_i32_0 = arith.constant 0 : i32
    %c0_i32_1 = arith.constant 0 : i32
    return %c0_i32, %c0_i32_0 : i32, i32
  }
  func.func @transform_10(%arg0: i32) -> (i32, i32) {
    %c0_i32 = arith.constant 0 : i32
    %c0_i32_0 = arith.constant 0 : i32
    %c0_i32_1 = arith.constant 0 : i32
    return %c0_i32, %c0_i32_0 : i32, i32
  }
  func.func @transform_11(%arg0: i32) -> (i32, i32, i32) {
    %c0_i32 = arith.constant 0 : i32
    %c0_i32_0 = arith.constant 0 : i32
    %c0_i32_1 = arith.constant 0 : i32
    return %arg0, %c0_i32, %c0_i32_0 : i32, i32, i32
  }
}

</mosaic_0001>

<llo_original>
// kernel: _encoder_impl.1
$region0: #{_encoder_impl.1}
  #allocation0 [shape = 'u32[]', space=smem, size = 0x4, offset = 0x4, fixed_abs, tag = 'smem constant byte address 0x4 - core index']
  #allocation1 [shape = 'u32[144,128]{1,0:T(1,128)}', space=vmem, size = 0x12000, scoped, tag = 'internal scratch']
  %s0 = inlined_call_operand.vmem [shape: f32[2,24,32], index: 0, kind: input, shape index: {}]
  %s1 = inlined_call_operand.vmem [shape: f32[8,8], index: 1, kind: input, shape index: {}]
  %s2 = inlined_call_operand.vmem [shape: f32[9,32,32], index: 2, kind: input, shape index: {}]
  %s3 = inlined_call_operand.vmem [shape: f32[1,32], index: 3, kind: input, shape index: {}]
  %s4 = inlined_call_operand.vmem [shape: f32[1,32], index: 4, kind: input, shape index: {}]
  %s5 = inlined_call_operand.vmem [shape: f32[1,32], index: 5, kind: input, shape index: {}]
  %s6 = inlined_call_operand.vmem [shape: f32[32,64], index: 6, kind: input, shape index: {}]
  %s7 = inlined_call_operand.vmem [shape: f32[32,64], index: 7, kind: input, shape index: {}]
  %s8 = inlined_call_operand.vmem [shape: f32[1,64], index: 8, kind: input, shape index: {}]
  %s9 = inlined_call_operand.vmem [shape: f32[64,32], index: 9, kind: input, shape index: {}]
  %s10 = inlined_call_operand.vmem [shape: f32[1,32], index: 10, kind: input, shape index: {}]
  %s11 = inlined_call_operand.hbm [shape: f32[2,8,32], index: 11, kind: output, shape index: {}]
  %s12 = sld [smem:[#allocation0]]
  $region77: #{_encoder_impl.1} parent=0
    _
  %s14 = ssub.s32 1, %s12
  %s15 = scalar_select 0, %s14, %s12
  $region1: #{_encoder_impl.1} parent=0
    #allocation2 [shape = 'u8[8192]{0}', space=vmem, size = 0x2000, scoped, tag = 'output window, operand 0']
    #allocation3 [shape = 's32[2]{0}', space=sflag, size = 0x8, scoped, tag = 'scoped memory for _encoder_impl.1']
    %16 = vsyncpa [#allocation3], 0
    %s17 = scalar_lea.sflag [#allocation3], 1
    %18 = vsyncpa %s17, 0
    loop: start=0, step=1, limit=4
    $region2: #{_encoder_impl.1} parent=1 // loop_pre_header
      _
    $region3: #{_encoder_impl.1} parent=1 // loop_header
      %s20 = sphi 0, %s24
      %p21 = scmp.ge.s32.totalorder %s20, 4
      %s30 = sphi 0, %s32
      %s33 = sphi 0, %s30
      %s34 = sphi 0, %s33
      %s50 = sphi 0, %s34
      %s54 = sphi 0, %s54
      %s56 = sphi 0, %s54
      %s57 = sphi 0, %s56
      %s71 = sphi 0, %s57
      %s75 = sphi 0, %s75
      %s77 = sphi 0, %s75
      %s78 = sphi 0, %s77
      %s92 = sphi 0, %s78
      %s96 = sphi 0, %s96
      %s98 = sphi 0, %s96
      %s99 = sphi 0, %s98
      %s113 = sphi 0, %s99
      %s117 = sphi 0, %s117
      %s119 = sphi 0, %s117
      %s120 = sphi 0, %s119
      %s134 = sphi 0, %s120
      %s138 = sphi 0, %s138
      %s140 = sphi 0, %s138
      %s141 = sphi 0, %s140
      %s155 = sphi 0, %s141
      %s159 = sphi 0, %s159
      %s161 = sphi 0, %s159
      %s162 = sphi 0, %s161
      %s176 = sphi 0, %s162
      %s180 = sphi 0, %s180
      %s182 = sphi 0, %s180
      %s183 = sphi 0, %s182
      %s197 = sphi 0, %s183
      %s201 = sphi 0, %s201
      %s203 = sphi 0, %s201
      %s204 = sphi 0, %s203
      %s218 = sphi 0, %s204
      %s222 = sphi 0, %s222
      %s224 = sphi 0, %s222
      %s225 = sphi 0, %s224
      %s239 = sphi 0, %s225
      %s243 = sphi 0, %s243
      %s245 = sphi 0, %s243
      %s246 = sphi 0, %s245
      %s260 = sphi 0, %s246
      %s266 = sphi 0, %s268
      %s269 = sphi 0, %s266
      %s270 = sphi 0, %s269
      %s286 = sphi 0, %s270
    $region4: #{_encoder_impl.1} parent=1 // loop_header_branch
      %23 = sbr.rel (%p21) target = $region8
    $region5: #{_encoder_impl.1} parent=1 // loop_body
      %s25 = ssub.s32 %s20, 1
      %s26 = ssub.s32 %s20, 2
      %s27 = sadd.s32 %s20, 1
      %s28 = ssub.s32 %s20, %s27
      %p29 = scmp.eq.s32.totalorder %s28, 0
      %s31 = sadd.s32 %s30, 1
      %s32 = scalar_select %p29, %s30, %s31
      %p35 = pneg %p29
      %p36 = scmp.eq.s32.totalorder %s20, 1
      %p37 = por %p35, %p36
      %p38 = scmp.ne.s32.totalorder %s30, %s33
      %p39 = scmp.eq.s32.totalorder %s20, 0
      %p40 = por %p38, %p39
      %p41 = scmp.ne.s32.totalorder %s30, %s33
      %p42 = scmp.eq.s32.totalorder %s25, 1
      %p43 = por %p41, %p42
      %p44 = scmp.ne.s32.totalorder %s33, %s34
      %p45 = scmp.eq.s32.totalorder %s25, 0
      %p46 = por %p44, %p45
      %p47 = scmp.ne.s32.totalorder %s33, %s34
      %p48 = scmp.eq.s32.totalorder %s26, 1
      %p49 = por %p47, %p48
      %p51 = scmp.ne.s32.totalorder %s34, %s50
      %p52 = scmp.eq.s32.totalorder %s26, 0
      %p53 = por %p51, %p52
      %s55 = sadd.s32 %s54, 1
      %p58 = scmp.eq.s32.totalorder %s20, 1
      %p59 = scmp.ne.s32.totalorder %s54, %s56
      %p60 = scmp.eq.s32.totalorder %s20, 0
      %p61 = por %p59, %p60
      %p62 = scmp.ne.s32.totalorder %s54, %s56
      %p63 = scmp.eq.s32.totalorder %s25, 1
      %p64 = por %p62, %p63
      %p65 = scmp.ne.s32.totalorder %s56, %s57
      %p66 = scmp.eq.s32.totalorder %s25, 0
      %p67 = por %p65, %p66
      %p68 = scmp.ne.s32.totalorder %s56, %s57
      %p69 = scmp.eq.s32.totalorder %s26, 1
      %p70 = por %p68, %p69
      %p72 = scmp.ne.s32.totalorder %s57, %s71
      %p73 = scmp.eq.s32.totalorder %s26, 0
      %p74 = por %p72, %p73
      %s76 = sadd.s32 %s75, 1
      %p79 = scmp.eq.s32.totalorder %s20, 1
      %p80 = scmp.ne.s32.totalorder %s75, %s77
      %p81 = scmp.eq.s32.totalorder %s20, 0
      %p82 = por %p80, %p81
      %p83 = scmp.ne.s32.totalorder %s75, %s77
      %p84 = scmp.eq.s32.totalorder %s25, 1
      %p85 = por %p83, %p84
      %p86 = scmp.ne.s32.totalorder %s77, %s78
      %p87 = scmp.eq.s32.totalorder %s25, 0
      %p88 = por %p86, %p87
      %p89 = scmp.ne.s32.totalorder %s77, %s78
      %p90 = scmp.eq.s32.totalorder %s26, 1
      %p91 = por %p89, %p90
      %p93 = scmp.ne.s32.totalorder %s78, %s92
      %p94 = scmp.eq.s32.totalorder %s26, 0
      %p95 = por %p93, %p94
      %s97 = sadd.s32 %s96, 1
      %p100 = scmp.eq.s32.totalorder %s20, 1
      %p101 = scmp.ne.s32.totalorder %s96, %s98
      %p102 = scmp.eq.s32.totalorder %s20, 0
      %p103 = por %p101, %p102
      %p104 = scmp.ne.s32.totalorder %s96, %s98
      %p105 = scmp.eq.s32.totalorder %s25, 1
      %p106 = por %p104, %p105
      %p107 = scmp.ne.s32.totalorder %s98, %s99
      %p108 = scmp.eq.s32.totalorder %s25, 0
      %p109 = por %p107, %p108
      %p110 = scmp.ne.s32.totalorder %s98, %s99
      %p111 = scmp.eq.s32.totalorder %s26, 1
      %p112 = por %p110, %p111
      %p114 = scmp.ne.s32.totalorder %s99, %s113
      %p115 = scmp.eq.s32.totalorder %s26, 0
      %p116 = por %p114, %p115
      %s118 = sadd.s32 %s117, 1
      %p121 = scmp.eq.s32.totalorder %s20, 1
      %p122 = scmp.ne.s32.totalorder %s117, %s119
      %p123 = scmp.eq.s32.totalorder %s20, 0
      %p124 = por %p122, %p123
      %p125 = scmp.ne.s32.totalorder %s117, %s119
      %p126 = scmp.eq.s32.totalorder %s25, 1
      %p127 = por %p125, %p126
      %p128 = scmp.ne.s32.totalorder %s119, %s120
      %p129 = scmp.eq.s32.totalorder %s25, 0
      %p130 = por %p128, %p129
      %p131 = scmp.ne.s32.totalorder %s119, %s120
      %p132 = scmp.eq.s32.totalorder %s26, 1
      %p133 = por %p131, %p132
      %p135 = scmp.ne.s32.totalorder %s120, %s134
      %p136 = scmp.eq.s32.totalorder %s26, 0
      %p137 = por %p135, %p136
      %s139 = sadd.s32 %s138, 1
      %p142 = scmp.eq.s32.totalorder %s20, 1
      %p143 = scmp.ne.s32.totalorder %s138, %s140
      %p144 = scmp.eq.s32.totalorder %s20, 0
      %p145 = por %p143, %p144
      %p146 = scmp.ne.s32.totalorder %s138, %s140
      %p147 = scmp.eq.s32.totalorder %s25, 1
      %p148 = por %p146, %p147
      %p149 = scmp.ne.s32.totalorder %s140, %s141
      %p150 = scmp.eq.s32.totalorder %s25, 0
      %p151 = por %p149, %p150
      %p152 = scmp.ne.s32.totalorder %s140, %s141
      %p153 = scmp.eq.s32.totalorder %s26, 1
      %p154 = por %p152, %p153
      %p156 = scmp.ne.s32.totalorder %s141, %s155
      %p157 = scmp.eq.s32.totalorder %s26, 0
      %p158 = por %p156, %p157
      %s160 = sadd.s32 %s159, 1
      %p163 = scmp.eq.s32.totalorder %s20, 1
      %p164 = scmp.ne.s32.totalorder %s159, %s161
      %p165 = scmp.eq.s32.totalorder %s20, 0
      %p166 = por %p164, %p165
      %p167 = scmp.ne.s32.totalorder %s159, %s161
      %p168 = scmp.eq.s32.totalorder %s25, 1
      %p169 = por %p167, %p168
      %p170 = scmp.ne.s32.totalorder %s161, %s162
      %p171 = scmp.eq.s32.totalorder %s25, 0
      %p172 = por %p170, %p171
      %p173 = scmp.ne.s32.totalorder %s161, %s162
      %p174 = scmp.eq.s32.totalorder %s26, 1
      %p175 = por %p173, %p174
      %p177 = scmp.ne.s32.totalorder %s162, %s176
      %p178 = scmp.eq.s32.totalorder %s26, 0
      %p179 = por %p177, %p178
      %s181 = sadd.s32 %s180, 1
      %p184 = scmp.eq.s32.totalorder %s20, 1
      %p185 = scmp.ne.s32.totalorder %s180, %s182
      %p186 = scmp.eq.s32.totalorder %s20, 0
      %p187 = por %p185, %p186
      %p188 = scmp.ne.s32.totalorder %s180, %s182
      %p189 = scmp.eq.s32.totalorder %s25, 1
      %p190 = por %p188, %p189
      %p191 = scmp.ne.s32.totalorder %s182, %s183
      %p192 = scmp.eq.s32.totalorder %s25, 0
      %p193 = por %p191, %p192
      %p194 = scmp.ne.s32.totalorder %s182, %s183
      %p195 = scmp.eq.s32.totalorder %s26, 1
      %p196 = por %p194, %p195
      %p198 = scmp.ne.s32.totalorder %s183, %s197
      %p199 = scmp.eq.s32.totalorder %s26, 0
      %p200 = por %p198, %p199
      %s202 = sadd.s32 %s201, 1
      %p205 = scmp.eq.s32.totalorder %s20, 1
      %p206 = scmp.ne.s32.totalorder %s201, %s203
      %p207 = scmp.eq.s32.totalorder %s20, 0
      %p208 = por %p206, %p207
      %p209 = scmp.ne.s32.totalorder %s201, %s203
      %p210 = scmp.eq.s32.totalorder %s25, 1
      %p211 = por %p209, %p210
      %p212 = scmp.ne.s32.totalorder %s203, %s204
      %p213 = scmp.eq.s32.totalorder %s25, 0
      %p214 = por %p212, %p213
      %p215 = scmp.ne.s32.totalorder %s203, %s204
      %p216 = scmp.eq.s32.totalorder %s26, 1
      %p217 = por %p215, %p216
      %p219 = scmp.ne.s32.totalorder %s204, %s218
      %p220 = scmp.eq.s32.totalorder %s26, 0
      %p221 = por %p219, %p220
      %s223 = sadd.s32 %s222, 1
      %p226 = scmp.eq.s32.totalorder %s20, 1
      %p227 = scmp.ne.s32.totalorder %s222, %s224
      %p228 = scmp.eq.s32.totalorder %s20, 0
      %p229 = por %p227, %p228
      %p230 = scmp.ne.s32.totalorder %s222, %s224
      %p231 = scmp.eq.s32.totalorder %s25, 1
      %p232 = por %p230, %p231
      %p233 = scmp.ne.s32.totalorder %s224, %s225
      %p234 = scmp.eq.s32.totalorder %s25, 0
      %p235 = por %p233, %p234
      %p236 = scmp.ne.s32.totalorder %s224, %s225
      %p237 = scmp.eq.s32.totalorder %s26, 1
      %p238 = por %p236, %p237
      %p240 = scmp.ne.s32.totalorder %s225, %s239
      %p241 = scmp.eq.s32.totalorder %s26, 0
      %p242 = por %p240, %p241
      %s244 = sadd.s32 %s243, 1
      %p247 = scmp.eq.s32.totalorder %s20, 1
      %p248 = scmp.ne.s32.totalorder %s243, %s245
      %p249 = scmp.eq.s32.totalorder %s20, 0
      %p250 = por %p248, %p249
      %p251 = scmp.ne.s32.totalorder %s243, %s245
      %p252 = scmp.eq.s32.totalorder %s25, 1
      %p253 = por %p251, %p252
      %p254 = scmp.ne.s32.totalorder %s245, %s246
      %p255 = scmp.eq.s32.totalorder %s25, 0
      %p256 = por %p254, %p255
      %p257 = scmp.ne.s32.totalorder %s245, %s246
      %p258 = scmp.eq.s32.totalorder %s26, 1
      %p259 = por %p257, %p258
      %p261 = scmp.ne.s32.totalorder %s246, %s260
      %p262 = scmp.eq.s32.totalorder %s26, 0
      %p263 = por %p261, %p262
      %s264 = ssub.s32 %s20, %s27
      %p265 = scmp.eq.s32.totalorder %s264, 0
      %s267 = sadd.s32 %s266, 1
      %s268 = scalar_select %p265, %s266, %s267
      %p271 = pneg %p265
      %p272 = scmp.eq.s32.totalorder %s20, 1
      %p273 = por %p271, %p272
      %p274 = scmp.ne.s32.totalorder %s266, %s269
      %p275 = scmp.eq.s32.totalorder %s20, 0
      %p276 = por %p274, %p275
      %p277 = scmp.ne.s32.totalorder %s266, %s269
      %p278 = scmp.eq.s32.totalorder %s25, 1
      %p279 = por %p277, %p278
      %p280 = scmp.ne.s32.totalorder %s269, %s270
      %p281 = scmp.eq.s32.totalorder %s25, 0
      %p282 = por %p280, %p281
      %p283 = scmp.ne.s32.totalorder %s269, %s270
      %p284 = scmp.eq.s32.totalorder %s26, 1
      %p285 = por %p283, %p284
      %p287 = scmp.ne.s32.totalorder %s270, %s286
      %p288 = scmp.eq.s32.totalorder %s26, 0
      %p289 = por %p287, %p288
      %p290 = scmp.le.s32.totalorder 1, %s20
      %p291 = scmp.lt.s32.totalorder %s20, 3
      %p292 = pnand %p290, %p291
      %p293 = pneg %p292
      // Predicated region
      $region9: #{_encoder_impl.1} parent=5 // pred_check
        _
      $region10: #{_encoder_impl.1} parent=5 // pred_check_branch
        %295 = sbr.rel (%p292) target = $region12
      $region11: #{_encoder_impl.1} parent=5 // pred_region
        %s296 = ssub.s32 %s20, 1
        // Predicated region
        $region13: #{_encoder_impl.1} parent=11 // pred_check
          %p297 = pneg %p67
        $region14: #{_encoder_impl.1} parent=11 // pred_check_branch
          %299 = sbr.rel (%p297) target = $region16
        $region15: #{_encoder_impl.1} parent=11 // pred_region
          _
        $region16: #{_encoder_impl.1} parent=11 // pred_fallthru
          _
        // Predicated region
        $region17: #{_encoder_impl.1} parent=11 // pred_check
          %p300 = pneg %p88
        $region18: #{_encoder_impl.1} parent=11 // pred_check_branch
          %302 = sbr.rel (%p300) target = $region20
        $region19: #{_encoder_impl.1} parent=11 // pred_region
          _
        $region20: #{_encoder_impl.1} parent=11 // pred_fallthru
          _
        // Predicated region
        $region21: #{_encoder_impl.1} parent=11 // pred_check
          %p303 = pneg %p109
        $region22: #{_encoder_impl.1} parent=11 // pred_check_branch
          %305 = sbr.rel (%p303) target = $region24
        $region23: #{_encoder_impl.1} parent=11 // pred_region
          _
        $region24: #{_encoder_impl.1} parent=11 // pred_fallthru
          _
        // Predicated region
        $region25: #{_encoder_impl.1} parent=11 // pred_check
          %p306 = pneg %p130
        $region26: #{_encoder_impl.1} parent=11 // pred_check_branch
          %308 = sbr.rel (%p306) target = $region28
        $region27: #{_encoder_impl.1} parent=11 // pred_region
          _
        $region28: #{_encoder_impl.1} parent=11 // pred_fallthru
          _
        // Predicated region
        $region29: #{_encoder_impl.1} parent=11 // pred_check
          %p309 = pneg %p151
        $region30: #{_encoder_impl.1} parent=11 // pred_check_branch
          %311 = sbr.rel (%p309) target = $region32
        $region31: #{_encoder_impl.1} parent=11 // pred_region
          _
        $region32: #{_encoder_impl.1} parent=11 // pred_fallthru
          _
        // Predicated region
        $region33: #{_encoder_impl.1} parent=11 // pred_check
          %p312 = pneg %p172
        $region34: #{_encoder_impl.1} parent=11 // pred_check_branch
          %314 = sbr.rel (%p312) target = $region36
        $region35: #{_encoder_impl.1} parent=11 // pred_region
          _
        $region36: #{_encoder_impl.1} parent=11 // pred_fallthru
          _
        // Predicated region
        $region37: #{_encoder_impl.1} parent=11 // pred_check
          %p315 = pneg %p193
        $region38: #{_encoder_impl.1} parent=11 // pred_check_branch
          %317 = sbr.rel (%p315) target = $region40
        $region39: #{_encoder_impl.1} parent=11 // pred_region
          _
        $region40: #{_encoder_impl.1} parent=11 // pred_fallthru
          _
        // Predicated region
        $region41: #{_encoder_impl.1} parent=11 // pred_check
          %p318 = pneg %p214
        $region42: #{_encoder_impl.1} parent=11 // pred_check_branch
          %320 = sbr.rel (%p318) target = $region44
        $region43: #{_encoder_impl.1} parent=11 // pred_region
          _
        $region44: #{_encoder_impl.1} parent=11 // pred_fallthru
          _
        // Predicated region
        $region45: #{_encoder_impl.1} parent=11 // pred_check
          %p321 = pneg %p235
        $region46: #{_encoder_impl.1} parent=11 // pred_check_branch
          %323 = sbr.rel (%p321) target = $region48
        $region47: #{_encoder_impl.1} parent=11 // pred_region
          _
        $region48: #{_encoder_impl.1} parent=11 // pred_fallthru
          _
        // Predicated region
        $region49: #{_encoder_impl.1} parent=11 // pred_check
          %p324 = pneg %p256
        $region50: #{_encoder_impl.1} parent=11 // pred_check_branch
          %326 = sbr.rel (%p324) target = $region52
        $region51: #{_encoder_impl.1} parent=11 // pred_region
          _
        $region52: #{_encoder_impl.1} parent=11 // pred_fallthru
          _
      $region12: #{_encoder_impl.1} parent=5 // pred_fallthru
        _
      %p327 = scmp.lt.s32.totalorder %s20, 2
      // Predicated region
      $region53: #{_encoder_impl.1} parent=5 // pred_check
        %p328 = pneg %p327
      $region54: #{_encoder_impl.1} parent=5 // pred_check_branch
        %330 = sbr.rel (%p328) target = $region56
      $region55: #{_encoder_impl.1} parent=5 // pred_region
        // Predicated region
        $region57: #{_encoder_impl.1} parent=55 // pred_check
          %p331 = pneg %p40
        $region58: #{_encoder_impl.1} parent=55 // pred_check_branch
          %333 = sbr.rel (%p331) target = $region60
        $region59: #{_encoder_impl.1} parent=55 // pred_region
          %p334 = scmp.lt.s32.totalorder %s20, 1
          %s335 = scalar_select %p334, %s20, 1
          %s336 = smul.addr %s335, 3
          %s337 = smul.addr %s336, 8
          %s338 = scalar_lea.vmem %s0, %s337
        $region60: #{_encoder_impl.1} parent=55 // pred_fallthru
          _
      $region56: #{_encoder_impl.1} parent=5 // pred_fallthru
        _
      %p339 = scmp.le.s32.totalorder 1, %s20
      %p340 = scmp.lt.s32.totalorder %s20, 3
      %p341 = pnand %p339, %p340
      %p342 = pneg %p341
      // Predicated region
      $region61: #{_encoder_impl.1} parent=5 // pred_check
        _
      $region62: #{_encoder_impl.1} parent=5 // pred_check_branch
        %344 = sbr.rel (%p341) target = $region64
      $region63: #{_encoder_impl.1} parent=5 // pred_region
        %s345 = ssub.s32 %s20, 1
        %p346 = scmp.lt.s32.totalorder %s25, 1
        %s347 = scalar_select %p346, %s25, 1
        %s348 = smul.addr %s347, 3
        %s349 = smul.addr %s348, 8
        %s350 = scalar_lea.vmem %s0, %s349
        %p351 = pneg %p46
        %p352 = pneg %p43
        %p353 = pneg %p67
        %p354 = pneg %p64
        %p355 = pneg %p88
        %p356 = pneg %p85
        %p357 = pneg %p109
        %p358 = pneg %p106
        %p359 = pneg %p130
        %p360 = pneg %p127
        %p361 = pneg %p151
        %p362 = pneg %p148
        %p363 = pneg %p172
        %p364 = pneg %p169
        %p365 = pneg %p193
        %p366 = pneg %p190
        %p367 = pneg %p214
        %p368 = pneg %p211
        %p369 = pneg %p235
        %p370 = pneg %p232
        %p371 = pneg %p256
        %p372 = pneg %p253
        %p373 = pneg %p282
        %p374 = pneg %p279
        %s375 = sand.u32 %s269, 1
        %s376 = scalar_lea.sflag [#allocation3], %s375
        %s377 = sand.u32 %s269, 1
        %s378 = smul.addr %s377, 8
        %s379 = scalar_lea.vmem [#allocation2], %s378
        %p380 = scmp.lt.s32.totalorder %s25, 1
        %s381 = scalar_select %p380, %s25, 1
        %s382 = smul.addr %s381, 3
        %s383 = smul.addr %s382, 8
        %s384 = scalar_lea.vmem %s0, %s383
        %v385 = vld [vmem:[%s384 + $0x8] sm:$0xff]
        %vm386 = vcmask 261120
        %v387 = vsel %vm386, %v385, 0.0
        %388 = vadd.xlane.f32.xlu0 %v387
        %v389 = vpop.xlane.xlu0 %388
        %v390 = vrcp.pop 32.0
        %v391 = vmul.f32 %v389, %v390
        %v392 = vld [vmem:[%s1] sm:$0xff]
        %vm393 = vcmask 64512
        %v395 = vsel %vm393, %v392, 0
        %397 = vmatprep.subr.mxu0 0.0
        %398 = vmatpush1.msra.mxu0 %v391
        %399 = vmatprep.subr.mxu0 0.0
        %400 = vmatpush1.msra.mxu0 0.0
        %401 = vmatprep.subr.mxu0 0.0
        %402 = vmatpush1.msra.mxu0 0.0
        %403 = vmatprep.subr.mxu0 0.0
        %404 = vmatpush1.msra.mxu0 0.0
        %405 = vmatprep.subr.mxu0 0.0
        %406 = vmatpush1.msra.mxu0 0.0
        %407 = vmatprep.subr.mxu0 0.0
        %408 = vmatpush1.msra.mxu0 0.0
        %409 = vmatprep.subr.mxu0 0.0
        %410 = vmatpush1.msra.mxu0 0.0
        %411 = vmatprep.subr.mxu0 0.0
        %412 = vmatpush1.msra.mxu0 0.0
        %413 = vmatprep.subr.mxu0 0.0
        %414 = vmatpush1.msra.mxu0 0.0
        %415 = vmatprep.subr.mxu0 0.0
        %416 = vmatpush1.msra.mxu0 0.0
        %417 = vmatprep.subr.mxu0 0.0
        %418 = vmatpush1.msra.mxu0 0.0
        %419 = vmatprep.subr.mxu0 0.0
        %420 = vmatpush1.msra.mxu0 0.0
        %421 = vmatprep.subr.mxu0 0.0
        %422 = vmatpush1.msra.mxu0 0.0
        %423 = vmatprep.subr.mxu0 0.0
        %424 = vmatpush1.msra.mxu0 0.0
        %425 = vmatprep.subr.mxu0 0.0
        %426 = vmatpush1.msra.mxu0 0.0
        %427 = vmatprep.subr.mxu0 0.0
        %428 = vmatpush1.msra.mxu0 0.0
        %429 = vmatprep.subr.mxu0 0.0
        %430 = vmatpush1.msra.mxu0 0.0
        %431 = vmatprep.subr.mxu0 0.0
        %432 = vmatpush1.msra.mxu0 0.0
        %433 = vmatprep.subr.mxu0 0.0
        %434 = vmatpush1.msra.mxu0 0.0
        %435 = vmatprep.subr.mxu0 0.0
        %436 = vmatpush1.msra.mxu0 0.0
        %437 = vmatprep.subr.mxu0 0.0
        %438 = vmatpush1.msra.mxu0 0.0
        %439 = vmatprep.subr.mxu0 0.0
        %440 = vmatpush1.msra.mxu0 0.0
        %441 = vmatprep.subr.mxu0 0.0
        %442 = vmatpush1.msra.mxu0 0.0
        %443 = vmatprep.subr.mxu0 0.0
        %444 = vmatpush1.msra.mxu0 0.0
        %445 = vmatprep.subr.mxu0 0.0
        %446 = vmatpush1.msra.mxu0 0.0
        %447 = vmatprep.subr.mxu0 0.0
        %448 = vmatpush1.msra.mxu0 0.0
        %449 = vmatprep.subr.mxu0 0.0
        %450 = vmatpush1.msra.mxu0 0.0
        %451 = vmatprep.subr.mxu0 0.0
        %452 = vmatpush1.msra.mxu0 0.0
        %453 = vmatprep.subr.mxu0 0.0
        %454 = vmatpush1.msra.mxu0 0.0
        %455 = vmatprep.subr.mxu0 0.0
        %456 = vmatpush1.msra.mxu0 0.0
        %457 = vmatprep.subr.mxu0 0.0
        %458 = vmatpush1.msra.mxu0 0.0
        %459 = vmatprep.subr.mxu0 0.0
        %460 = vmatpush1.msra.mxu0 0.0
        %461 = vmatprep.mubr.f32.mxu0 0.0
        %462 = vmatmul.mubr.f32.gmra.mrb[0].mxu0 %v395
        %v463 = vpop.f32.mrb[0].mxu0
        %v464 = vadd.f32 0.0, %v463
        %v465 = vpop.f32.mrb[0].mxu0
        %466 = vdwg.mxu0
        %v467 = vadd.f32 %v385, %v464
        %v468 = vld [vmem:[%s2] sm:$0xff]
        %v469 = vld [vmem:[%s2 + $0x8] sm:$0xff]
        %v470 = vld [vmem:[%s2 + $0x10] sm:$0xff]
        %v471 = vld [vmem:[%s2 + $0x18] sm:$0xff]
        %v472 = vld [vmem:[%s384] sm:$0xff]
        %s473 = scalar_lea.vmem %s2, 32
        %v474 = vld [vmem:[%s473] sm:$0xff]
        %v475 = vld [vmem:[%s473 + $0x8] sm:$0xff]
        %v476 = vld [vmem:[%s473 + $0x10] sm:$0xff]
        %v477 = vld [vmem:[%s473 + $0x18] sm:$0xff]
        %v479 = vsel %vm386, %v472, 0
        %481 = vmatprep.subr.mxu0 0.0
        %482 = vmatpush1.msra.mxu0 %v474
        %483 = vmatprep.subr.mxu0 0.0
        %484 = vmatpush1.msra.mxu0 %v475
        %485 = vmatprep.subr.mxu0 0.0
        %486 = vmatpush1.msra.mxu0 %v476
        %487 = vmatprep.subr.mxu0 0.0
        %488 = vmatpush1.msra.mxu0 %v477
        %489 = vmatprep.subr.mxu0 0.0
        %490 = vmatpush1.msra.mxu0 0.0
        %491 = vmatprep.subr.mxu0 0.0
        %492 = vmatpush1.msra.mxu0 0.0
        %493 = vmatprep.subr.mxu0 0.0
        %494 = vmatpush1.msra.mxu0 0.0
        %495 = vmatprep.subr.mxu0 0.0
        %496 = vmatpush1.msra.mxu0 0.0
        %497 = vmatprep.subr.mxu0 0.0
        %498 = vmatpush1.msra.mxu0 0.0
        %499 = vmatprep.subr.mxu0 0.0
        %500 = vmatpush1.msra.mxu0 0.0
        %501 = vmatprep.subr.mxu0 0.0
        %502 = vmatpush1.msra.mxu0 0.0
        %503 = vmatprep.subr.mxu0 0.0
        %504 = vmatpush1.msra.mxu0 0.0
        %505 = vmatprep.subr.mxu0 0.0
        %506 = vmatpush1.msra.mxu0 0.0
        %507 = vmatprep.subr.mxu0 0.0
        %508 = vmatpush1.msra.mxu0 0.0
        %509 = vmatprep.subr.mxu0 0.0
        %510 = vmatpush1.msra.mxu0 0.0
        %511 = vmatprep.subr.mxu0 0.0
        %512 = vmatpush1.msra.mxu0 0.0
        %513 = vmatprep.subr.mxu0 0.0
        %514 = vmatpush1.msra.mxu0 0.0
        %515 = vmatprep.subr.mxu0 0.0
        %516 = vmatpush1.msra.mxu0 0.0
        %517 = vmatprep.subr.mxu0 0.0
        %518 = vmatpush1.msra.mxu0 0.0
        %519 = vmatprep.subr.mxu0 0.0
        %520 = vmatpush1.msra.mxu0 0.0
        %521 = vmatprep.subr.mxu0 0.0
        %522 = vmatpush1.msra.mxu0 0.0
        %523 = vmatprep.subr.mxu0 0.0
        %524 = vmatpush1.msra.mxu0 0.0
        %525 = vmatprep.subr.mxu0 0.0
        %526 = vmatpush1.msra.mxu0 0.0
        %527 = vmatprep.subr.mxu0 0.0
        %528 = vmatpush1.msra.mxu0 0.0
        %529 = vmatprep.subr.mxu0 0.0
        %530 = vmatpush1.msra.mxu0 0.0
        %531 = vmatprep.subr.mxu0 0.0
        %532 = vmatpush1.msra.mxu0 0.0
        %533 = vmatprep.subr.mxu0 0.0
        %534 = vmatpush1.msra.mxu0 0.0
        %535 = vmatprep.subr.mxu0 0.0
        %536 = vmatpush1.msra.mxu0 0.0
        %537 = vmatprep.subr.mxu0 0.0
        %538 = vmatpush1.msra.mxu0 0.0
        %539 = vmatprep.subr.mxu0 0.0
        %540 = vmatpush1.msra.mxu0 0.0
        %541 = vmatprep.subr.mxu0 0.0
        %542 = vmatpush1.msra.mxu0 0.0
        %543 = vmatprep.subr.mxu0 0.0
        %544 = vmatpush1.msra.mxu0 0.0
        %545 = vmatprep.mubr.f32.mxu0 0.0
        %546 = vmatmul.mubr.f32.gmra.mrb[0].mxu0 %v479
        %v547 = vpop.f32.mrb[0].mxu0
        %v548 = vadd.f32 0.0, %v547
        %v549 = vpop.f32.mrb[0].mxu0
        %550 = vdwg.mxu0
        %v552 = vsel %vm386, %v385, 0
        %554 = vmatprep.subr.mxu0 0.0
        %555 = vmatpush1.msra.mxu0 %v468
        %556 = vmatprep.subr.mxu0 0.0
        %557 = vmatpush1.msra.mxu0 %v469
        %558 = vmatprep.subr.mxu0 0.0
        %559 = vmatpush1.msra.mxu0 %v470
        %560 = vmatprep.subr.mxu0 0.0
        %561 = vmatpush1.msra.mxu0 %v471
        %562 = vmatprep.subr.mxu0 0.0
        %563 = vmatpush1.msra.mxu0 0.0
        %564 = vmatprep.subr.mxu0 0.0
        %565 = vmatpush1.msra.mxu0 0.0
        %566 = vmatprep.subr.mxu0 0.0
        %567 = vmatpush1.msra.mxu0 0.0
        %568 = vmatprep.subr.mxu0 0.0
        %569 = vmatpush1.msra.mxu0 0.0
        %570 = vmatprep.subr.mxu0 0.0
        %571 = vmatpush1.msra.mxu0 0.0
        %572 = vmatprep.subr.mxu0 0.0
        %573 = vmatpush1.msra.mxu0 0.0
        %574 = vmatprep.subr.mxu0 0.0
        %575 = vmatpush1.msra.mxu0 0.0
        %576 = vmatprep.subr.mxu0 0.0
        %577 = vmatpush1.msra.mxu0 0.0
        %578 = vmatprep.subr.mxu0 0.0
        %579 = vmatpush1.msra.mxu0 0.0
        %580 = vmatprep.subr.mxu0 0.0
        %581 = vmatpush1.msra.mxu0 0.0
        %582 = vmatprep.subr.mxu0 0.0
        %583 = vmatpush1.msra.mxu0 0.0
        %584 = vmatprep.subr.mxu0 0.0
        %585 = vmatpush1.msra.mxu0 0.0
        %586 = vmatprep.subr.mxu0 0.0
        %587 = vmatpush1.msra.mxu0 0.0
        %588 = vmatprep.subr.mxu0 0.0
        %589 = vmatpush1.msra.mxu0 0.0
        %590 = vmatprep.subr.mxu0 0.0
        %591 = vmatpush1.msra.mxu0 0.0
        %592 = vmatprep.subr.mxu0 0.0
        %593 = vmatpush1.msra.mxu0 0.0
        %594 = vmatprep.subr.mxu0 0.0
        %595 = vmatpush1.msra.mxu0 0.0
        %596 = vmatprep.subr.mxu0 0.0
        %597 = vmatpush1.msra.mxu0 0.0
        %598 = vmatprep.subr.mxu0 0.0
        %599 = vmatpush1.msra.mxu0 0.0
        %600 = vmatprep.subr.mxu0 0.0
        %601 = vmatpush1.msra.mxu0 0.0
        %602 = vmatprep.subr.mxu0 0.0
        %603 = vmatpush1.msra.mxu0 0.0
        %604 = vmatprep.subr.mxu0 0.0
        %605 = vmatpush1.msra.mxu0 0.0
        %606 = vmatprep.subr.mxu0 0.0
        %607 = vmatpush1.msra.mxu0 0.0
        %608 = vmatprep.subr.mxu0 0.0
        %609 = vmatpush1.msra.mxu0 0.0
        %610 = vmatprep.subr.mxu0 0.0
        %611 = vmatpush1.msra.mxu0 0.0
        %612 = vmatprep.subr.mxu0 0.0
        %613 = vmatpush1.msra.mxu0 0.0
        %614 = vmatprep.subr.mxu0 0.0
        %615 = vmatpush1.msra.mxu0 0.0
        %616 = vmatprep.subr.mxu0 0.0
        %617 = vmatpush1.msra.mxu0 0.0
        %618 = vmatprep.mubr.f32.mxu0 0.0
        %619 = vmatmul.mubr.f32.gmra.mrb[0].mxu0 %v552
        %v620 = vpop.f32.mrb[0].mxu0
        %v621 = vadd.f32 %v548, %v620
        %v622 = vpop.f32.mrb[0].mxu0
        %623 = vdwg.mxu0
        %v624 = vld [vmem:[%s384 + $0x4] sm:$0xff]
        %s625 = scalar_lea.vmem %s2, 64
        %v626 = vld [vmem:[%s625] sm:$0xff]
        %v627 = vld [vmem:[%s625 + $0x8] sm:$0xff]
        %v628 = vld [vmem:[%s625 + $0x10] sm:$0xff]
        %v629 = vld [vmem:[%s625 + $0x18] sm:$0xff]
        %v631 = vsel %vm386, %v624, 0
        %633 = vmatprep.subr.mxu0 0.0
        %634 = vmatpush1.msra.mxu0 %v626
        %635 = vmatprep.subr.mxu0 0.0
        %636 = vmatpush1.msra.mxu0 %v627
        %637 = vmatprep.subr.mxu0 0.0
        %638 = vmatpush1.msra.mxu0 %v628
        %639 = vmatprep.subr.mxu0 0.0
        %640 = vmatpush1.msra.mxu0 %v629
        %641 = vmatprep.subr.mxu0 0.0
        %642 = vmatpush1.msra.mxu0 0.0
        %643 = vmatprep.subr.mxu0 0.0
        %644 = vmatpush1.msra.mxu0 0.0
        %645 = vmatprep.subr.mxu0 0.0
        %646 = vmatpush1.msra.mxu0 0.0
        %647 = vmatprep.subr.mxu0 0.0
        %648 = vmatpush1.msra.mxu0 0.0
        %649 = vmatprep.subr.mxu0 0.0
        %650 = vmatpush1.msra.mxu0 0.0
        %651 = vmatprep.subr.mxu0 0.0
        %652 = vmatpush1.msra.mxu0 0.0
        %653 = vmatprep.subr.mxu0 0.0
        %654 = vmatpush1.msra.mxu0 0.0
        %655 = vmatprep.subr.mxu0 0.0
        %656 = vmatpush1.msra.mxu0 0.0
        %657 = vmatprep.subr.mxu0 0.0
        %658 = vmatpush1.msra.mxu0 0.0
        %659 = vmatprep.subr.mxu0 0.0
        %660 = vmatpush1.msra.mxu0 0.0
        %661 = vmatprep.subr.mxu0 0.0
        %662 = vmatpush1.msra.mxu0 0.0
        %663 = vmatprep.subr.mxu0 0.0
        %664 = vmatpush1.msra.mxu0 0.0
        %665 = vmatprep.subr.mxu0 0.0
        %666 = vmatpush1.msra.mxu0 0.0
        %667 = vmatprep.subr.mxu0 0.0
        %668 = vmatpush1.msra.mxu0 0.0
        %669 = vmatprep.subr.mxu0 0.0
        %670 = vmatpush1.msra.mxu0 0.0
        %671 = vmatprep.subr.mxu0 0.0
        %672 = vmatpush1.msra.mxu0 0.0
        %673 = vmatprep.subr.mxu0 0.0
        %674 = vmatpush1.msra.mxu0 0.0
        %675 = vmatprep.subr.mxu0 0.0
        %676 = vmatpush1.msra.mxu0 0.0
        %677 = vmatprep.subr.mxu0 0.0
        %678 = vmatpush1.msra.mxu0 0.0
        %679 = vmatprep.subr.mxu0 0.0
        %680 = vmatpush1.msra.mxu0 0.0
        %681 = vmatprep.subr.mxu0 0.0
        %682 = vmatpush1.msra.mxu0 0.0
        %683 = vmatprep.subr.mxu0 0.0
        %684 = vmatpush1.msra.mxu0 0.0
        %685 = vmatprep.subr.mxu0 0.0
        %686 = vmatpush1.msra.mxu0 0.0
        %687 = vmatprep.subr.mxu0 0.0
        %688 = vmatpush1.msra.mxu0 0.0
        %689 = vmatprep.subr.mxu0 0.0
        %690 = vmatpush1.msra.mxu0 0.0
        %691 = vmatprep.subr.mxu0 0.0
        %692 = vmatpush1.msra.mxu0 0.0
        %693 = vmatprep.subr.mxu0 0.0
        %694 = vmatpush1.msra.mxu0 0.0
        %695 = vmatprep.subr.mxu0 0.0
        %696 = vmatpush1.msra.mxu0 0.0
        %697 = vmatprep.mubr.f32.mxu0 0.0
        %698 = vmatmul.mubr.f32.gmra.mrb[0].mxu0 %v631
        %v699 = vpop.f32.mrb[0].mxu0
        %v700 = vadd.f32 0.0, %v699
        %v701 = vpop.f32.mrb[0].mxu0
        %702 = vdwg.mxu0
        %v703 = vadd.f32 %v621, %v700
        %v704 = vld [vmem:[%s384 + $0x6] sm:$0xff]
        %s705 = scalar_lea.vmem %s2, 96
        %v706 = vld [vmem:[%s705] sm:$0xff]
        %v707 = vld [vmem:[%s705 + $0x8] sm:$0xff]
        %v708 = vld [vmem:[%s705 + $0x10] sm:$0xff]
        %v709 = vld [vmem:[%s705 + $0x18] sm:$0xff]
        %v711 = vsel %vm386, %v704, 0
        %713 = vmatprep.subr.mxu0 0.0
        %714 = vmatpush1.msra.mxu0 %v706
        %715 = vmatprep.subr.mxu0 0.0
        %716 = vmatpush1.msra.mxu0 %v707
        %717 = vmatprep.subr.mxu0 0.0
        %718 = vmatpush1.msra.mxu0 %v708
        %719 = vmatprep.subr.mxu0 0.0
        %720 = vmatpush1.msra.mxu0 %v709
        %721 = vmatprep.subr.mxu0 0.0
        %722 = vmatpush1.msra.mxu0 0.0
        %723 = vmatprep.subr.mxu0 0.0
        %724 = vmatpush1.msra.mxu0 0.0
        %725 = vmatprep.subr.mxu0 0.0
        %726 = vmatpush1.msra.mxu0 0.0
        %727 = vmatprep.subr.mxu0 0.0
        %728 = vmatpush1.msra.mxu0 0.0
        %729 = vmatprep.subr.mxu0 0.0
        %730 = vmatpush1.msra.mxu0 0.0
        %731 = vmatprep.subr.mxu0 0.0
        %732 = vmatpush1.msra.mxu0 0.0
        %733 = vmatprep.subr.mxu0 0.0
        %734 = vmatpush1.msra.mxu0 0.0
        %735 = vmatprep.subr.mxu0 0.0
        %736 = vmatpush1.msra.mxu0 0.0
        %737 = vmatprep.subr.mxu0 0.0
        %738 = vmatpush1.msra.mxu0 0.0
        %739 = vmatprep.subr.mxu0 0.0
        %740 = vmatpush1.msra.mxu0 0.0
        %741 = vmatprep.subr.mxu0 0.0
        %742 = vmatpush1.msra.mxu0 0.0
        %743 = vmatprep.subr.mxu0 0.0
        %744 = vmatpush1.msra.mxu0 0.0
        %745 = vmatprep.subr.mxu0 0.0
        %746 = vmatpush1.msra.mxu0 0.0
        %747 = vmatprep.subr.mxu0 0.0
        %748 = vmatpush1.msra.mxu0 0.0
        %749 = vmatprep.subr.mxu0 0.0
        %750 = vmatpush1.msra.mxu0 0.0
        %751 = vmatprep.subr.mxu0 0.0
        %752 = vmatpush1.msra.mxu0 0.0
        %753 = vmatprep.subr.mxu0 0.0
        %754 = vmatpush1.msra.mxu0 0.0
        %755 = vmatprep.subr.mxu0 0.0
        %756 = vmatpush1.msra.mxu0 0.0
        %757 = vmatprep.subr.mxu0 0.0
        %758 = vmatpush1.msra.mxu0 0.0
        %759 = vmatprep.subr.mxu0 0.0
        %760 = vmatpush1.msra.mxu0 0.0
        %761 = vmatprep.subr.mxu0 0.0
        %762 = vmatpush1.msra.mxu0 0.0
        %763 = vmatprep.subr.mxu0 0.0
        %764 = vmatpush1.msra.mxu0 0.0
        %765 = vmatprep.subr.mxu0 0.0
        %766 = vmatpush1.msra.mxu0 0.0
        %767 = vmatprep.subr.mxu0 0.0
        %768 = vmatpush1.msra.mxu0 0.0
        %769 = vmatprep.subr.mxu0 0.0
        %770 = vmatpush1.msra.mxu0 0.0
        %771 = vmatprep.subr.mxu0 0.0
        %772 = vmatpush1.msra.mxu0 0.0
        %773 = vmatprep.subr.mxu0 0.0
        %774 = vmatpush1.msra.mxu0 0.0
        %775 = vmatprep.subr.mxu0 0.0
        %776 = vmatpush1.msra.mxu0 0.0
        %777 = vmatprep.mubr.f32.mxu0 0.0
        %778 = vmatmul.mubr.f32.gmra.mrb[0].mxu0 %v711
        %v779 = vpop.f32.mrb[0].mxu0
        %v780 = vadd.f32 0.0, %v779
        %v781 = vpop.f32.mrb[0].mxu0
        %782 = vdwg.mxu0
        %v783 = vadd.f32 %v703, %v780
        %v784 = vld [vmem:[%s384 + $0x7] sm:$0xff]
        %s785 = scalar_lea.vmem %s2, 128
        %v786 = vld [vmem:[%s785] sm:$0xff]
        %v787 = vld [vmem:[%s785 + $0x8] sm:$0xff]
        %v788 = vld [vmem:[%s785 + $0x10] sm:$0xff]
        %v789 = vld [vmem:[%s785 + $0x18] sm:$0xff]
        %v791 = vsel %vm386, %v784, 0
        %793 = vmatprep.subr.mxu0 0.0
        %794 = vmatpush1.msra.mxu0 %v786
        %795 = vmatprep.subr.mxu0 0.0
        %796 = vmatpush1.msra.mxu0 %v787
        %797 = vmatprep.subr.mxu0 0.0
        %798 = vmatpush1.msra.mxu0 %v788
        %799 = vmatprep.subr.mxu0 0.0
        %800 = vmatpush1.msra.mxu0 %v789
        %801 = vmatprep.subr.mxu0 0.0
        %802 = vmatpush1.msra.mxu0 0.0
        %803 = vmatprep.subr.mxu0 0.0
        %804 = vmatpush1.msra.mxu0 0.0
        %805 = vmatprep.subr.mxu0 0.0
        %806 = vmatpush1.msra.mxu0 0.0
        %807 = vmatprep.subr.mxu0 0.0
        %808 = vmatpush1.msra.mxu0 0.0
        %809 = vmatprep.subr.mxu0 0.0
        %810 = vmatpush1.msra.mxu0 0.0
        %811 = vmatprep.subr.mxu0 0.0
        %812 = vmatpush1.msra.mxu0 0.0
        %813 = vmatprep.subr.mxu0 0.0
        %814 = vmatpush1.msra.mxu0 0.0
        %815 = vmatprep.subr.mxu0 0.0
        %816 = vmatpush1.msra.mxu0 0.0
        %817 = vmatprep.subr.mxu0 0.0
        %818 = vmatpush1.msra.mxu0 0.0
        %819 = vmatprep.subr.mxu0 0.0
        %820 = vmatpush1.msra.mxu0 0.0
        %821 = vmatprep.subr.mxu0 0.0
        %822 = vmatpush1.msra.mxu0 0.0
        %823 = vmatprep.subr.mxu0 0.0
        %824 = vmatpush1.msra.mxu0 0.0
        %825 = vmatprep.subr.mxu0 0.0
        %826 = vmatpush1.msra.mxu0 0.0
        %827 = vmatprep.subr.mxu0 0.0
        %828 = vmatpush1.msra.mxu0 0.0
        %829 = vmatprep.subr.mxu0 0.0
        %830 = vmatpush1.msra.mxu0 0.0
        %831 = vmatprep.subr.mxu0 0.0
        %832 = vmatpush1.msra.mxu0 0.0
        %833 = vmatprep.subr.mxu0 0.0
        %834 = vmatpush1.msra.mxu0 0.0
        %835 = vmatprep.subr.mxu0 0.0
        %836 = vmatpush1.msra.mxu0 0.0
        %837 = vmatprep.subr.mxu0 0.0
        %838 = vmatpush1.msra.mxu0 0.0
        %839 = vmatprep.subr.mxu0 0.0
        %840 = vmatpush1.msra.mxu0 0.0
        %841 = vmatprep.subr.mxu0 0.0
        %842 = vmatpush1.msra.mxu0 0.0
        %843 = vmatprep.subr.mxu0 0.0
        %844 = vmatpush1.msra.mxu0 0.0
        %845 = vmatprep.subr.mxu0 0.0
        %846 = vmatpush1.msra.mxu0 0.0
        %847 = vmatprep.subr.mxu0 0.0
        %848 = vmatpush1.msra.mxu0 0.0
        %849 = vmatprep.subr.mxu0 0.0
        %850 = vmatpush1.msra.mxu0 0.0
        %851 = vmatprep.subr.mxu0 0.0
        %852 = vmatpush1.msra.mxu0 0.0
        %853 = vmatprep.subr.mxu0 0.0
        %854 = vmatpush1.msra.mxu0 0.0
        %855 = vmatprep.subr.mxu0 0.0
        %856 = vmatpush1.msra.mxu0 0.0
        %857 = vmatprep.mubr.f32.mxu0 0.0
        %858 = vmatmul.mubr.f32.gmra.mrb[0].mxu0 %v791
        %v859 = vpop.f32.mrb[0].mxu0
        %v860 = vadd.f32 0.0, %v859
        %v861 = vpop.f32.mrb[0].mxu0
        %862 = vdwg.mxu0
        %v863 = vadd.f32 %v783, %v860
        %v864 = vld [vmem:[%s384 + $0x9] sm:$0xff]
        %s865 = scalar_lea.vmem %s2, 160
        %v866 = vld [vmem:[%s865] sm:$0xff]
        %v867 = vld [vmem:[%s865 + $0x8] sm:$0xff]
        %v868 = vld [vmem:[%s865 + $0x10] sm:$0xff]
        %v869 = vld [vmem:[%s865 + $0x18] sm:$0xff]
        %v871 = vsel %vm386, %v864, 0
        %873 = vmatprep.subr.mxu0 0.0
        %874 = vmatpush1.msra.mxu0 %v866
        %875 = vmatprep.subr.mxu0 0.0
        %876 = vmatpush1.msra.mxu0 %v867
        %877 = vmatprep.subr.mxu0 0.0
        %878 = vmatpush1.msra.mxu0 %v868
        %879 = vmatprep.subr.mxu0 0.0
        %880 = vmatpush1.msra.mxu0 %v869
        %881 = vmatprep.subr.mxu0 0.0
        %882 = vmatpush1.msra.mxu0 0.0
        %883 = vmatprep.subr.mxu0 0.0
        %884 = vmatpush1.msra.mxu0 0.0
        %885 = vmatprep.subr.mxu0 0.0
        %886 = vmatpush1.msra.mxu0 0.0
        %887 = vmatprep.subr.mxu0 0.0
        %888 = vmatpush1.msra.mxu0 0.0
        %889 = vmatprep.subr.mxu0 0.0
        %890 = vmatpush1.msra.mxu0 0.0
        %891 = vmatprep.subr.mxu0 0.0
        %892 = vmatpush1.msra.mxu0 0.0
        %893 = vmatprep.subr.mxu0 0.0
        %894 = vmatpush1.msra.mxu0 0.0
        %895 = vmatprep.subr.mxu0 0.0
        %896 = vmatpush1.msra.mxu0 0.0
        %897 = vmatprep.subr.mxu0 0.0
        %898 = vmatpush1.msra.mxu0 0.0
        %899 = vmatprep.subr.mxu0 0.0
        %900 = vmatpush1.msra.mxu0 0.0
        %901 = vmatprep.subr.mxu0 0.0
        %902 = vmatpush1.msra.mxu0 0.0
        %903 = vmatprep.subr.mxu0 0.0
        %904 = vmatpush1.msra.mxu0 0.0
        %905 = vmatprep.subr.mxu0 0.0
        %906 = vmatpush1.msra.mxu0 0.0
        %907 = vmatprep.subr.mxu0 0.0
        %908 = vmatpush1.msra.mxu0 0.0
        %909 = vmatprep.subr.mxu0 0.0
        %910 = vmatpush1.msra.mxu0 0.0
        %911 = vmatprep.subr.mxu0 0.0
        %912 = vmatpush1.msra.mxu0 0.0
        %913 = vmatprep.subr.mxu0 0.0
        %914 = vmatpush1.msra.mxu0 0.0
        %915 = vmatprep.subr.mxu0 0.0
        %916 = vmatpush1.msra.mxu0 0.0
        %917 = vmatprep.subr.mxu0 0.0
        %918 = vmatpush1.msra.mxu0 0.0
        %919 = vmatprep.subr.mxu0 0.0
        %920 = vmatpush1.msra.mxu0 0.0
        %921 = vmatprep.subr.mxu0 0.0
        %922 = vmatpush1.msra.mxu0 0.0
        %923 = vmatprep.subr.mxu0 0.0
        %924 = vmatpush1.msra.mxu0 0.0
        %925 = vmatprep.subr.mxu0 0.0
        %926 = vmatpush1.msra.mxu0 0.0
        %927 = vmatprep.subr.mxu0 0.0
        %928 = vmatpush1.msra.mxu0 0.0
        %929 = vmatprep.subr.mxu0 0.0
        %930 = vmatpush1.msra.mxu0 0.0
        %931 = vmatprep.subr.mxu0 0.0
        %932 = vmatpush1.msra.mxu0 0.0
        %933 = vmatprep.subr.mxu0 0.0
        %934 = vmatpush1.msra.mxu0 0.0
        %935 = vmatprep.subr.mxu0 0.0
        %936 = vmatpush1.msra.mxu0 0.0
        %937 = vmatprep.mubr.f32.mxu0 0.0
        %938 = vmatmul.mubr.f32.gmra.mrb[0].mxu0 %v871
        %v939 = vpop.f32.mrb[0].mxu0
        %v940 = vadd.f32 0.0, %v939
        %v941 = vpop.f32.mrb[0].mxu0
        %942 = vdwg.mxu0
        %v943 = vadd.f32 %v863, %v940
        %v944 = vld [vmem:[%s384 + $0xa] sm:$0xff]
        %s945 = scalar_lea.vmem %s2, 192
        %v946 = vld [vmem:[%s945] sm:$0xff]
        %v947 = vld [vmem:[%s945 + $0x8] sm:$0xff]
        %v948 = vld [vmem:[%s945 + $0x10] sm:$0xff]
        %v949 = vld [vmem:[%s945 + $0x18] sm:$0xff]
        %v951 = vsel %vm386, %v944, 0
        %953 = vmatprep.subr.mxu0 0.0
        %954 = vmatpush1.msra.mxu0 %v946
        %955 = vmatprep.subr.mxu0 0.0
        %956 = vmatpush1.msra.mxu0 %v947
        %957 = vmatprep.subr.mxu0 0.0
        %958 = vmatpush1.msra.mxu0 %v948
        %959 = vmatprep.subr.mxu0 0.0
        %960 = vmatpush1.msra.mxu0 %v949
        %961 = vmatprep.subr.mxu0 0.0
        %962 = vmatpush1.msra.mxu0 0.0
        %963 = vmatprep.subr.mxu0 0.0
        %964 = vmatpush1.msra.mxu0 0.0
        %965 = vmatprep.subr.mxu0 0.0
        %966 = vmatpush1.msra.mxu0 0.0
        %967 = vmatprep.subr.mxu0 0.0
        %968 = vmatpush1.msra.mxu0 0.0
        %969 = vmatprep.subr.mxu0 0.0
        %970 = vmatpush1.msra.mxu0 0.0
        %971 = vmatprep.subr.mxu0 0.0
        %972 = vmatpush1.msra.mxu0 0.0
        %973 = vmatprep.subr.mxu0 0.0
        %974 = vmatpush1.msra.mxu0 0.0
        %975 = vmatprep.subr.mxu0 0.0
        %976 = vmatpush1.msra.mxu0 0.0
        %977 = vmatprep.subr.mxu0 0.0
        %978 = vmatpush1.msra.mxu0 0.0
        %979 = vmatprep.subr.mxu0 0.0
        %980 = vmatpush1.msra.mxu0 0.0
        %981 = vmatprep.subr.mxu0 0.0
        %982 = vmatpush1.msra.mxu0 0.0
        %983 = vmatprep.subr.mxu0 0.0
        %984 = vmatpush1.msra.mxu0 0.0
        %985 = vmatprep.subr.mxu0 0.0
        %986 = vmatpush1.msra.mxu0 0.0
        %987 = vmatprep.subr.mxu0 0.0
        %988 = vmatpush1.msra.mxu0 0.0
        %989 = vmatprep.subr.mxu0 0.0
        %990 = vmatpush1.msra.mxu0 0.0
        %991 = vmatprep.subr.mxu0 0.0
        %992 = vmatpush1.msra.mxu0 0.0
        %993 = vmatprep.subr.mxu0 0.0
        %994 = vmatpush1.msra.mxu0 0.0
        %995 = vmatprep.subr.mxu0 0.0
        %996 = vmatpush1.msra.mxu0 0.0
        %997 = vmatprep.subr.mxu0 0.0
        %998 = vmatpush1.msra.mxu0 0.0
        %999 = vmatprep.subr.mxu0 0.0
        %1000 = vmatpush1.msra.mxu0 0.0
        %1001 = vmatprep.subr.mxu0 0.0
        %1002 = vmatpush1.msra.mxu0 0.0
        %1003 = vmatprep.subr.mxu0 0.0
        %1004 = vmatpush1.msra.mxu0 0.0
        %1005 = vmatprep.subr.mxu0 0.0
        %1006 = vmatpush1.msra.mxu0 0.0
        %1007 = vmatprep.subr.mxu0 0.0
        %1008 = vmatpush1.msra.mxu0 0.0
        %1009 = vmatprep.subr.mxu0 0.0
        %1010 = vmatpush1.msra.mxu0 0.0
        %1011 = vmatprep.subr.mxu0 0.0
        %1012 = vmatpush1.msra.mxu0 0.0
        %1013 = vmatprep.subr.mxu0 0.0
        %1014 = vmatpush1.msra.mxu0 0.0
        %1015 = vmatprep.subr.mxu0 0.0
        %1016 = vmatpush1.msra.mxu0 0.0
        %1017 = vmatprep.mubr.f32.mxu0 0.0
        %1018 = vmatmul.mubr.f32.gmra.mrb[0].mxu0 %v951
        %v1019 = vpop.f32.mrb[0].mxu0
        %v1020 = vadd.f32 0.0, %v1019
        %v1021 = vpop.f32.mrb[0].mxu0
        %1022 = vdwg.mxu0
        %v1023 = vadd.f32 %v943, %v1020
        %v1024 = vld [vmem:[%s384 + $0xc] sm:$0xff]
        %s1025 = scalar_lea.vmem %s2, 224
        %v1026 = vld [vmem:[%s1025] sm:$0xff]
        %v1027 = vld [vmem:[%s1025 + $0x8] sm:$0xff]
        %v1028 = vld [vmem:[%s1025 + $0x10] sm:$0xff]
        %v1029 = vld [vmem:[%s1025 + $0x18] sm:$0xff]
        %v1031 = vsel %vm386, %v1024, 0
        %1033 = vmatprep.subr.mxu0 0.0
        %1034 = vmatpush1.msra.mxu0 %v1026
        %1035 = vmatprep.subr.mxu0 0.0
        %1036 = vmatpush1.msra.mxu0 %v1027
        %1037 = vmatprep.subr.mxu0 0.0
        %1038 = vmatpush1.msra.mxu0 %v1028
        %1039 = vmatprep.subr.mxu0 0.0
        %1040 = vmatpush1.msra.mxu0 %v1029
        %1041 = vmatprep.subr.mxu0 0.0
        %1042 = vmatpush1.msra.mxu0 0.0
        %1043 = vmatprep.subr.mxu0 0.0
        %1044 = vmatpush1.msra.mxu0 0.0
        %1045 = vmatprep.subr.mxu0 0.0
        %1046 = vmatpush1.msra.mxu0 0.0
        %1047 = vmatprep.subr.mxu0 0.0
        %1048 = vmatpush1.msra.mxu0 0.0
        %1049 = vmatprep.subr.mxu0 0.0
        %1050 = vmatpush1.msra.mxu0 0.0
        %1051 = vmatprep.subr.mxu0 0.0
        %1052 = vmatpush1.msra.mxu0 0.0
        %1053 = vmatprep.subr.mxu0 0.0
        %1054 = vmatpush1.msra.mxu0 0.0
        %1055 = vmatprep.subr.mxu0 0.0
        %1056 = vmatpush1.msra.mxu0 0.0
        %1057 = vmatprep.subr.mxu0 0.0
        %1058 = vmatpush1.msra.mxu0 0.0
        %1059 = vmatprep.subr.mxu0 0.0
        %1060 = vmatpush1.msra.mxu0 0.0
        %1061 = vmatprep.subr.mxu0 0.0
        %1062 = vmatpush1.msra.mxu0 0.0
        %1063 = vmatprep.subr.mxu0 0.0
        %1064 = vmatpush1.msra.mxu0 0.0
        %1065 = vmatprep.subr.mxu0 0.0
        %1066 = vmatpush1.msra.mxu0 0.0
        %1067 = vmatprep.subr.mxu0 0.0
        %1068 = vmatpush1.msra.mxu0 0.0
        %1069 = vmatprep.subr.mxu0 0.0
        %1070 = vmatpush1.msra.mxu0 0.0
        %1071 = vmatprep.subr.mxu0 0.0
        %1072 = vmatpush1.msra.mxu0 0.0
        %1073 = vmatprep.subr.mxu0 0.0
        %1074 = vmatpush1.msra.mxu0 0.0
        %1075 = vmatprep.subr.mxu0 0.0
        %1076 = vmatpush1.msra.mxu0 0.0
        %1077 = vmatprep.subr.mxu0 0.0
        %1078 = vmatpush1.msra.mxu0 0.0
        %1079 = vmatprep.subr.mxu0 0.0
        %1080 = vmatpush1.msra.mxu0 0.0
        %1081 = vmatprep.subr.mxu0 0.0
        %1082 = vmatpush1.msra.mxu0 0.0
        %1083 = vmatprep.subr.mxu0 0.0
        %1084 = vmatpush1.msra.mxu0 0.0
        %1085 = vmatprep.subr.mxu0 0.0
        %1086 = vmatpush1.msra.mxu0 0.0
        %1087 = vmatprep.subr.mxu0 0.0
        %1088 = vmatpush1.msra.mxu0 0.0
        %1089 = vmatprep.subr.mxu0 0.0
        %1090 = vmatpush1.msra.mxu0 0.0
        %1091 = vmatprep.subr.mxu0 0.0
        %1092 = vmatpush1.msra.mxu0 0.0
        %1093 = vmatprep.subr.mxu0 0.0
        %1094 = vmatpush1.msra.mxu0 0.0
        %1095 = vmatprep.subr.mxu0 0.0
        %1096 = vmatpush1.msra.mxu0 0.0
        %1097 = vmatprep.mubr.f32.mxu0 0.0
        %1098 = vmatmul.mubr.f32.gmra.mrb[0].mxu0 %v1031
        %v1099 = vpop.f32.mrb[0].mxu0
        %v1100 = vadd.f32 0.0, %v1099
        %v1101 = vpop.f32.mrb[0].mxu0
        %1102 = vdwg.mxu0
        %v1103 = vadd.f32 %v1023, %v1100
        %v1104 = vld [vmem:[%s384 + $0x10] sm:$0xff]
        %s1105 = scalar_lea.vmem %s2, 256
        %v1106 = vld [vmem:[%s1105] sm:$0xff]
        %v1107 = vld [vmem:[%s1105 + $0x8] sm:$0xff]
        %v1108 = vld [vmem:[%s1105 + $0x10] sm:$0xff]
        %v1109 = vld [vmem:[%s1105 + $0x18] sm:$0xff]
        %v1111 = vsel %vm386, %v1104, 0
        %1113 = vmatprep.subr.mxu0 0.0
        %1114 = vmatpush1.msra.mxu0 %v1106
        %1115 = vmatprep.subr.mxu0 0.0
        %1116 = vmatpush1.msra.mxu0 %v1107
        %1117 = vmatprep.subr.mxu0 0.0
        %1118 = vmatpush1.msra.mxu0 %v1108
        %1119 = vmatprep.subr.mxu0 0.0
        %1120 = vmatpush1.msra.mxu0 %v1109
        %1121 = vmatprep.subr.mxu0 0.0
        %1122 = vmatpush1.msra.mxu0 0.0
        %1123 = vmatprep.subr.mxu0 0.0
        %1124 = vmatpush1.msra.mxu0 0.0
        %1125 = vmatprep.subr.mxu0 0.0
        %1126 = vmatpush1.msra.mxu0 0.0
        %1127 = vmatprep.subr.mxu0 0.0
        %1128 = vmatpush1.msra.mxu0 0.0
        %1129 = vmatprep.subr.mxu0 0.0
        %1130 = vmatpush1.msra.mxu0 0.0
        %1131 = vmatprep.subr.mxu0 0.0
        %1132 = vmatpush1.msra.mxu0 0.0
        %1133 = vmatprep.subr.mxu0 0.0
        %1134 = vmatpush1.msra.mxu0 0.0
        %1135 = vmatprep.subr.mxu0 0.0
        %1136 = vmatpush1.msra.mxu0 0.0
        %1137 = vmatprep.subr.mxu0 0.0
        %1138 = vmatpush1.msra.mxu0 0.0
        %1139 = vmatprep.subr.mxu0 0.0
        %1140 = vmatpush1.msra.mxu0 0.0
        %1141 = vmatprep.subr.mxu0 0.0
        %1142 = vmatpush1.msra.mxu0 0.0
        %1143 = vmatprep.subr.mxu0 0.0
        %1144 = vmatpush1.msra.mxu0 0.0
        %1145 = vmatprep.subr.mxu0 0.0
        %1146 = vmatpush1.msra.mxu0 0.0
        %1147 = vmatprep.subr.mxu0 0.0
        %1148 = vmatpush1.msra.mxu0 0.0
        %1149 = vmatprep.subr.mxu0 0.0
        %1150 = vmatpush1.msra.mxu0 0.0
        %1151 = vmatprep.subr.mxu0 0.0
        %1152 = vmatpush1.msra.mxu0 0.0
        %1153 = vmatprep.subr.mxu0 0.0
        %1154 = vmatpush1.msra.mxu0 0.0
        %1155 = vmatprep.subr.mxu0 0.0
        %1156 = vmatpush1.msra.mxu0 0.0
        %1157 = vmatprep.subr.mxu0 0.0
        %1158 = vmatpush1.msra.mxu0 0.0
        %1159 = vmatprep.subr.mxu0 0.0
        %1160 = vmatpush1.msra.mxu0 0.0
        %1161 = vmatprep.subr.mxu0 0.0
        %1162 = vmatpush1.msra.mxu0 0.0
        %1163 = vmatprep.subr.mxu0 0.0
        %1164 = vmatpush1.msra.mxu0 0.0
        %1165 = vmatprep.subr.mxu0 0.0
        %1166 = vmatpush1.msra.mxu0 0.0
        %1167 = vmatprep.subr.mxu0 0.0
        %1168 = vmatpush1.msra.mxu0 0.0
        %1169 = vmatprep.subr.mxu0 0.0
        %1170 = vmatpush1.msra.mxu0 0.0
        %1171 = vmatprep.subr.mxu0 0.0
        %1172 = vmatpush1.msra.mxu0 0.0
        %1173 = vmatprep.subr.mxu0 0.0
        %1174 = vmatpush1.msra.mxu0 0.0
        %1175 = vmatprep.subr.mxu0 0.0
        %1176 = vmatpush1.msra.mxu0 0.0
        %1177 = vmatprep.mubr.f32.mxu0 0.0
        %1178 = vmatmul.mubr.f32.gmra.mrb[0].mxu0 %v1111
        %v1179 = vpop.f32.mrb[0].mxu0
        %v1180 = vadd.f32 0.0, %v1179
        %v1181 = vpop.f32.mrb[0].mxu0
        %1182 = vdwg.mxu0
        %v1183 = vadd.f32 %v1103, %v1180
        %v1184 = vld [vmem:[%s3] sm:$0x1]
        %v1186 = vlaneseq
        %v1187 = vshrl.u32 %v1186, 7
        %v1188 = vsub.s32 0, %v1187
        %v1189 = vrot.slane %v1184, %v1188
        %v1191 = vadd.f32 %v1183, %v1189
        %v1192 = vsel %vm386, %v1191, 0.0
        %1193 = vadd.xlane.f32.xlu0 %v1192
        %v1194 = vpop.xlane.xlu0 %1193
        %v1195 = vmul.f32 %v1194, %v390
        %v1196 = vsub.f32 %v1191, %v1195
        %v1197 = vmul.f32 %v1196, %v1196
        %v1198 = vsel %vm386, %v1197, 0.0
        %1199 = vadd.xlane.f32.xlu0 %v1198
        %v1200 = vpop.xlane.xlu0 %1199
        %v1201 = vmul.f32 %v1200, %v390
        %v1202 = vadd.f32 %v1201, 1e-05
        %v1203 = vrsqrt.pop %v1202
        %v1204 = vmul.f32 %v1196, %v1203
        %v1205 = vld [vmem:[%s4] sm:$0x1]
        %v1207 = vlaneseq
        %v1208 = vshrl.u32 %v1207, 7
        %v1209 = vsub.s32 0, %v1208
        %v1210 = vrot.slane %v1205, %v1209
        %v1212 = vmul.f32 %v1204, %v1210
        %v1213 = vld [vmem:[%s5] sm:$0x1]
        %v1215 = vlaneseq
        %v1216 = vshrl.u32 %v1215, 7
        %v1217 = vsub.s32 0, %v1216
        %v1218 = vrot.slane %v1213, %v1217
        %v1220 = vadd.f32 %v1212, %v1218
        %v1221 = vld [vmem:[%s6] sm:$0xff]
        %v1222 = vld [vmem:[%s6 + $0x8] sm:$0xff]
        %v1223 = vld [vmem:[%s6 + $0x10] sm:$0xff]
        %v1224 = vld [vmem:[%s6 + $0x18] sm:$0xff]
        %v1225 = vld [vmem:[%s7] sm:$0xff]
        %v1226 = vld [vmem:[%s7 + $0x8] sm:$0xff]
        %v1227 = vld [vmem:[%s7 + $0x10] sm:$0xff]
        %v1228 = vld [vmem:[%s7 + $0x18] sm:$0xff]
        %v1230 = vsel %vm386, %v1220, 0
        %1232 = vmatprep.subr.mxu0 0.0
        %1233 = vmatpush1.msra.mxu0 %v1225
        %1234 = vmatprep.subr.mxu0 0.0
        %1235 = vmatpush1.msra.mxu0 %v1226
        %1236 = vmatprep.subr.mxu0 0.0
        %1237 = vmatpush1.msra.mxu0 %v1227
        %1238 = vmatprep.subr.mxu0 0.0
        %1239 = vmatpush1.msra.mxu0 %v1228
        %1240 = vmatprep.subr.mxu0 0.0
        %1241 = vmatpush1.msra.mxu0 0.0
        %1242 = vmatprep.subr.mxu0 0.0
        %1243 = vmatpush1.msra.mxu0 0.0
        %1244 = vmatprep.subr.mxu0 0.0
        %1245 = vmatpush1.msra.mxu0 0.0
        %1246 = vmatprep.subr.mxu0 0.0
        %1247 = vmatpush1.msra.mxu0 0.0
        %1248 = vmatprep.subr.mxu0 0.0
        %1249 = vmatpush1.msra.mxu0 0.0
        %1250 = vmatprep.subr.mxu0 0.0
        %1251 = vmatpush1.msra.mxu0 0.0
        %1252 = vmatprep.subr.mxu0 0.0
        %1253 = vmatpush1.msra.mxu0 0.0
        %1254 = vmatprep.subr.mxu0 0.0
        %1255 = vmatpush1.msra.mxu0 0.0
        %1256 = vmatprep.subr.mxu0 0.0
        %1257 = vmatpush1.msra.mxu0 0.0
        %1258 = vmatprep.subr.mxu0 0.0
        %1259 = vmatpush1.msra.mxu0 0.0
        %1260 = vmatprep.subr.mxu0 0.0
        %1261 = vmatpush1.msra.mxu0 0.0
        %1262 = vmatprep.subr.mxu0 0.0
        %1263 = vmatpush1.msra.mxu0 0.0
        %1264 = vmatprep.subr.mxu0 0.0
        %1265 = vmatpush1.msra.mxu0 0.0
        %1266 = vmatprep.subr.mxu0 0.0
        %1267 = vmatpush1.msra.mxu0 0.0
        %1268 = vmatprep.subr.mxu0 0.0
        %1269 = vmatpush1.msra.mxu0 0.0
        %1270 = vmatprep.subr.mxu0 0.0
        %1271 = vmatpush1.msra.mxu0 0.0
        %1272 = vmatprep.subr.mxu0 0.0
        %1273 = vmatpush1.msra.mxu0 0.0
        %1274 = vmatprep.subr.mxu0 0.0
        %1275 = vmatpush1.msra.mxu0 0.0
        %1276 = vmatprep.subr.mxu0 0.0
        %1277 = vmatpush1.msra.mxu0 0.0
        %1278 = vmatprep.subr.mxu0 0.0
        %1279 = vmatpush1.msra.mxu0 0.0
        %1280 = vmatprep.subr.mxu0 0.0
        %1281 = vmatpush1.msra.mxu0 0.0
        %1282 = vmatprep.subr.mxu0 0.0
        %1283 = vmatpush1.msra.mxu0 0.0
        %1284 = vmatprep.subr.mxu0 0.0
        %1285 = vmatpush1.msra.mxu0 0.0
        %1286 = vmatprep.subr.mxu0 0.0
        %1287 = vmatpush1.msra.mxu0 0.0
        %1288 = vmatprep.subr.mxu0 0.0
        %1289 = vmatpush1.msra.mxu0 0.0
        %1290 = vmatprep.subr.mxu0 0.0
        %1291 = vmatpush1.msra.mxu0 0.0
        %1292 = vmatprep.subr.mxu0 0.0
        %1293 = vmatpush1.msra.mxu0 0.0
        %1294 = vmatprep.subr.mxu0 0.0
        %1295 = vmatpush1.msra.mxu0 0.0
        %1296 = vmatprep.mubr.f32.mxu0 0.0
        %1297 = vmatmul.mubr.f32.gmra.mrb[0].mxu0 %v1230
        %v1298 = vpop.f32.mrb[0].mxu0
        %v1299 = vadd.f32 0.0, %v1298
        %v1300 = vpop.f32.mrb[0].mxu0
        %1301 = vdwg.mxu0
        %v1303 = vsel %vm386, %v467, 0
        %1305 = vmatprep.subr.mxu0 0.0
        %1306 = vmatpush1.msra.mxu0 %v1221
        %1307 = vmatprep.subr.mxu0 0.0
        %1308 = vmatpush1.msra.mxu0 %v1222
        %1309 = vmatprep.subr.mxu0 0.0
        %1310 = vmatpush1.msra.mxu0 %v1223
        %1311 = vmatprep.subr.mxu0 0.0
        %1312 = vmatpush1.msra.mxu0 %v1224
        %1313 = vmatprep.subr.mxu0 0.0
        %1314 = vmatpush1.msra.mxu0 0.0
        %1315 = vmatprep.subr.mxu0 0.0
        %1316 = vmatpush1.msra.mxu0 0.0
        %1317 = vmatprep.subr.mxu0 0.0
        %1318 = vmatpush1.msra.mxu0 0.0
        %1319 = vmatprep.subr.mxu0 0.0
        %1320 = vmatpush1.msra.mxu0 0.0
        %1321 = vmatprep.subr.mxu0 0.0
        %1322 = vmatpush1.msra.mxu0 0.0
        %1323 = vmatprep.subr.mxu0 0.0
        %1324 = vmatpush1.msra.mxu0 0.0
        %1325 = vmatprep.subr.mxu0 0.0
        %1326 = vmatpush1.msra.mxu0 0.0
        %1327 = vmatprep.subr.mxu0 0.0
        %1328 = vmatpush1.msra.mxu0 0.0
        %1329 = vmatprep.subr.mxu0 0.0
        %1330 = vmatpush1.msra.mxu0 0.0
        %1331 = vmatprep.subr.mxu0 0.0
        %1332 = vmatpush1.msra.mxu0 0.0
        %1333 = vmatprep.subr.mxu0 0.0
        %1334 = vmatpush1.msra.mxu0 0.0
        %1335 = vmatprep.subr.mxu0 0.0
        %1336 = vmatpush1.msra.mxu0 0.0
        %1337 = vmatprep.subr.mxu0 0.0
        %1338 = vmatpush1.msra.mxu0 0.0
        %1339 = vmatprep.subr.mxu0 0.0
        %1340 = vmatpush1.msra.mxu0 0.0
        %1341 = vmatprep.subr.mxu0 0.0
        %1342 = vmatpush1.msra.mxu0 0.0
        %1343 = vmatprep.subr.mxu0 0.0
        %1344 = vmatpush1.msra.mxu0 0.0
        %1345 = vmatprep.subr.mxu0 0.0
        %1346 = vmatpush1.msra.mxu0 0.0
        %1347 = vmatprep.subr.mxu0 0.0
        %1348 = vmatpush1.msra.mxu0 0.0
        %1349 = vmatprep.subr.mxu0 0.0
        %1350 = vmatpush1.msra.mxu0 0.0
        %1351 = vmatprep.subr.mxu0 0.0
        %1352 = vmatpush1.msra.mxu0 0.0
        %1353 = vmatprep.subr.mxu0 0.0
        %1354 = vmatpush1.msra.mxu0 0.0
        %1355 = vmatprep.subr.mxu0 0.0
        %1356 = vmatpush1.msra.mxu0 0.0
        %1357 = vmatprep.subr.mxu0 0.0
        %1358 = vmatpush1.msra.mxu0 0.0
        %1359 = vmatprep.subr.mxu0 0.0
        %1360 = vmatpush1.msra.mxu0 0.0
        %1361 = vmatprep.subr.mxu0 0.0
        %1362 = vmatpush1.msra.mxu0 0.0
        %1363 = vmatprep.subr.mxu0 0.0
        %1364 = vmatpush1.msra.mxu0 0.0
        %1365 = vmatprep.subr.mxu0 0.0
        %1366 = vmatpush1.msra.mxu0 0.0
        %1367 = vmatprep.subr.mxu0 0.0
        %1368 = vmatpush1.msra.mxu0 0.0
        %1369 = vmatprep.mubr.f32.mxu0 0.0
        %1370 = vmatmul.mubr.f32.gmra.mrb[0].mxu0 %v1303
        %v1371 = vpop.f32.mrb[0].mxu0
        %v1372 = vadd.f32 %v1299, %v1371
        %v1373 = vpop.f32.mrb[0].mxu0
        %1374 = vdwg.mxu0
        %v1375 = vld [vmem:[%s8] sm:$0x1]
        %v1377 = vlaneseq
        %v1378 = vshrl.u32 %v1377, 7
        %v1379 = vsub.s32 0, %v1378
        %v1380 = vrot.slane %v1375, %v1379
        %v1382 = vadd.f32 %v1372, %v1380
        %v1383 = vxor.u32 %v1382, 2147483648
        %v1384 = vmul.f32 %v1383, 1.442695
        %v1385 = vpow.pop %v1384
        %v1386 = vadd.f32 %v1385, 1.0
        %v1387 = vrcp.pop %v1386
        %v1388 = vmul.f32 1.0, %v1387
        %v1389 = vmul.f32 %v1382, %v1388
        %v1390 = vld [vmem:[%s9] sm:$0xff]
        %v1391 = vld [vmem:[%s9 + $0x8] sm:$0xff]
        %v1392 = vld [vmem:[%s9 + $0x10] sm:$0xff]
        %v1393 = vld [vmem:[%s9 + $0x18] sm:$0xff]
        %v1394 = vld [vmem:[%s9 + $0x20] sm:$0xff]
        %v1395 = vld [vmem:[%s9 + $0x28] sm:$0xff]
        %v1396 = vld [vmem:[%s9 + $0x30] sm:$0xff]
        %v1397 = vld [vmem:[%s9 + $0x38] sm:$0xff]
        %v1398 = vld [vmem:[%s10] sm:$0x1]
        %v1400 = vlaneseq
        %v1401 = vshrl.u32 %v1400, 7
        %v1402 = vsub.s32 0, %v1401
        %v1403 = vrot.slane %v1398, %v1402
        %vm1405 = vcmask 523264
        %v1407 = vsel %vm1405, %v1389, 0
        %1409 = vmatprep.subr.mxu0 0.0
        %1410 = vmatpush1.msra.mxu0 %v1390
        %1411 = vmatprep.subr.mxu0 0.0
        %1412 = vmatpush1.msra.mxu0 %v1391
        %1413 = vmatprep.subr.mxu0 0.0
        %1414 = vmatpush1.msra.mxu0 %v1392
        %1415 = vmatprep.subr.mxu0 0.0
        %1416 = vmatpush1.msra.mxu0 %v1393
        %1417 = vmatprep.subr.mxu0 0.0
        %1418 = vmatpush1.msra.mxu0 %v1394
        %1419 = vmatprep.subr.mxu0 0.0
        %1420 = vmatpush1.msra.mxu0 %v1395
        %1421 = vmatprep.subr.mxu0 0.0
        %1422 = vmatpush1.msra.mxu0 %v1396
        %1423 = vmatprep.subr.mxu0 0.0
        %1424 = vmatpush1.msra.mxu0 %v1397
        %1425 = vmatprep.subr.mxu0 0.0
        %1426 = vmatpush1.msra.mxu0 0.0
        %1427 = vmatprep.subr.mxu0 0.0
        %1428 = vmatpush1.msra.mxu0 0.0
        %1429 = vmatprep.subr.mxu0 0.0
        %1430 = vmatpush1.msra.mxu0 0.0
        %1431 = vmatprep.subr.mxu0 0.0
        %1432 = vmatpush1.msra.mxu0 0.0
        %1433 = vmatprep.subr.mxu0 0.0
        %1434 = vmatpush1.msra.mxu0 0.0
        %1435 = vmatprep.subr.mxu0 0.0
        %1436 = vmatpush1.msra.mxu0 0.0
        %1437 = vmatprep.subr.mxu0 0.0
        %1438 = vmatpush1.msra.mxu0 0.0
        %1439 = vmatprep.subr.mxu0 0.0
        %1440 = vmatpush1.msra.mxu0 0.0
        %1441 = vmatprep.subr.mxu0 0.0
        %1442 = vmatpush1.msra.mxu0 0.0
        %1443 = vmatprep.subr.mxu0 0.0
        %1444 = vmatpush1.msra.mxu0 0.0
        %1445 = vmatprep.subr.mxu0 0.0
        %1446 = vmatpush1.msra.mxu0 0.0
        %1447 = vmatprep.subr.mxu0 0.0
        %1448 = vmatpush1.msra.mxu0 0.0
        %1449 = vmatprep.subr.mxu0 0.0
        %1450 = vmatpush1.msra.mxu0 0.0
        %1451 = vmatprep.subr.mxu0 0.0
        %1452 = vmatpush1.msra.mxu0 0.0
        %1453 = vmatprep.subr.mxu0 0.0
        %1454 = vmatpush1.msra.mxu0 0.0
        %1455 = vmatprep.subr.mxu0 0.0
        %1456 = vmatpush1.msra.mxu0 0.0
        %1457 = vmatprep.subr.mxu0 0.0
        %1458 = vmatpush1.msra.mxu0 0.0
        %1459 = vmatprep.subr.mxu0 0.0
        %1460 = vmatpush1.msra.mxu0 0.0
        %1461 = vmatprep.subr.mxu0 0.0
        %1462 = vmatpush1.msra.mxu0 0.0
        %1463 = vmatprep.subr.mxu0 0.0
        %1464 = vmatpush1.msra.mxu0 0.0
        %1465 = vmatprep.subr.mxu0 0.0
        %1466 = vmatpush1.msra.mxu0 0.0
        %1467 = vmatprep.subr.mxu0 0.0
        %1468 = vmatpush1.msra.mxu0 0.0
        %1469 = vmatprep.subr.mxu0 0.0
        %1470 = vmatpush1.msra.mxu0 0.0
        %1471 = vmatprep.subr.mxu0 0.0
        %1472 = vmatpush1.msra.mxu0 0.0
        %1473 = vmatprep.mubr.f32.mxu0 0.0
        %1474 = vmatmul.mubr.f32.gmra.mrb[0].mxu0 %v1407
        %v1475 = vpop.f32.mrb[0].mxu0
        %v1476 = vadd.f32 %v1403, %v1475
        %v1477 = vpop.f32.mrb[0].mxu0
        %1478 = vdwg.mxu0
        %1479 = vst.msk [vmem:[%s379] sm:$0xff] %vm386, %v1476
        %s1480 = sand.u32 %s269, 1
        %s1481 = scalar_lea.sflag [#allocation3], %s1480
        %s1482 = sand.u32 %s269, 1
        %s1483 = smul.addr %s1482, 8
        %s1484 = scalar_lea.vmem [#allocation2], %s1483
        // Predicated region
        $region65: #{_encoder_impl.1} parent=63 // pred_check
          %p1485 = pneg %p279
        $region66: #{_encoder_impl.1} parent=63 // pred_check_branch
          %1487 = sbr.rel (%p1485) target = $region68
        $region67: #{_encoder_impl.1} parent=63 // pred_region
          %s1489 = ssub.s32 128, 128
          %1490 = vsyncadd %s1481, %s1489
          %s1491 = smul.addr %s25, 128
          %s1492 = scalar_lea.hbm %s11, %s1491
          %s1494 = sshll.u32 %s1484, 4
          %s1495 = int_to_ptr.vmem [resolvable:$true] %s1494
          %1497 = dma.vmem_to_hbm [thread:$0]  %s1495, 128, %s1492, %s1481
        $region68: #{_encoder_impl.1} parent=63 // pred_fallthru
          _
      $region64: #{_encoder_impl.1} parent=5 // pred_fallthru
        _
      %p1498 = scmp.le.s32.totalorder 2, %s20
      // Predicated region
      $region69: #{_encoder_impl.1} parent=5 // pred_check
        %p1499 = pneg %p1498
      $region70: #{_encoder_impl.1} parent=5 // pred_check_branch
        %1501 = sbr.rel (%p1499) target = $region72
      $region71: #{_encoder_impl.1} parent=5 // pred_region
        %s1502 = ssub.s32 %s20, 2
        // Predicated region
        $region73: #{_encoder_impl.1} parent=71 // pred_check
          %p1503 = pneg %p285
        $region74: #{_encoder_impl.1} parent=71 // pred_check_branch
          %1505 = sbr.rel (%p1503) target = $region76
        $region75: #{_encoder_impl.1} parent=71 // pred_region
          %s1506 = sand.u32 %s270, 1
          %s1507 = scalar_lea.sflag [#allocation3], %s1506
          %s1508 = sand.u32 %s270, 1
          %s1509 = smul.addr %s1508, 8
          %s1510 = scalar_lea.vmem [#allocation2], %s1509
          %1511 = dma.done %s1507, 128
        $region76: #{_encoder_impl.1} parent=71 // pred_fallthru
          _
      $region72: #{_encoder_impl.1} parent=5 // pred_fallthru
        _
    $region6: #{_encoder_impl.1} parent=1 // loop_footer
      %s24 = sadd.s32 1, %s20
    $region7: #{_encoder_impl.1} parent=1 // loop_footer_branch
      %19 = sbr.rel target = $region3
    $region8: #{_encoder_impl.1} parent=1 // loop_exit
      _
    %1512 = vsyncpa [#allocation3], 1
    %s1513 = scalar_lea.sflag [#allocation3], 1
    %1514 = vsyncpa %s1513, 1

// kernel: _encoder_impl.1
$region0: #{_encoder_impl.1}
  #allocation0 [shape = 'u32[]', space=smem, size = 0x4, offset = 0x4, fixed_abs, tag = 'smem constant byte address 0x4 - core index']
  #allocation1 [shape = 'u32[144,128]{1,0:T(1,128)}', space=vmem, size = 0x12000, scoped, tag = 'internal scratch']
  %s0 = inlined_call_operand.vmem [shape: f32[2,24,32], index: 0, kind: input, shape index: {}]
  %s1 = inlined_call_operand.vmem [shape: f32[8,8], index: 1, kind: input, shape index: {}]
  %s2 = inlined_call_operand.vmem [shape: f32[9,32,32], index: 2, kind: input, shape index: {}]
  %s3 = inlined_call_operand.vmem [shape: f32[1,32], index: 3, kind: input, shape index: {}]
  %s4 = inlined_call_operand.vmem [shape: f32[1,32], index: 4, kind: input, shape index: {}]
  %s5 = inlined_call_operand.vmem [shape: f32[1,32], index: 5, kind: input, shape index: {}]
  %s6 = inlined_call_operand.vmem [shape: f32[32,64], index: 6, kind: input, shape index: {}]
  %s7 = inlined_call_operand.vmem [shape: f32[32,64], index: 7, kind: input, shape index: {}]
  %s8 = inlined_call_operand.vmem [shape: f32[1,64], index: 8, kind: input, shape index: {}]
  %s9 = inlined_call_operand.vmem [shape: f32[64,32], index: 9, kind: input, shape index: {}]
  %s10 = inlined_call_operand.vmem [shape: f32[1,32], index: 10, kind: input, shape index: {}]
  %s11 = inlined_call_operand.hbm [shape: f32[2,8,32], index: 11, kind: output, shape index: {}]
  %s12 = sld [smem:[#allocation0]]
  $region77: #{_encoder_impl.1} parent=0
    _
  %s14 = ssub.s32 1, %s12
  %s15 = scalar_select 0, %s14, %s12
  $region1: #{_encoder_impl.1} parent=0
    #allocation2 [shape = 'u8[8192]{0}', space=vmem, size = 0x2000, scoped, tag = 'output window, operand 0']
    #allocation3 [shape = 's32[2]{0}', space=sflag, size = 0x8, scoped, tag = 'scoped memory for _encoder_impl.1']
    %16 = vsyncpa [#allocation3], 0
    %s17 = scalar_lea.sflag [#allocation3], 1
    %18 = vsyncpa %s17, 0
    loop: start=0, step=1, limit=4
    $region2: #{_encoder_impl.1} parent=1 // loop_pre_header
      _
    $region3: #{_encoder_impl.1} parent=1 // loop_header
      %s20 = sphi 0, %s24
      %p21 = scmp.ge.s32.totalorder %s20, 4
      %s30 = sphi 0, %s32
      %s33 = sphi 0, %s30
      %s34 = sphi 0, %s33
      %s50 = sphi 0, %s34
      %s54 = sphi 0, %s54
      %s56 = sphi 0, %s54
      %s57 = sphi 0, %s56
      %s71 = sphi 0, %s57
      %s75 = sphi 0, %s75
      %s77 = sphi 0, %s75
      %s78 = sphi 0, %s77
      %s92 = sphi 0, %s78
      %s96 = sphi 0, %s96
      %s98 = sphi 0, %s96
      %s99 = sphi 0, %s98
      %s113 = sphi 0, %s99
      %s117 = sphi 0, %s117
      %s119 = sphi 0, %s117
      %s120 = sphi 0, %s119
      %s134 = sphi 0, %s120
      %s138 = sphi 0, %s138
      %s140 = sphi 0, %s138
      %s141 = sphi 0, %s140
      %s155 = sphi 0, %s141
      %s159 = sphi 0, %s159
      %s161 = sphi 0, %s159
      %s162 = sphi 0, %s161
      %s176 = sphi 0, %s162
      %s180 = sphi 0, %s180
      %s182 = sphi 0, %s180
      %s183 = sphi 0, %s182
      %s197 = sphi 0, %s183
      %s201 = sphi 0, %s201
      %s203 = sphi 0, %s201
      %s204 = sphi 0, %s203
      %s218 = sphi 0, %s204
      %s222 = sphi 0, %s222
      %s224 = sphi 0, %s222
      %s225 = sphi 0, %s224
      %s239 = sphi 0, %s225
      %s243 = sphi 0, %s243
      %s245 = sphi 0, %s243
      %s246 = sphi 0, %s245
      %s260 = sphi 0, %s246
      %s266 = sphi 0, %s268
      %s269 = sphi 0, %s266
      %s270 = sphi 0, %s269
      %s286 = sphi 0, %s270
    $region4: #{_encoder_impl.1} parent=1 // loop_header_branch
      %23 = sbr.rel (%p21) target = $region8
    $region5: #{_encoder_impl.1} parent=1 // loop_body
      %s25 = ssub.s32 %s20, 1
      %s26 = ssub.s32 %s20, 2
      %s27 = sadd.s32 %s20, 1
      %s28 = ssub.s32 %s20, %s27
      %p29 = scmp.eq.s32.totalorder %s28, 0
      %s31 = sadd.s32 %s30, 1
      %s32 = scalar_select %p29, %s30, %s31
      %p35 = pneg %p29
      %p36 = scmp.eq.s32.totalorder %s20, 1
      %p37 = por %p35, %p36
      %p38 = scmp.ne.s32.totalorder %s30, %s33
      %p39 = scmp.eq.s32.totalorder %s20, 0
      %p40 = por %p38, %p39
      %p41 = scmp.ne.s32.totalorder %s30, %s33
      %p42 = scmp.eq.s32.totalorder %s25, 1
      %p43 = por %p41, %p42
      %p44 = scmp.ne.s32.totalorder %s33, %s34
      %p45 = scmp.eq.s32.totalorder %s25, 0
      %p46 = por %p44, %p45
      %p47 = scmp.ne.s32.totalorder %s33, %s34
      %p48 = scmp.eq.s32.totalorder %s26, 1
      %p49 = por %p47, %p48
      %p51 = scmp.ne.s32.totalorder %s34, %s50
      %p52 = scmp.eq.s32.totalorder %s26, 0
      %p53 = por %p51, %p52
      %s55 = sadd.s32 %s54, 1
      %p58 = scmp.eq.s32.totalorder %s20, 1
      %p59 = scmp.ne.s32.totalorder %s54, %s56
      %p60 = scmp.eq.s32.totalorder %s20, 0
      %p61 = por %p59, %p60
      %p62 = scmp.ne.s32.totalorder %s54, %s56
      %p63 = scmp.eq.s32.totalorder %s25, 1
      %p64 = por %p62, %p63
      %p65 = scmp.ne.s32.totalorder %s56, %s57
      %p66 = scmp.eq.s32.totalorder %s25, 0
      %p67 = por %p65, %p66
      %p68 = scmp.ne.s32.totalorder %s56, %s57
      %p69 = scmp.eq.s32.totalorder %s26, 1
      %p70 = por %p68, %p69
      %p72 = scmp.ne.s32.totalorder %s57, %s71
      %p73 = scmp.eq.s32.totalorder %s26, 0
      %p74 = por %p72, %p73
      %s76 = sadd.s32 %s75, 1
      %p79 = scmp.eq.s32.totalorder %s20, 1
      %p80 = scmp.ne.s32.totalorder %s75, %s77
      %p81 = scmp.eq.s32.totalorder %s20, 0
      %p82 = por %p80, %p81
      %p83 = scmp.ne.s32.totalorder %s75, %s77
      %p84 = scmp.eq.s32.totalorder %s25, 1
      %p85 = por %p83, %p84
      %p86 = scmp.ne.s32.totalorder %s77, %s78
      %p87 = scmp.eq.s32.totalorder %s25, 0
      %p88 = por %p86, %p87
      %p89 = scmp.ne.s32.totalorder %s77, %s78
      %p90 = scmp.eq.s32.totalorder %s26, 1
      %p91 = por %p89, %p90
      %p93 = scmp.ne.s32.totalorder %s78, %s92
      %p94 = scmp.eq.s32.totalorder %s26, 0
      %p95 = por %p93, %p94
      %s97 = sadd.s32 %s96, 1
      %p100 = scmp.eq.s32.totalorder %s20, 1
      %p101 = scmp.ne.s32.totalorder %s96, %s98
      %p102 = scmp.eq.s32.totalorder %s20, 0
      %p103 = por %p101, %p102
      %p104 = scmp.ne.s32.totalorder %s96, %s98
      %p105 = scmp.eq.s32.totalorder %s25, 1
      %p106 = por %p104, %p105
      %p107 = scmp.ne.s32.totalorder %s98, %s99
      %p108 = scmp.eq.s32.totalorder %s25, 0
      %p109 = por %p107, %p108
      %p110 = scmp.ne.s32.totalorder %s98, %s99
      %p111 = scmp.eq.s32.totalorder %s26, 1
      %p112 = por %p110, %p111
      %p114 = scmp.ne.s32.totalorder %s99, %s113
      %p115 = scmp.eq.s32.totalorder %s26, 0
      %p116 = por %p114, %p115
      %s118 = sadd.s32 %s117, 1
      %p121 = scmp.eq.s32.totalorder %s20, 1
      %p122 = scmp.ne.s32.totalorder %s117, %s119
      %p123 = scmp.eq.s32.totalorder %s20, 0
      %p124 = por %p122, %p123
      %p125 = scmp.ne.s32.totalorder %s117, %s119
      %p126 = scmp.eq.s32.totalorder %s25, 1
      %p127 = por %p125, %p126
      %p128 = scmp.ne.s32.totalorder %s119, %s120
      %p129 = scmp.eq.s32.totalorder %s25, 0
      %p130 = por %p128, %p129
      %p131 = scmp.ne.s32.totalorder %s119, %s120
      %p132 = scmp.eq.s32.totalorder %s26, 1
      %p133 = por %p131, %p132
      %p135 = scmp.ne.s32.totalorder %s120, %s134
      %p136 = scmp.eq.s32.totalorder %s26, 0
      %p137 = por %p135, %p136
      %s139 = sadd.s32 %s138, 1
      %p142 = scmp.eq.s32.totalorder %s20, 1
      %p143 = scmp.ne.s32.totalorder %s138, %s140
      %p144 = scmp.eq.s32.totalorder %s20, 0
      %p145 = por %p143, %p144
      %p146 = scmp.ne.s32.totalorder %s138, %s140
      %p147 = scmp.eq.s32.totalorder %s25, 1
      %p148 = por %p146, %p147
      %p149 = scmp.ne.s32.totalorder %s140, %s141
      %p150 = scmp.eq.s32.totalorder %s25, 0
      %p151 = por %p149, %p150
      %p152 = scmp.ne.s32.totalorder %s140, %s141
      %p153 = scmp.eq.s32.totalorder %s26, 1
      %p154 = por %p152, %p153
      %p156 = scmp.ne.s32.totalorder %s141, %s155
      %p157 = scmp.eq.s32.totalorder %s26, 0
      %p158 = por %p156, %p157
      %s160 = sadd.s32 %s159, 1
      %p163 = scmp.eq.s32.totalorder %s20, 1
      %p164 = scmp.ne.s32.totalorder %s159, %s161
      %p165 = scmp.eq.s32.totalorder %s20, 0
      %p166 = por %p164, %p165
      %p167 = scmp.ne.s32.totalorder %s159, %s161
      %p168 = scmp.eq.s32.totalorder %s25, 1
      %p169 = por %p167, %p168
      %p170 = scmp.ne.s32.totalorder %s161, %s162
      %p171 = scmp.eq.s32.totalorder %s25, 0
      %p172 = por %p170, %p171
      %p173 = scmp.ne.s32.totalorder %s161, %s162
      %p174 = scmp.eq.s32.totalorder %s26, 1
      %p175 = por %p173, %p174
      %p177 = scmp.ne.s32.totalorder %s162, %s176
      %p178 = scmp.eq.s32.totalorder %s26, 0
      %p179 = por %p177, %p178
      %s181 = sadd.s32 %s180, 1
      %p184 = scmp.eq.s32.totalorder %s20, 1
      %p185 = scmp.ne.s32.totalorder %s180, %s182
      %p186 = scmp.eq.s32.totalorder %s20, 0
      %p187 = por %p185, %p186
      %p188 = scmp.ne.s32.totalorder %s180, %s182
      %p189 = scmp.eq.s32.totalorder %s25, 1
      %p190 = por %p188, %p189
      %p191 = scmp.ne.s32.totalorder %s182, %s183
      %p192 = scmp.eq.s32.totalorder %s25, 0
      %p193 = por %p191, %p192
      %p194 = scmp.ne.s32.totalorder %s182, %s183
      %p195 = scmp.eq.s32.totalorder %s26, 1
      %p196 = por %p194, %p195
      %p198 = scmp.ne.s32.totalorder %s183, %s197
      %p199 = scmp.eq.s32.totalorder %s26, 0
      %p200 = por %p198, %p199
      %s202 = sadd.s32 %s201, 1
      %p205 = scmp.eq.s32.totalorder %s20, 1
      %p206 = scmp.ne.s32.totalorder %s201, %s203
      %p207 = scmp.eq.s32.totalorder %s20, 0
      %p208 = por %p206, %p207
      %p209 = scmp.ne.s32.totalorder %s201, %s203
      %p210 = scmp.eq.s32.totalorder %s25, 1
      %p211 = por %p209, %p210
      %p212 = scmp.ne.s32.totalorder %s203, %s204
      %p213 = scmp.eq.s32.totalorder %s25, 0
      %p214 = por %p212, %p213
      %p215 = scmp.ne.s32.totalorder %s203, %s204
      %p216 = scmp.eq.s32.totalorder %s26, 1
      %p217 = por %p215, %p216
      %p219 = scmp.ne.s32.totalorder %s204, %s218
      %p220 = scmp.eq.s32.totalorder %s26, 0
      %p221 = por %p219, %p220
      %s223 = sadd.s32 %s222, 1
      %p226 = scmp.eq.s32.totalorder %s20, 1
      %p227 = scmp.ne.s32.totalorder %s222, %s224
      %p228 = scmp.eq.s32.totalorder %s20, 0
      %p229 = por %p227, %p228
      %p230 = scmp.ne.s32.totalorder %s222, %s224
      %p231 = scmp.eq.s32.totalorder %s25, 1
      %p232 = por %p230, %p231
      %p233 = scmp.ne.s32.totalorder %s224, %s225
      %p234 = scmp.eq.s32.totalorder %s25, 0
      %p235 = por %p233, %p234
      %p236 = scmp.ne.s32.totalorder %s224, %s225
      %p237 = scmp.eq.s32.totalorder %s26, 1
      %p238 = por %p236, %p237
      %p240 = scmp.ne.s32.totalorder %s225, %s239
      %p241 = scmp.eq.s32.totalorder %s26, 0
      %p242 = por %p240, %p241
      %s244 = sadd.s32 %s243, 1
      %p247 = scmp.eq.s32.totalorder %s20, 1
      %p248 = scmp.ne.s32.totalorder %s243, %s245
      %p249 = scmp.eq.s32.totalorder %s20, 0
      %p250 = por %p248, %p249
      %p251 = scmp.ne.s32.totalorder %s243, %s245
      %p252 = scmp.eq.s32.totalorder %s25, 1
      %p253 = por %p251, %p252
      %p254 = scmp.ne.s32.totalorder %s245, %s246
      %p255 = scmp.eq.s32.totalorder %s25, 0
      %p256 = por %p254, %p255
      %p257 = scmp.ne.s32.totalorder %s245, %s246
      %p258 = scmp.eq.s32.totalorder %s26, 1
      %p259 = por %p257, %p258
      %p261 = scmp.ne.s32.totalorder %s246, %s260
      %p262 = scmp.eq.s32.totalorder %s26, 0
      %p263 = por %p261, %p262
      %s264 = ssub.s32 %s20, %s27
      %p265 = scmp.eq.s32.totalorder %s264, 0
      %s267 = sadd.s32 %s266, 1
      %s268 = scalar_select %p265, %s266, %s267
      %p271 = pneg %p265
      %p272 = scmp.eq.s32.totalorder %s20, 1
      %p273 = por %p271, %p272
      %p274 = scmp.ne.s32.totalorder %s266, %s269
      %p275 = scmp.eq.s32.totalorder %s20, 0
      %p276 = por %p274, %p275
      %p277 = scmp.ne.s32.totalorder %s266, %s269
      %p278 = scmp.eq.s32.totalorder %s25, 1
      %p279 = por %p277, %p278
      %p280 = scmp.ne.s32.totalorder %s269, %s270
      %p281 = scmp.eq.s32.totalorder %s25, 0
      %p282 = por %p280, %p281
      %p283 = scmp.ne.s32.totalorder %s269, %s270
      %p284 = scmp.eq.s32.totalorder %s26, 1
      %p285 = por %p283, %p284
      %p287 = scmp.ne.s32.totalorder %s270, %s286
      %p288 = scmp.eq.s32.totalorder %s26, 0
      %p289 = por %p287, %p288
      %p290 = scmp.le.s32.totalorder 1, %s20
      %p291 = scmp.lt.s32.totalorder %s20, 3
      %p292 = pnand %p290, %p291
      %p293 = pneg %p292
      // Predicated region
      $region9: #{_encoder_impl.1} parent=5 // pred_check
        _
      $region10: #{_encoder_impl.1} parent=5 // pred_check_branch
        %295 = sbr.rel (%p292) target = $region12
      $region11: #{_encoder_impl.1} parent=5 // pred_region
        %s296 = ssub.s32 %s20, 1
        // Predicated region
        $region13: #{_encoder_impl.1} parent=11 // pred_check
          %p297 = pneg %p67
        $region14: #{_encoder_impl.1} parent=11 // pred_check_branch
          %299 = sbr.rel (%p297) target = $region16
        $region15: #{_encoder_impl.1} parent=11 // pred_region
          _
        $region16: #{_encoder_impl.1} parent=11 // pred_fallthru
          _
        // Predicated region
        $region17: #{_encoder_impl.1} parent=11 // pred_check
          %p300 = pneg %p88
        $region18: #{_encoder_impl.1} parent=11 // pred_check_branch
          %302 = sbr.rel (%p300) target = $region20
        $region19: #{_encoder_impl.1} parent=11 // pred_region
          _
        $region20: #{_encoder_impl.1} parent=11 // pred_fallthru
          _
        // Predicated region
        $region21: #{_encoder_impl.1} parent=11 // pred_check
          %p303 = pneg %p109
        $region22: #{_encoder_impl.1} parent=11 // pred_check_branch
          %305 = sbr.rel (%p303) target = $region24
        $region23: #{_encoder_impl.1} parent=11 // pred_region
          _
        $region24: #{_encoder_impl.1} parent=11 // pred_fallthru
          _
        // Predicated region
        $region25: #{_encoder_impl.1} parent=11 // pred_check
          %p306 = pneg %p130
        $region26: #{_encoder_impl.1} parent=11 // pred_check_branch
          %308 = sbr.rel (%p306) target = $region28
        $region27: #{_encoder_impl.1} parent=11 // pred_region
          _
        $region28: #{_encoder_impl.1} parent=11 // pred_fallthru
          _
        // Predicated region
        $region29: #{_encoder_impl.1} parent=11 // pred_check
          %p309 = pneg %p151
        $region30: #{_encoder_impl.1} parent=11 // pred_check_branch
          %311 = sbr.rel (%p309) target = $region32
        $region31: #{_encoder_impl.1} parent=11 // pred_region
          _
        $region32: #{_encoder_impl.1} parent=11 // pred_fallthru
          _
        // Predicated region
        $region33: #{_encoder_impl.1} parent=11 // pred_check
          %p312 = pneg %p172
        $region34: #{_encoder_impl.1} parent=11 // pred_check_branch
          %314 = sbr.rel (%p312) target = $region36
        $region35: #{_encoder_impl.1} parent=11 // pred_region
          _
        $region36: #{_encoder_impl.1} parent=11 // pred_fallthru
          _
        // Predicated region
        $region37: #{_encoder_impl.1} parent=11 // pred_check
          %p315 = pneg %p193
        $region38: #{_encoder_impl.1} parent=11 // pred_check_branch
          %317 = sbr.rel (%p315) target = $region40
        $region39: #{_encoder_impl.1} parent=11 // pred_region
          _
        $region40: #{_encoder_impl.1} parent=11 // pred_fallthru
          _
        // Predicated region
        $region41: #{_encoder_impl.1} parent=11 // pred_check
          %p318 = pneg %p214
        $region42: #{_encoder_impl.1} parent=11 // pred_check_branch
          %320 = sbr.rel (%p318) target = $region44
        $region43: #{_encoder_impl.1} parent=11 // pred_region
          _
        $region44: #{_encoder_impl.1} parent=11 // pred_fallthru
          _
        // Predicated region
        $region45: #{_encoder_impl.1} parent=11 // pred_check
          %p321 = pneg %p235
        $region46: #{_encoder_impl.1} parent=11 // pred_check_branch
          %323 = sbr.rel (%p321) target = $region48
        $region47: #{_encoder_impl.1} parent=11 // pred_region
          _
        $region48: #{_encoder_impl.1} parent=11 // pred_fallthru
          _
        // Predicated region
        $region49: #{_encoder_impl.1} parent=11 // pred_check
          %p324 = pneg %p256
        $region50: #{_encoder_impl.1} parent=11 // pred_check_branch
          %326 = sbr.rel (%p324) target = $region52
        $region51: #{_encoder_impl.1} parent=11 // pred_region
          _
        $region52: #{_encoder_impl.1} parent=11 // pred_fallthru
          _
      $region12: #{_encoder_impl.1} parent=5 // pred_fallthru
        _
      %p327 = scmp.lt.s32.totalorder %s20, 2
      // Predicated region
      $region53: #{_encoder_impl.1} parent=5 // pred_check
        %p328 = pneg %p327
      $region54: #{_encoder_impl.1} parent=5 // pred_check_branch
        %330 = sbr.rel (%p328) target = $region56
      $region55: #{_encoder_impl.1} parent=5 // pred_region
        // Predicated region
        $region57: #{_encoder_impl.1} parent=55 // pred_check
          %p331 = pneg %p40
        $region58: #{_encoder_impl.1} parent=55 // pred_check_branch
          %333 = sbr.rel (%p331) target = $region60
        $region59: #{_encoder_impl.1} parent=55 // pred_region
          %p334 = scmp.lt.s32.totalorder %s20, 1
          %s335 = scalar_select %p334, %s20, 1
          %s336 = smul.addr %s335, 3
          %s337 = smul.addr %s336, 8
          %s338 = scalar_lea.vmem %s0, %s337
        $region60: #{_encoder_impl.1} parent=55 // pred_fallthru
          _
      $region56: #{_encoder_impl.1} parent=5 // pred_fallthru
        _
      %p339 = scmp.le.s32.totalorder 1, %s20
      %p340 = scmp.lt.s32.totalorder %s20, 3
      %p341 = pnand %p339, %p340
      %p342 = pneg %p341
      // Predicated region
      $region61: #{_encoder_impl.1} parent=5 // pred_check
        _
      $region62: #{_encoder_impl.1} parent=5 // pred_check_branch
        %344 = sbr.rel (%p341) target = $region64
      $region63: #{_encoder_impl.1} parent=5 // pred_region
        %s345 = ssub.s32 %s20, 1
        %p346 = scmp.lt.s32.totalorder %s25, 1
        %s347 = scalar_select %p346, %s25, 1
        %s348 = smul.addr %s347, 3
        %s349 = smul.addr %s348, 8
        %s350 = scalar_lea.vmem %s0, %s349
        %p351 = pneg %p46
        %p352 = pneg %p43
        %p353 = pneg %p67
        %p354 = pneg %p64
        %p355 = pneg %p88
        %p356 = pneg %p85
        %p357 = pneg %p109
        %p358 = pneg %p106
        %p359 = pneg %p130
        %p360 = pneg %p127
        %p361 = pneg %p151
        %p362 = pneg %p148
        %p363 = pneg %p172
        %p364 = pneg %p169
        %p365 = pneg %p193
        %p366 = pneg %p190
        %p367 = pneg %p214
        %p368 = pneg %p211
        %p369 = pneg %p235
        %p370 = pneg %p232
        %p371 = pneg %p256
        %p372 = pneg %p253
        %p373 = pneg %p282
        %p374 = pneg %p279
        %s375 = sand.u32 %s269, 1
        %s376 = scalar_lea.sflag [#allocation3], %s375
        %s377 = sand.u32 %s269, 1
        %s378 = smul.addr %s377, 8
        %s379 = scalar_lea.vmem [#allocation2], %s378
        %p380 = scmp.lt.s32.totalorder %s25, 1
        %s381 = scalar_select %p380, %s25, 1
        %s382 = smul.addr %s381, 3
        %s383 = smul.addr %s382, 8
        %s384 = scalar_lea.vmem %s0, %s383
        %v385 = vld [vmem:[%s384 + $0x8] sm:$0xff]
        %vm386 = vcmask 261120
        %v387 = vsel %vm386, %v385, 0.0
        %388 = vadd.xlane.f32.xlu0 %v387
        %v389 = vpop.xlane.xlu0 %388
        %v390 = vrcp.pop 32.0
        %v391 = vmul.f32 %v389, %v390
        %v392 = vld [vmem:[%s1] sm:$0xff]
        %vm393 = vcmask 64512
        %v395 = vsel %vm393, %v392, 0
        %397 = vmatprep.subr.mxu0 0.0
        %398 = vmatpush1.msra.mxu0 %v391
        %399 = vmatprep.subr.mxu0 0.0
        %400 = vmatpush1.msra.mxu0 0.0
        %401 = vmatprep.subr.mxu0 0.0
        %402 = vmatpush1.msra.mxu0 0.0
        %403 = vmatprep.subr.mxu0 0.0
        %404 = vmatpush1.msra.mxu0 0.0
        %405 = vmatprep.subr.mxu0 0.0
        %406 = vmatpush1.msra.mxu0 0.0
        %407 = vmatprep.subr.mxu0 0.0
        %408 = vmatpush1.msra.mxu0 0.0
        %409 = vmatprep.subr.mxu0 0.0
        %410 = vmatpush1.msra.mxu0 0.0
        %411 = vmatprep.subr.mxu0 0.0
        %412 = vmatpush1.msra.mxu0 0.0
        %413 = vmatprep.subr.mxu0 0.0
        %414 = vmatpush1.msra.mxu0 0.0
        %415 = vmatprep.subr.mxu0 0.0
        %416 = vmatpush1.msra.mxu0 0.0
        %417 = vmatprep.subr.mxu0 0.0
        %418 = vmatpush1.msra.mxu0 0.0
        %419 = vmatprep.subr.mxu0 0.0
        %420 = vmatpush1.msra.mxu0 0.0
        %421 = vmatprep.subr.mxu0 0.0
        %422 = vmatpush1.msra.mxu0 0.0
        %423 = vmatprep.subr.mxu0 0.0
        %424 = vmatpush1.msra.mxu0 0.0
        %425 = vmatprep.subr.mxu0 0.0
        %426 = vmatpush1.msra.mxu0 0.0
        %427 = vmatprep.subr.mxu0 0.0
        %428 = vmatpush1.msra.mxu0 0.0
        %429 = vmatprep.subr.mxu0 0.0
        %430 = vmatpush1.msra.mxu0 0.0
        %431 = vmatprep.subr.mxu0 0.0
        %432 = vmatpush1.msra.mxu0 0.0
        %433 = vmatprep.subr.mxu0 0.0
        %434 = vmatpush1.msra.mxu0 0.0
        %435 = vmatprep.subr.mxu0 0.0
        %436 = vmatpush1.msra.mxu0 0.0
        %437 = vmatprep.subr.mxu0 0.0
        %438 = vmatpush1.msra.mxu0 0.0
        %439 = vmatprep.subr.mxu0 0.0
        %440 = vmatpush1.msra.mxu0 0.0
        %441 = vmatprep.subr.mxu0 0.0
        %442 = vmatpush1.msra.mxu0 0.0
        %443 = vmatprep.subr.mxu0 0.0
        %444 = vmatpush1.msra.mxu0 0.0
        %445 = vmatprep.subr.mxu0 0.0
        %446 = vmatpush1.msra.mxu0 0.0
        %447 = vmatprep.subr.mxu0 0.0
        %448 = vmatpush1.msra.mxu0 0.0
        %449 = vmatprep.subr.mxu0 0.0
        %450 = vmatpush1.msra.mxu0 0.0
        %451 = vmatprep.subr.mxu0 0.0
        %452 = vmatpush1.msra.mxu0 0.0
        %453 = vmatprep.subr.mxu0 0.0
        %454 = vmatpush1.msra.mxu0 0.0
        %455 = vmatprep.subr.mxu0 0.0
        %456 = vmatpush1.msra.mxu0 0.0
        %457 = vmatprep.subr.mxu0 0.0
        %458 = vmatpush1.msra.mxu0 0.0
        %459 = vmatprep.subr.mxu0 0.0
        %460 = vmatpush1.msra.mxu0 0.0
        %461 = vmatprep.mubr.f32.mxu0 0.0
        %462 = vmatmul.mubr.f32.gmra.mrb[0].mxu0 %v395
        %v463 = vpop.f32.mrb[0].mxu0
        %v464 = vadd.f32 0.0, %v463
        %v465 = vpop.f32.mrb[0].mxu0
        %466 = vdwg.mxu0
        %v467 = vadd.f32 %v385, %v464
        %v468 = vld [vmem:[%s2] sm:$0xff]
        %v469 = vld [vmem:[%s2 + $0x8] sm:$0xff]
        %v470 = vld [vmem:[%s2 + $0x10] sm:$0xff]
        %v471 = vld [vmem:[%s2 + $0x18] sm:$0xff]
        %v472 = vld [vmem:[%s384] sm:$0xff]
        %s473 = scalar_lea.vmem %s2, 32
        %v474 = vld [vmem:[%s473] sm:$0xff]
        %v475 = vld [vmem:[%s473 + $0x8] sm:$0xff]
        %v476 = vld [vmem:[%s473 + $0x10] sm:$0xff]
        %v477 = vld [vmem:[%s473 + $0x18] sm:$0xff]
        %v479 = vsel %vm386, %v472, 0
        %481 = vmatprep.subr.mxu0 0.0
        %482 = vmatpush1.msra.mxu0 %v474
        %483 = vmatprep.subr.mxu0 0.0
        %484 = vmatpush1.msra.mxu0 %v475
        %485 = vmatprep.subr.mxu0 0.0
        %486 = vmatpush1.msra.mxu0 %v476
        %487 = vmatprep.subr.mxu0 0.0
        %488 = vmatpush1.msra.mxu0 %v477
        %489 = vmatprep.subr.mxu0 0.0
        %490 = vmatpush1.msra.mxu0 0.0
        %491 = vmatprep.subr.mxu0 0.0
        %492 = vmatpush1.msra.mxu0 0.0
        %493 = vmatprep.subr.mxu0 0.0
        %494 = vmatpush1.msra.mxu0 0.0
        %495 = vmatprep.subr.mxu0 0.0
        %496 = vmatpush1.msra.mxu0 0.0
        %497 = vmatprep.subr.mxu0 0.0
        %498 = vmatpush1.msra.mxu0 0.0
        %499 = vmatprep.subr.mxu0 0.0
        %500 = vmatpush1.msra.mxu0 0.0
        %501 = vmatprep.subr.mxu0 0.0
        %502 = vmatpush1.msra.mxu0 0.0
        %503 = vmatprep.subr.mxu0 0.0
        %504 = vmatpush1.msra.mxu0 0.0
        %505 = vmatprep.subr.mxu0 0.0
        %506 = vmatpush1.msra.mxu0 0.0
        %507 = vmatprep.subr.mxu0 0.0
        %508 = vmatpush1.msra.mxu0 0.0
        %509 = vmatprep.subr.mxu0 0.0
        %510 = vmatpush1.msra.mxu0 0.0
        %511 = vmatprep.subr.mxu0 0.0
        %512 = vmatpush1.msra.mxu0 0.0
        %513 = vmatprep.subr.mxu0 0.0
        %514 = vmatpush1.msra.mxu0 0.0
        %515 = vmatprep.subr.mxu0 0.0
        %516 = vmatpush1.msra.mxu0 0.0
        %517 = vmatprep.subr.mxu0 0.0
        %518 = vmatpush1.msra.mxu0 0.0
        %519 = vmatprep.subr.mxu0 0.0
        %520 = vmatpush1.msra.mxu0 0.0
        %521 = vmatprep.subr.mxu0 0.0
        %522 = vmatpush1.msra.mxu0 0.0
        %523 = vmatprep.subr.mxu0 0.0
        %524 = vmatpush1.msra.mxu0 0.0
        %525 = vmatprep.subr.mxu0 0.0
        %526 = vmatpush1.msra.mxu0 0.0
        %527 = vmatprep.subr.mxu0 0.0
        %528 = vmatpush1.msra.mxu0 0.0
        %529 = vmatprep.subr.mxu0 0.0
        %530 = vmatpush1.msra.mxu0 0.0
        %531 = vmatprep.subr.mxu0 0.0
        %532 = vmatpush1.msra.mxu0 0.0
        %533 = vmatprep.subr.mxu0 0.0
        %534 = vmatpush1.msra.mxu0 0.0
        %535 = vmatprep.subr.mxu0 0.0
        %536 = vmatpush1.msra.mxu0 0.0
        %537 = vmatprep.subr.mxu0 0.0
        %538 = vmatpush1.msra.mxu0 0.0
        %539 = vmatprep.subr.mxu0 0.0
        %540 = vmatpush1.msra.mxu0 0.0
        %541 = vmatprep.subr.mxu0 0.0
        %542 = vmatpush1.msra.mxu0 0.0
        %543 = vmatprep.subr.mxu0 0.0
        %544 = vmatpush1.msra.mxu0 0.0
        %545 = vmatprep.mubr.f32.mxu0 0.0
        %546 = vmatmul.mubr.f32.gmra.mrb[0].mxu0 %v479
        %v547 = vpop.f32.mrb[0].mxu0
        %v548 = vadd.f32 0.0, %v547
        %v549 = vpop.f32.mrb[0].mxu0
        %550 = vdwg.mxu0
        %v552 = vsel %vm386, %v385, 0
        %554 = vmatprep.subr.mxu0 0.0
        %555 = vmatpush1.msra.mxu0 %v468
        %556 = vmatprep.subr.mxu0 0.0
        %557 = vmatpush1.msra.mxu0 %v469
        %558 = vmatprep.subr.mxu0 0.0
        %559 = vmatpush1.msra.mxu0 %v470
        %560 = vmatprep.subr.mxu0 0.0
        %561 = vmatpush1.msra.mxu0 %v471
        %562 = vmatprep.subr.mxu0 0.0
        %563 = vmatpush1.msra.mxu0 0.0
        %564 = vmatprep.subr.mxu0 0.0
        %565 = vmatpush1.msra.mxu0 0.0
        %566 = vmatprep.subr.mxu0 0.0
        %567 = vmatpush1.msra.mxu0 0.0
        %568 = vmatprep.subr.mxu0 0.0
        %569 = vmatpush1.msra.mxu0 0.0
        %570 = vmatprep.subr.mxu0 0.0
        %571 = vmatpush1.msra.mxu0 0.0
        %572 = vmatprep.subr.mxu0 0.0
        %573 = vmatpush1.msra.mxu0 0.0
        %574 = vmatprep.subr.mxu0 0.0
        %575 = vmatpush1.msra.mxu0 0.0
        %576 = vmatprep.subr.mxu0 0.0
        %577 = vmatpush1.msra.mxu0 0.0
        %578 = vmatprep.subr.mxu0 0.0
        %579 = vmatpush1.msra.mxu0 0.0
        %580 = vmatprep.subr.mxu0 0.0
        %581 = vmatpush1.msra.mxu0 0.0
        %582 = vmatprep.subr.mxu0 0.0
        %583 = vmatpush1.msra.mxu0 0.0
        %584 = vmatprep.subr.mxu0 0.0
        %585 = vmatpush1.msra.mxu0 0.0
        %586 = vmatprep.subr.mxu0 0.0
        %587 = vmatpush1.msra.mxu0 0.0
        %588 = vmatprep.subr.mxu0 0.0
        %589 = vmatpush1.msra.mxu0 0.0
        %590 = vmatprep.subr.mxu0 0.0
        %591 = vmatpush1.msra.mxu0 0.0
        %592 = vmatprep.subr.mxu0 0.0
        %593 = vmatpush1.msra.mxu0 0.0
        %594 = vmatprep.subr.mxu0 0.0
        %595 = vmatpush1.msra.mxu0 0.0
        %596 = vmatprep.subr.mxu0 0.0
        %597 = vmatpush1.msra.mxu0 0.0
        %598 = vmatprep.subr.mxu0 0.0
        %599 = vmatpush1.msra.mxu0 0.0
        %600 = vmatprep.subr.mxu0 0.0
        %601 = vmatpush1.msra.mxu0 0.0
        %602 = vmatprep.subr.mxu0 0.0
        %603 = vmatpush1.msra.mxu0 0.0
        %604 = vmatprep.subr.mxu0 0.0
        %605 = vmatpush1.msra.mxu0 0.0
        %606 = vmatprep.subr.mxu0 0.0
        %607 = vmatpush1.msra.mxu0 0.0
        %608 = vmatprep.subr.mxu0 0.0
        %609 = vmatpush1.msra.mxu0 0.0
        %610 = vmatprep.subr.mxu0 0.0
        %611 = vmatpush1.msra.mxu0 0.0
        %612 = vmatprep.subr.mxu0 0.0
        %613 = vmatpush1.msra.mxu0 0.0
        %614 = vmatprep.subr.mxu0 0.0
        %615 = vmatpush1.msra.mxu0 0.0
        %616 = vmatprep.subr.mxu0 0.0
        %617 = vmatpush1.msra.mxu0 0.0
        %618 = vmatprep.mubr.f32.mxu0 0.0
        %619 = vmatmul.mubr.f32.gmra.mrb[0].mxu0 %v552
        %v620 = vpop.f32.mrb[0].mxu0
        %v621 = vadd.f32 %v548, %v620
        %v622 = vpop.f32.mrb[0].mxu0
        %623 = vdwg.mxu0
        %v624 = vld [vmem:[%s384 + $0x4] sm:$0xff]
        %s625 = scalar_lea.vmem %s2, 64
        %v626 = vld [vmem:[%s625] sm:$0xff]
        %v627 = vld [vmem:[%s625 + $0x8] sm:$0xff]
        %v628 = vld [vmem:[%s625 + $0x10] sm:$0xff]
        %v629 = vld [vmem:[%s625 + $0x18] sm:$0xff]
        %v631 = vsel %vm386, %v624, 0
        %633 = vmatprep.subr.mxu0 0.0
        %634 = vmatpush1.msra.mxu0 %v626
        %635 = vmatprep.subr.mxu0 0.0
        %636 = vmatpush1.msra.mxu0 %v627
        %637 = vmatprep.subr.mxu0 0.0
        %638 = vmatpush1.msra.mxu0 %v628
        %639 = vmatprep.subr.mxu0 0.0
        %640 = vmatpush1.msra.mxu0 %v629
        %641 = vmatprep.subr.mxu0 0.0
        %642 = vmatpush1.msra.mxu0 0.0
        %643 = vmatprep.subr.mxu0 0.0
        %644 = vmatpush1.msra.mxu0 0.0
        %645 = vmatprep.subr.mxu0 0.0
        %646 = vmatpush1.msra.mxu0 0.0
        %647 = vmatprep.subr.mxu0 0.0
        %648 = vmatpush1.msra.mxu0 0.0
        %649 = vmatprep.subr.mxu0 0.0
        %650 = vmatpush1.msra.mxu0 0.0
        %651 = vmatprep.subr.mxu0 0.0
        %652 = vmatpush1.msra.mxu0 0.0
        %653 = vmatprep.subr.mxu0 0.0
        %654 = vmatpush1.msra.mxu0 0.0
        %655 = vmatprep.subr.mxu0 0.0
        %656 = vmatpush1.msra.mxu0 0.0
        %657 = vmatprep.subr.mxu0 0.0
        %658 = vmatpush1.msra.mxu0 0.0
        %659 = vmatprep.subr.mxu0 0.0
        %660 = vmatpush1.msra.mxu0 0.0
        %661 = vmatprep.subr.mxu0 0.0
        %662 = vmatpush1.msra.mxu0 0.0
        %663 = vmatprep.subr.mxu0 0.0
        %664 = vmatpush1.msra.mxu0 0.0
        %665 = vmatprep.subr.mxu0 0.0
        %666 = vmatpush1.msra.mxu0 0.0
        %667 = vmatprep.subr.mxu0 0.0
        %668 = vmatpush1.msra.mxu0 0.0
        %669 = vmatprep.subr.mxu0 0.0
        %670 = vmatpush1.msra.mxu0 0.0
        %671 = vmatprep.subr.mxu0 0.0
        %672 = vmatpush1.msra.mxu0 0.0
        %673 = vmatprep.subr.mxu0 0.0
        %674 = vmatpush1.msra.mxu0 0.0
        %675 = vmatprep.subr.mxu0 0.0
        %676 = vmatpush1.msra.mxu0 0.0
        %677 = vmatprep.subr.mxu0 0.0
        %678 = vmatpush1.msra.mxu0 0.0
        %679 = vmatprep.subr.mxu0 0.0
        %680 = vmatpush1.msra.mxu0 0.0
        %681 = vmatprep.subr.mxu0 0.0
        %682 = vmatpush1.msra.mxu0 0.0
        %683 = vmatprep.subr.mxu0 0.0
        %684 = vmatpush1.msra.mxu0 0.0
        %685 = vmatprep.subr.mxu0 0.0
        %686 = vmatpush1.msra.mxu0 0.0
        %687 = vmatprep.subr.mxu0 0.0
        %688 = vmatpush1.msra.mxu0 0.0
        %689 = vmatprep.subr.mxu0 0.0
        %690 = vmatpush1.msra.mxu0 0.0
        %691 = vmatprep.subr.mxu0 0.0
        %692 = vmatpush1.msra.mxu0 0.0
        %693 = vmatprep.subr.mxu0 0.0
        %694 = vmatpush1.msra.mxu0 0.0
        %695 = vmatprep.subr.mxu0 0.0
        %696 = vmatpush1.msra.mxu0 0.0
        %697 = vmatprep.mubr.f32.mxu0 0.0
        %698 = vmatmul.mubr.f32.gmra.mrb[0].mxu0 %v631
        %v699 = vpop.f32.mrb[0].mxu0
        %v700 = vadd.f32 0.0, %v699
        %v701 = vpop.f32.mrb[0].mxu0
        %702 = vdwg.mxu0
        %v703 = vadd.f32 %v621, %v700
        %v704 = vld [vmem:[%s384 + $0x6] sm:$0xff]
        %s705 = scalar_lea.vmem %s2, 96
        %v706 = vld [vmem:[%s705] sm:$0xff]
        %v707 = vld [vmem:[%s705 + $0x8] sm:$0xff]
        %v708 = vld [vmem:[%s705 + $0x10] sm:$0xff]
        %v709 = vld [vmem:[%s705 + $0x18] sm:$0xff]
        %v711 = vsel %vm386, %v704, 0
        %713 = vmatprep.subr.mxu0 0.0
        %714 = vmatpush1.msra.mxu0 %v706
        %715 = vmatprep.subr.mxu0 0.0
        %716 = vmatpush1.msra.mxu0 %v707
        %717 = vmatprep.subr.mxu0 0.0
        %718 = vmatpush1.msra.mxu0 %v708
        %719 = vmatprep.subr.mxu0 0.0
        %720 = vmatpush1.msra.mxu0 %v709
        %721 = vmatprep.subr.mxu0 0.0
        %722 = vmatpush1.msra.mxu0 0.0
        %723 = vmatprep.subr.mxu0 0.0
        %724 = vmatpush1.msra.mxu0 0.0
        %725 = vmatprep.subr.mxu0 0.0
        %726 = vmatpush1.msra.mxu0 0.0
        %727 = vmatprep.subr.mxu0 0.0
        %728 = vmatpush1.msra.mxu0 0.0
        %729 = vmatprep.subr.mxu0 0.0
        %730 = vmatpush1.msra.mxu0 0.0
        %731 = vmatprep.subr.mxu0 0.0
        %732 = vmatpush1.msra.mxu0 0.0
        %733 = vmatprep.subr.mxu0 0.0
        %734 = vmatpush1.msra.mxu0 0.0
        %735 = vmatprep.subr.mxu0 0.0
        %736 = vmatpush1.msra.mxu0 0.0
        %737 = vmatprep.subr.mxu0 0.0
        %738 = vmatpush1.msra.mxu0 0.0
        %739 = vmatprep.subr.mxu0 0.0
        %740 = vmatpush1.msra.mxu0 0.0
        %741 = vmatprep.subr.mxu0 0.0
        %742 = vmatpush1.msra.mxu0 0.0
        %743 = vmatprep.subr.mxu0 0.0
        %744 = vmatpush1.msra.mxu0 0.0
        %745 = vmatprep.subr.mxu0 0.0
        %746 = vmatpush1.msra.mxu0 0.0
        %747 = vmatprep.subr.mxu0 0.0
        %748 = vmatpush1.msra.mxu0 0.0
        %749 = vmatprep.subr.mxu0 0.0
        %750 = vmatpush1.msra.mxu0 0.0
        %751 = vmatprep.subr.mxu0 0.0
        %752 = vmatpush1.msra.mxu0 0.0
        %753 = vmatprep.subr.mxu0 0.0
        %754 = vmatpush1.msra.mxu0 0.0
        %755 = vmatprep.subr.mxu0 0.0
        %756 = vmatpush1.msra.mxu0 0.0
        %757 = vmatprep.subr.mxu0 0.0
        %758 = vmatpush1.msra.mxu0 0.0
        %759 = vmatprep.subr.mxu0 0.0
        %760 = vmatpush1.msra.mxu0 0.0
        %761 = vmatprep.subr.mxu0 0.0
        %762 = vmatpush1.msra.mxu0 0.0
        %763 = vmatprep.subr.mxu0 0.0
        %764 = vmatpush1.msra.mxu0 0.0
        %765 = vmatprep.subr.mxu0 0.0
        %766 = vmatpush1.msra.mxu0 0.0
        %767 = vmatprep.subr.mxu0 0.0
        %768 = vmatpush1.msra.mxu0 0.0
        %769 = vmatprep.subr.mxu0 0.0
        %770 = vmatpush1.msra.mxu0 0.0
        %771 = vmatprep.subr.mxu0 0.0
        %772 = vmatpush1.msra.mxu0 0.0
        %773 = vmatprep.subr.mxu0 0.0
        %774 = vmatpush1.msra.mxu0 0.0
        %775 = vmatprep.subr.mxu0 0.0
        %776 = vmatpush1.msra.mxu0 0.0
        %777 = vmatprep.mubr.f32.mxu0 0.0
        %778 = vmatmul.mubr.f32.gmra.mrb[0].mxu0 %v711
        %v779 = vpop.f32.mrb[0].mxu0
        %v780 = vadd.f32 0.0, %v779
        %v781 = vpop.f32.mrb[0].mxu0
        %782 = vdwg.mxu0
        %v783 = vadd.f32 %v703, %v780
        %v784 = vld [vmem:[%s384 + $0x7] sm:$0xff]
        %s785 = scalar_lea.vmem %s2, 128
        %v786 = vld [vmem:[%s785] sm:$0xff]
        %v787 = vld [vmem:[%s785 + $0x8] sm:$0xff]
        %v788 = vld [vmem:[%s785 + $0x10] sm:$0xff]
        %v789 = vld [vmem:[%s785 + $0x18] sm:$0xff]
        %v791 = vsel %vm386, %v784, 0
        %793 = vmatprep.subr.mxu0 0.0
        %794 = vmatpush1.msra.mxu0 %v786
        %795 = vmatprep.subr.mxu0 0.0
        %796 = vmatpush1.msra.mxu0 %v787
        %797 = vmatprep.subr.mxu0 0.0
        %798 = vmatpush1.msra.mxu0 %v788
        %799 = vmatprep.subr.mxu0 0.0
        %800 = vmatpush1.msra.mxu0 %v789
        %801 = vmatprep.subr.mxu0 0.0
        %802 = vmatpush1.msra.mxu0 0.0
        %803 = vmatprep.subr.mxu0 0.0
        %804 = vmatpush1.msra.mxu0 0.0
        %805 = vmatprep.subr.mxu0 0.0
        %806 = vmatpush1.msra.mxu0 0.0
        %807 = vmatprep.subr.mxu0 0.0
        %808 = vmatpush1.msra.mxu0 0.0
        %809 = vmatprep.subr.mxu0 0.0
        %810 = vmatpush1.msra.mxu0 0.0
        %811 = vmatprep.subr.mxu0 0.0
        %812 = vmatpush1.msra.mxu0 0.0
        %813 = vmatprep.subr.mxu0 0.0
        %814 = vmatpush1.msra.mxu0 0.0
        %815 = vmatprep.subr.mxu0 0.0
        %816 = vmatpush1.msra.mxu0 0.0
        %817 = vmatprep.subr.mxu0 0.0
        %818 = vmatpush1.msra.mxu0 0.0
        %819 = vmatprep.subr.mxu0 0.0
        %820 = vmatpush1.msra.mxu0 0.0
        %821 = vmatprep.subr.mxu0 0.0
        %822 = vmatpush1.msra.mxu0 0.0
        %823 = vmatprep.subr.mxu0 0.0
        %824 = vmatpush1.msra.mxu0 0.0
        %825 = vmatprep.subr.mxu0 0.0
        %826 = vmatpush1.msra.mxu0 0.0
        %827 = vmatprep.subr.mxu0 0.0
        %828 = vmatpush1.msra.mxu0 0.0
        %829 = vmatprep.subr.mxu0 0.0
        %830 = vmatpush1.msra.mxu0 0.0
        %831 = vmatprep.subr.mxu0 0.0
        %832 = vmatpush1.msra.mxu0 0.0
        %833 = vmatprep.subr.mxu0 0.0
        %834 = vmatpush1.msra.mxu0 0.0
        %835 = vmatprep.subr.mxu0 0.0
        %836 = vmatpush1.msra.mxu0 0.0
        %837 = vmatprep.subr.mxu0 0.0
        %838 = vmatpush1.msra.mxu0 0.0
        %839 = vmatprep.subr.mxu0 0.0
        %840 = vmatpush1.msra.mxu0 0.0
        %841 = vmatprep.subr.mxu0 0.0
        %842 = vmatpush1.msra.mxu0 0.0
        %843 = vmatprep.subr.mxu0 0.0
        %844 = vmatpush1.msra.mxu0 0.0
        %845 = vmatprep.subr.mxu0 0.0
        %846 = vmatpush1.msra.mxu0 0.0
        %847 = vmatprep.subr.mxu0 0.0
        %848 = vmatpush1.msra.mxu0 0.0
        %849 = vmatprep.subr.mxu0 0.0
        %850 = vmatpush1.msra.mxu0 0.0
        %851 = vmatprep.subr.mxu0 0.0
        %852 = vmatpush1.msra.mxu0 0.0
        %853 = vmatprep.subr.mxu0 0.0
        %854 = vmatpush1.msra.mxu0 0.0
        %855 = vmatprep.subr.mxu0 0.0
        %856 = vmatpush1.msra.mxu0 0.0
        %857 = vmatprep.mubr.f32.mxu0 0.0
        %858 = vmatmul.mubr.f32.gmra.mrb[0].mxu0 %v791
        %v859 = vpop.f32.mrb[0].mxu0
        %v860 = vadd.f32 0.0, %v859
        %v861 = vpop.f32.mrb[0].mxu0
        %862 = vdwg.mxu0
        %v863 = vadd.f32 %v783, %v860
        %v864 = vld [vmem:[%s384 + $0x9] sm:$0xff]
        %s865 = scalar_lea.vmem %s2, 160
        %v866 = vld [vmem:[%s865] sm:$0xff]
        %v867 = vld [vmem:[%s865 + $0x8] sm:$0xff]
        %v868 = vld [vmem:[%s865 + $0x10] sm:$0xff]
        %v869 = vld [vmem:[%s865 + $0x18] sm:$0xff]
        %v871 = vsel %vm386, %v864, 0
        %873 = vmatprep.subr.mxu0 0.0
        %874 = vmatpush1.msra.mxu0 %v866
        %875 = vmatprep.subr.mxu0 0.0
        %876 = vmatpush1.msra.mxu0 %v867
        %877 = vmatprep.subr.mxu0 0.0
        %878 = vmatpush1.msra.mxu0 %v868
        %879 = vmatprep.subr.mxu0 0.0
        %880 = vmatpush1.msra.mxu0 %v869
        %881 = vmatprep.subr.mxu0 0.0
        %882 = vmatpush1.msra.mxu0 0.0
        %883 = vmatprep.subr.mxu0 0.0
        %884 = vmatpush1.msra.mxu0 0.0
        %885 = vmatprep.subr.mxu0 0.0
        %886 = vmatpush1.msra.mxu0 0.0
        %887 = vmatprep.subr.mxu0 0.0
        %888 = vmatpush1.msra.mxu0 0.0
        %889 = vmatprep.subr.mxu0 0.0
        %890 = vmatpush1.msra.mxu0 0.0
        %891 = vmatprep.subr.mxu0 0.0
        %892 = vmatpush1.msra.mxu0 0.0
        %893 = vmatprep.subr.mxu0 0.0
        %894 = vmatpush1.msra.mxu0 0.0
        %895 = vmatprep.subr.mxu0 0.0
        %896 = vmatpush1.msra.mxu0 0.0
        %897 = vmatprep.subr.mxu0 0.0
        %898 = vmatpush1.msra.mxu0 0.0
        %899 = vmatprep.subr.mxu0 0.0
        %900 = vmatpush1.msra.mxu0 0.0
        %901 = vmatprep.subr.mxu0 0.0
        %902 = vmatpush1.msra.mxu0 0.0
        %903 = vmatprep.subr.mxu0 0.0
        %904 = vmatpush1.msra.mxu0 0.0
        %905 = vmatprep.subr.mxu0 0.0
        %906 = vmatpush1.msra.mxu0 0.0
        %907 = vmatprep.subr.mxu0 0.0
        %908 = vmatpush1.msra.mxu0 0.0
        %909 = vmatprep.subr.mxu0 0.0
        %910 = vmatpush1.msra.mxu0 0.0
        %911 = vmatprep.subr.mxu0 0.0
        %912 = vmatpush1.msra.mxu0 0.0
        %913 = vmatprep.subr.mxu0 0.0
        %914 = vmatpush1.msra.mxu0 0.0
        %915 = vmatprep.subr.mxu0 0.0
        %916 = vmatpush1.msra.mxu0 0.0
        %917 = vmatprep.subr.mxu0 0.0
        %918 = vmatpush1.msra.mxu0 0.0
        %919 = vmatprep.subr.mxu0 0.0
        %920 = vmatpush1.msra.mxu0 0.0
        %921 = vmatprep.subr.mxu0 0.0
        %922 = vmatpush1.msra.mxu0 0.0
        %923 = vmatprep.subr.mxu0 0.0
        %924 = vmatpush1.msra.mxu0 0.0
        %925 = vmatprep.subr.mxu0 0.0
        %926 = vmatpush1.msra.mxu0 0.0
        %927 = vmatprep.subr.mxu0 0.0
        %928 = vmatpush1.msra.mxu0 0.0
        %929 = vmatprep.subr.mxu0 0.0
        %930 = vmatpush1.msra.mxu0 0.0
        %931 = vmatprep.subr.mxu0 0.0
        %932 = vmatpush1.msra.mxu0 0.0
        %933 = vmatprep.subr.mxu0 0.0
        %934 = vmatpush1.msra.mxu0 0.0
        %935 = vmatprep.subr.mxu0 0.0
        %936 = vmatpush1.msra.mxu0 0.0
        %937 = vmatprep.mubr.f32.mxu0 0.0
        %938 = vmatmul.mubr.f32.gmra.mrb[0].mxu0 %v871
        %v939 = vpop.f32.mrb[0].mxu0
        %v940 = vadd.f32 0.0, %v939
        %v941 = vpop.f32.mrb[0].mxu0
        %942 = vdwg.mxu0
        %v943 = vadd.f32 %v863, %v940
        %v944 = vld [vmem:[%s384 + $0xa] sm:$0xff]
        %s945 = scalar_lea.vmem %s2, 192
        %v946 = vld [vmem:[%s945] sm:$0xff]
        %v947 = vld [vmem:[%s945 + $0x8] sm:$0xff]
        %v948 = vld [vmem:[%s945 + $0x10] sm:$0xff]
        %v949 = vld [vmem:[%s945 + $0x18] sm:$0xff]
        %v951 = vsel %vm386, %v944, 0
        %953 = vmatprep.subr.mxu0 0.0
        %954 = vmatpush1.msra.mxu0 %v946
        %955 = vmatprep.subr.mxu0 0.0
        %956 = vmatpush1.msra.mxu0 %v947
        %957 = vmatprep.subr.mxu0 0.0
        %958 = vmatpush1.msra.mxu0 %v948
        %959 = vmatprep.subr.mxu0 0.0
        %960 = vmatpush1.msra.mxu0 %v949
        %961 = vmatprep.subr.mxu0 0.0
        %962 = vmatpush1.msra.mxu0 0.0
        %963 = vmatprep.subr.mxu0 0.0
        %964 = vmatpush1.msra.mxu0 0.0
        %965 = vmatprep.subr.mxu0 0.0
        %966 = vmatpush1.msra.mxu0 0.0
        %967 = vmatprep.subr.mxu0 0.0
        %968 = vmatpush1.msra.mxu0 0.0
        %969 = vmatprep.subr.mxu0 0.0
        %970 = vmatpush1.msra.mxu0 0.0
        %971 = vmatprep.subr.mxu0 0.0
        %972 = vmatpush1.msra.mxu0 0.0
        %973 = vmatprep.subr.mxu0 0.0
        %974 = vmatpush1.msra.mxu0 0.0
        %975 = vmatprep.subr.mxu0 0.0
        %976 = vmatpush1.msra.mxu0 0.0
        %977 = vmatprep.subr.mxu0 0.0
        %978 = vmatpush1.msra.mxu0 0.0
        %979 = vmatprep.subr.mxu0 0.0
        %980 = vmatpush1.msra.mxu0 0.0
        %981 = vmatprep.subr.mxu0 0.0
        %982 = vmatpush1.msra.mxu0 0.0
        %983 = vmatprep.subr.mxu0 0.0
        %984 = vmatpush1.msra.mxu0 0.0
        %985 = vmatprep.subr.mxu0 0.0
        %986 = vmatpush1.msra.mxu0 0.0
        %987 = vmatprep.subr.mxu0 0.0
        %988 = vmatpush1.msra.mxu0 0.0
        %989 = vmatprep.subr.mxu0 0.0
        %990 = vmatpush1.msra.mxu0 0.0
        %991 = vmatprep.subr.mxu0 0.0
        %992 = vmatpush1.msra.mxu0 0.0
        %993 = vmatprep.subr.mxu0 0.0
        %994 = vmatpush1.msra.mxu0 0.0
        %995 = vmatprep.subr.mxu0 0.0
        %996 = vmatpush1.msra.mxu0 0.0
        %997 = vmatprep.subr.mxu0 0.0
        %998 = vmatpush1.msra.mxu0 0.0
        %999 = vmatprep.subr.mxu0 0.0
        %1000 = vmatpush1.msra.mxu0 0.0
        %1001 = vmatprep.subr.mxu0 0.0
        %1002 = vmatpush1.msra.mxu0 0.0
        %1003 = vmatprep.subr.mxu0 0.0
        %1004 = vmatpush1.msra.mxu0 0.0
        %1005 = vmatprep.subr.mxu0 0.0
        %1006 = vmatpush1.msra.mxu0 0.0
        %1007 = vmatprep.subr.mxu0 0.0
        %1008 = vmatpush1.msra.mxu0 0.0
        %1009 = vmatprep.subr.mxu0 0.0
        %1010 = vmatpush1.msra.mxu0 0.0
        %1011 = vmatprep.subr.mxu0 0.0
        %1012 = vmatpush1.msra.mxu0 0.0
        %1013 = vmatprep.subr.mxu0 0.0
        %1014 = vmatpush1.msra.mxu0 0.0
        %1015 = vmatprep.subr.mxu0 0.0
        %1016 = vmatpush1.msra.mxu0 0.0
        %1017 = vmatprep.mubr.f32.mxu0 0.0
        %1018 = vmatmul.mubr.f32.gmra.mrb[0].mxu0 %v951
        %v1019 = vpop.f32.mrb[0].mxu0
        %v1020 = vadd.f32 0.0, %v1019
        %v1021 = vpop.f32.mrb[0].mxu0
        %1022 = vdwg.mxu0
        %v1023 = vadd.f32 %v943, %v1020
        %v1024 = vld [vmem:[%s384 + $0xc] sm:$0xff]
        %s1025 = scalar_lea.vmem %s2, 224
        %v1026 = vld [vmem:[%s1025] sm:$0xff]
        %v1027 = vld [vmem:[%s1025 + $0x8] sm:$0xff]
        %v1028 = vld [vmem:[%s1025 + $0x10] sm:$0xff]
        %v1029 = vld [vmem:[%s1025 + $0x18] sm:$0xff]
        %v1031 = vsel %vm386, %v1024, 0
        %1033 = vmatprep.subr.mxu0 0.0
        %1034 = vmatpush1.msra.mxu0 %v1026
        %1035 = vmatprep.subr.mxu0 0.0
        %1036 = vmatpush1.msra.mxu0 %v1027
        %1037 = vmatprep.subr.mxu0 0.0
        %1038 = vmatpush1.msra.mxu0 %v1028
        %1039 = vmatprep.subr.mxu0 0.0
        %1040 = vmatpush1.msra.mxu0 %v1029
        %1041 = vmatprep.subr.mxu0 0.0
        %1042 = vmatpush1.msra.mxu0 0.0
        %1043 = vmatprep.subr.mxu0 0.0
        %1044 = vmatpush1.msra.mxu0 0.0
        %1045 = vmatprep.subr.mxu0 0.0
        %1046 = vmatpush1.msra.mxu0 0.0
        %1047 = vmatprep.subr.mxu0 0.0
        %1048 = vmatpush1.msra.mxu0 0.0
        %1049 = vmatprep.subr.mxu0 0.0
        %1050 = vmatpush1.msra.mxu0 0.0
        %1051 = vmatprep.subr.mxu0 0.0
        %1052 = vmatpush1.msra.mxu0 0.0
        %1053 = vmatprep.subr.mxu0 0.0
        %1054 = vmatpush1.msra.mxu0 0.0
        %1055 = vmatprep.subr.mxu0 0.0
        %1056 = vmatpush1.msra.mxu0 0.0
        %1057 = vmatprep.subr.mxu0 0.0
        %1058 = vmatpush1.msra.mxu0 0.0
        %1059 = vmatprep.subr.mxu0 0.0
        %1060 = vmatpush1.msra.mxu0 0.0
        %1061 = vmatprep.subr.mxu0 0.0
        %1062 = vmatpush1.msra.mxu0 0.0
        %1063 = vmatprep.subr.mxu0 0.0
        %1064 = vmatpush1.msra.mxu0 0.0
        %1065 = vmatprep.subr.mxu0 0.0
        %1066 = vmatpush1.msra.mxu0 0.0
        %1067 = vmatprep.subr.mxu0 0.0
        %1068 = vmatpush1.msra.mxu0 0.0
        %1069 = vmatprep.subr.mxu0 0.0
        %1070 = vmatpush1.msra.mxu0 0.0
        %1071 = vmatprep.subr.mxu0 0.0
        %1072 = vmatpush1.msra.mxu0 0.0
        %1073 = vmatprep.subr.mxu0 0.0
        %1074 = vmatpush1.msra.mxu0 0.0
        %1075 = vmatprep.subr.mxu0 0.0
        %1076 = vmatpush1.msra.mxu0 0.0
        %1077 = vmatprep.subr.mxu0 0.0
        %1078 = vmatpush1.msra.mxu0 0.0
        %1079 = vmatprep.subr.mxu0 0.0
        %1080 = vmatpush1.msra.mxu0 0.0
        %1081 = vmatprep.subr.mxu0 0.0
        %1082 = vmatpush1.msra.mxu0 0.0
        %1083 = vmatprep.subr.mxu0 0.0
        %1084 = vmatpush1.msra.mxu0 0.0
        %1085 = vmatprep.subr.mxu0 0.0
        %1086 = vmatpush1.msra.mxu0 0.0
        %1087 = vmatprep.subr.mxu0 0.0
        %1088 = vmatpush1.msra.mxu0 0.0
        %1089 = vmatprep.subr.mxu0 0.0
        %1090 = vmatpush1.msra.mxu0 0.0
        %1091 = vmatprep.subr.mxu0 0.0
        %1092 = vmatpush1.msra.mxu0 0.0
        %1093 = vmatprep.subr.mxu0 0.0
        %1094 = vmatpush1.msra.mxu0 0.0
        %1095 = vmatprep.subr.mxu0 0.0
        %1096 = vmatpush1.msra.mxu0 0.0
        %1097 = vmatprep.mubr.f32.mxu0 0.0
        %1098 = vmatmul.mubr.f32.gmra.mrb[0].mxu0 %v1031
        %v1099 = vpop.f32.mrb[0].mxu0
        %v1100 = vadd.f32 0.0, %v1099
        %v1101 = vpop.f32.mrb[0].mxu0
        %1102 = vdwg.mxu0
        %v1103 = vadd.f32 %v1023, %v1100
        %v1104 = vld [vmem:[%s384 + $0x10] sm:$0xff]
        %s1105 = scalar_lea.vmem %s2, 256
        %v1106 = vld [vmem:[%s1105] sm:$0xff]
        %v1107 = vld [vmem:[%s1105 + $0x8] sm:$0xff]
        %v1108 = vld [vmem:[%s1105 + $0x10] sm:$0xff]
        %v1109 = vld [vmem:[%s1105 + $0x18] sm:$0xff]
        %v1111 = vsel %vm386, %v1104, 0
        %1113 = vmatprep.subr.mxu0 0.0
        %1114 = vmatpush1.msra.mxu0 %v1106
        %1115 = vmatprep.subr.mxu0 0.0
        %1116 = vmatpush1.msra.mxu0 %v1107
        %1117 = vmatprep.subr.mxu0 0.0
        %1118 = vmatpush1.msra.mxu0 %v1108
        %1119 = vmatprep.subr.mxu0 0.0
        %1120 = vmatpush1.msra.mxu0 %v1109
        %1121 = vmatprep.subr.mxu0 0.0
        %1122 = vmatpush1.msra.mxu0 0.0
        %1123 = vmatprep.subr.mxu0 0.0
        %1124 = vmatpush1.msra.mxu0 0.0
        %1125 = vmatprep.subr.mxu0 0.0
        %1126 = vmatpush1.msra.mxu0 0.0
        %1127 = vmatprep.subr.mxu0 0.0
        %1128 = vmatpush1.msra.mxu0 0.0
        %1129 = vmatprep.subr.mxu0 0.0
        %1130 = vmatpush1.msra.mxu0 0.0
        %1131 = vmatprep.subr.mxu0 0.0
        %1132 = vmatpush1.msra.mxu0 0.0
        %1133 = vmatprep.subr.mxu0 0.0
        %1134 = vmatpush1.msra.mxu0 0.0
        %1135 = vmatprep.subr.mxu0 0.0
        %1136 = vmatpush1.msra.mxu0 0.0
        %1137 = vmatprep.subr.mxu0 0.0
        %1138 = vmatpush1.msra.mxu0 0.0
        %1139 = vmatprep.subr.mxu0 0.0
        %1140 = vmatpush1.msra.mxu0 0.0
        %1141 = vmatprep.subr.mxu0 0.0
        %1142 = vmatpush1.msra.mxu0 0.0
        %1143 = vmatprep.subr.mxu0 0.0
        %1144 = vmatpush1.msra.mxu0 0.0
        %1145 = vmatprep.subr.mxu0 0.0
        %1146 = vmatpush1.msra.mxu0 0.0
        %1147 = vmatprep.subr.mxu0 0.0
        %1148 = vmatpush1.msra.mxu0 0.0
        %1149 = vmatprep.subr.mxu0 0.0
        %1150 = vmatpush1.msra.mxu0 0.0
        %1151 = vmatprep.subr.mxu0 0.0
        %1152 = vmatpush1.msra.mxu0 0.0
        %1153 = vmatprep.subr.mxu0 0.0
        %1154 = vmatpush1.msra.mxu0 0.0
        %1155 = vmatprep.subr.mxu0 0.0
        %1156 = vmatpush1.msra.mxu0 0.0
        %1157 = vmatprep.subr.mxu0 0.0
        %1158 = vmatpush1.msra.mxu0 0.0
        %1159 = vmatprep.subr.mxu0 0.0
        %1160 = vmatpush1.msra.mxu0 0.0
        %1161 = vmatprep.subr.mxu0 0.0
        %1162 = vmatpush1.msra.mxu0 0.0
        %1163 = vmatprep.subr.mxu0 0.0
        %1164 = vmatpush1.msra.mxu0 0.0
        %1165 = vmatprep.subr.mxu0 0.0
        %1166 = vmatpush1.msra.mxu0 0.0
        %1167 = vmatprep.subr.mxu0 0.0
        %1168 = vmatpush1.msra.mxu0 0.0
        %1169 = vmatprep.subr.mxu0 0.0
        %1170 = vmatpush1.msra.mxu0 0.0
        %1171 = vmatprep.subr.mxu0 0.0
        %1172 = vmatpush1.msra.mxu0 0.0
        %1173 = vmatprep.subr.mxu0 0.0
        %1174 = vmatpush1.msra.mxu0 0.0
        %1175 = vmatprep.subr.mxu0 0.0
        %1176 = vmatpush1.msra.mxu0 0.0
        %1177 = vmatprep.mubr.f32.mxu0 0.0
        %1178 = vmatmul.mubr.f32.gmra.mrb[0].mxu0 %v1111
        %v1179 = vpop.f32.mrb[0].mxu0
        %v1180 = vadd.f32 0.0, %v1179
        %v1181 = vpop.f32.mrb[0].mxu0
        %1182 = vdwg.mxu0
        %v1183 = vadd.f32 %v1103, %v1180
        %v1184 = vld [vmem:[%s3] sm:$0x1]
        %v1186 = vlaneseq
        %v1187 = vshrl.u32 %v1186, 7
        %v1188 = vsub.s32 0, %v1187
        %v1189 = vrot.slane %v1184, %v1188
        %v1191 = vadd.f32 %v1183, %v1189
        %v1192 = vsel %vm386, %v1191, 0.0
        %1193 = vadd.xlane.f32.xlu0 %v1192
        %v1194 = vpop.xlane.xlu0 %1193
        %v1195 = vmul.f32 %v1194, %v390
        %v1196 = vsub.f32 %v1191, %v1195
        %v1197 = vmul.f32 %v1196, %v1196
        %v1198 = vsel %vm386, %v1197, 0.0
        %1199 = vadd.xlane.f32.xlu0 %v1198
        %v1200 = vpop.xlane.xlu0 %1199
        %v1201 = vmul.f32 %v1200, %v390
        %v1202 = vadd.f32 %v1201, 1e-05
        %v1203 = vrsqrt.pop %v1202
        %v1204 = vmul.f32 %v1196, %v1203
        %v1205 = vld [vmem:[%s4] sm:$0x1]
        %v1207 = vlaneseq
        %v1208 = vshrl.u32 %v1207, 7
        %v1209 = vsub.s32 0, %v1208
        %v1210 = vrot.slane %v1205, %v1209
        %v1212 = vmul.f32 %v1204, %v1210
        %v1213 = vld [vmem:[%s5] sm:$0x1]
        %v1215 = vlaneseq
        %v1216 = vshrl.u32 %v1215, 7
        %v1217 = vsub.s32 0, %v1216
        %v1218 = vrot.slane %v1213, %v1217
        %v1220 = vadd.f32 %v1212, %v1218
        %v1221 = vld [vmem:[%s6] sm:$0xff]
        %v1222 = vld [vmem:[%s6 + $0x8] sm:$0xff]
        %v1223 = vld [vmem:[%s6 + $0x10] sm:$0xff]
        %v1224 = vld [vmem:[%s6 + $0x18] sm:$0xff]
        %v1225 = vld [vmem:[%s7] sm:$0xff]
        %v1226 = vld [vmem:[%s7 + $0x8] sm:$0xff]
        %v1227 = vld [vmem:[%s7 + $0x10] sm:$0xff]
        %v1228 = vld [vmem:[%s7 + $0x18] sm:$0xff]
        %v1230 = vsel %vm386, %v1220, 0
        %1232 = vmatprep.subr.mxu0 0.0
        %1233 = vmatpush1.msra.mxu0 %v1225
        %1234 = vmatprep.subr.mxu0 0.0
        %1235 = vmatpush1.msra.mxu0 %v1226
        %1236 = vmatprep.subr.mxu0 0.0
        %1237 = vmatpush1.msra.mxu0 %v1227
        %1238 = vmatprep.subr.mxu0 0.0
        %1239 = vmatpush1.msra.mxu0 %v1228
        %1240 = vmatprep.subr.mxu0 0.0
        %1241 = vmatpush1.msra.mxu0 0.0
        %1242 = vmatprep.subr.mxu0 0.0
        %1243 = vmatpush1.msra.mxu0 0.0
        %1244 = vmatprep.subr.mxu0 0.0
        %1245 = vmatpush1.msra.mxu0 0.0
        %1246 = vmatprep.subr.mxu0 0.0
        %1247 = vmatpush1.msra.mxu0 0.0
        %1248 = vmatprep.subr.mxu0 0.0
        %1249 = vmatpush1.msra.mxu0 0.0
        %1250 = vmatprep.subr.mxu0 0.0
        %1251 = vmatpush1.msra.mxu0 0.0
        %1252 = vmatprep.subr.mxu0 0.0
        %1253 = vmatpush1.msra.mxu0 0.0
        %1254 = vmatprep.subr.mxu0 0.0
        %1255 = vmatpush1.msra.mxu0 0.0
        %1256 = vmatprep.subr.mxu0 0.0
        %1257 = vmatpush1.msra.mxu0 0.0
        %1258 = vmatprep.subr.mxu0 0.0
        %1259 = vmatpush1.msra.mxu0 0.0
        %1260 = vmatprep.subr.mxu0 0.0
        %1261 = vmatpush1.msra.mxu0 0.0
        %1262 = vmatprep.subr.mxu0 0.0
        %1263 = vmatpush1.msra.mxu0 0.0
        %1264 = vmatprep.subr.mxu0 0.0
        %1265 = vmatpush1.msra.mxu0 0.0
        %1266 = vmatprep.subr.mxu0 0.0
        %1267 = vmatpush1.msra.mxu0 0.0
        %1268 = vmatprep.subr.mxu0 0.0
        %1269 = vmatpush1.msra.mxu0 0.0
        %1270 = vmatprep.subr.mxu0 0.0
        %1271 = vmatpush1.msra.mxu0 0.0
        %1272 = vmatprep.subr.mxu0 0.0
        %1273 = vmatpush1.msra.mxu0 0.0
        %1274 = vmatprep.subr.mxu0 0.0
        %1275 = vmatpush1.msra.mxu0 0.0
        %1276 = vmatprep.subr.mxu0 0.0
        %1277 = vmatpush1.msra.mxu0 0.0
        %1278 = vmatprep.subr.mxu0 0.0
        %1279 = vmatpush1.msra.mxu0 0.0
        %1280 = vmatprep.subr.mxu0 0.0
        %1281 = vmatpush1.msra.mxu0 0.0
        %1282 = vmatprep.subr.mxu0 0.0
        %1283 = vmatpush1.msra.mxu0 0.0
        %1284 = vmatprep.subr.mxu0 0.0
        %1285 = vmatpush1.msra.mxu0 0.0
        %1286 = vmatprep.subr.mxu0 0.0
        %1287 = vmatpush1.msra.mxu0 0.0
        %1288 = vmatprep.subr.mxu0 0.0
        %1289 = vmatpush1.msra.mxu0 0.0
        %1290 = vmatprep.subr.mxu0 0.0
        %1291 = vmatpush1.msra.mxu0 0.0
        %1292 = vmatprep.subr.mxu0 0.0
        %1293 = vmatpush1.msra.mxu0 0.0
        %1294 = vmatprep.subr.mxu0 0.0
        %1295 = vmatpush1.msra.mxu0 0.0
        %1296 = vmatprep.mubr.f32.mxu0 0.0
        %1297 = vmatmul.mubr.f32.gmra.mrb[0].mxu0 %v1230
        %v1298 = vpop.f32.mrb[0].mxu0
        %v1299 = vadd.f32 0.0, %v1298
        %v1300 = vpop.f32.mrb[0].mxu0
        %1301 = vdwg.mxu0
        %v1303 = vsel %vm386, %v467, 0
        %1305 = vmatprep.subr.mxu0 0.0
        %1306 = vmatpush1.msra.mxu0 %v1221
        %1307 = vmatprep.subr.mxu0 0.0
        %1308 = vmatpush1.msra.mxu0 %v1222
        %1309 = vmatprep.subr.mxu0 0.0
        %1310 = vmatpush1.msra.mxu0 %v1223
        %1311 = vmatprep.subr.mxu0 0.0
        %1312 = vmatpush1.msra.mxu0 %v1224
        %1313 = vmatprep.subr.mxu0 0.0
        %1314 = vmatpush1.msra.mxu0 0.0
        %1315 = vmatprep.subr.mxu0 0.0
        %1316 = vmatpush1.msra.mxu0 0.0
        %1317 = vmatprep.subr.mxu0 0.0
        %1318 = vmatpush1.msra.mxu0 0.0
        %1319 = vmatprep.subr.mxu0 0.0
        %1320 = vmatpush1.msra.mxu0 0.0
        %1321 = vmatprep.subr.mxu0 0.0
        %1322 = vmatpush1.msra.mxu0 0.0
        %1323 = vmatprep.subr.mxu0 0.0
        %1324 = vmatpush1.msra.mxu0 0.0
        %1325 = vmatprep.subr.mxu0 0.0
        %1326 = vmatpush1.msra.mxu0 0.0
        %1327 = vmatprep.subr.mxu0 0.0
        %1328 = vmatpush1.msra.mxu0 0.0
        %1329 = vmatprep.subr.mxu0 0.0
        %1330 = vmatpush1.msra.mxu0 0.0
        %1331 = vmatprep.subr.mxu0 0.0
        %1332 = vmatpush1.msra.mxu0 0.0
        %1333 = vmatprep.subr.mxu0 0.0
        %1334 = vmatpush1.msra.mxu0 0.0
        %1335 = vmatprep.subr.mxu0 0.0
        %1336 = vmatpush1.msra.mxu0 0.0
        %1337 = vmatprep.subr.mxu0 0.0
        %1338 = vmatpush1.msra.mxu0 0.0
        %1339 = vmatprep.subr.mxu0 0.0
        %1340 = vmatpush1.msra.mxu0 0.0
        %1341 = vmatprep.subr.mxu0 0.0
        %1342 = vmatpush1.msra.mxu0 0.0
        %1343 = vmatprep.subr.mxu0 0.0
        %1344 = vmatpush1.msra.mxu0 0.0
        %1345 = vmatprep.subr.mxu0 0.0
        %1346 = vmatpush1.msra.mxu0 0.0
        %1347 = vmatprep.subr.mxu0 0.0
        %1348 = vmatpush1.msra.mxu0 0.0
        %1349 = vmatprep.subr.mxu0 0.0
        %1350 = vmatpush1.msra.mxu0 0.0
        %1351 = vmatprep.subr.mxu0 0.0
        %1352 = vmatpush1.msra.mxu0 0.0
        %1353 = vmatprep.subr.mxu0 0.0
        %1354 = vmatpush1.msra.mxu0 0.0
        %1355 = vmatprep.subr.mxu0 0.0
        %1356 = vmatpush1.msra.mxu0 0.0
        %1357 = vmatprep.subr.mxu0 0.0
        %1358 = vmatpush1.msra.mxu0 0.0
        %1359 = vmatprep.subr.mxu0 0.0
        %1360 = vmatpush1.msra.mxu0 0.0
        %1361 = vmatprep.subr.mxu0 0.0
        %1362 = vmatpush1.msra.mxu0 0.0
        %1363 = vmatprep.subr.mxu0 0.0
        %1364 = vmatpush1.msra.mxu0 0.0
        %1365 = vmatprep.subr.mxu0 0.0
        %1366 = vmatpush1.msra.mxu0 0.0
        %1367 = vmatprep.subr.mxu0 0.0
        %1368 = vmatpush1.msra.mxu0 0.0
        %1369 = vmatprep.mubr.f32.mxu0 0.0
        %1370 = vmatmul.mubr.f32.gmra.mrb[0].mxu0 %v1303
        %v1371 = vpop.f32.mrb[0].mxu0
        %v1372 = vadd.f32 %v1299, %v1371
        %v1373 = vpop.f32.mrb[0].mxu0
        %1374 = vdwg.mxu0
        %v1375 = vld [vmem:[%s8] sm:$0x1]
        %v1377 = vlaneseq
        %v1378 = vshrl.u32 %v1377, 7
        %v1379 = vsub.s32 0, %v1378
        %v1380 = vrot.slane %v1375, %v1379
        %v1382 = vadd.f32 %v1372, %v1380
        %v1383 = vxor.u32 %v1382, 2147483648
        %v1384 = vmul.f32 %v1383, 1.442695
        %v1385 = vpow.pop %v1384
        %v1386 = vadd.f32 %v1385, 1.0
        %v1387 = vrcp.pop %v1386
        %v1388 = vmul.f32 1.0, %v1387
        %v1389 = vmul.f32 %v1382, %v1388
        %v1390 = vld [vmem:[%s9] sm:$0xff]
        %v1391 = vld [vmem:[%s9 + $0x8] sm:$0xff]
        %v1392 = vld [vmem:[%s9 + $0x10] sm:$0xff]
        %v1393 = vld [vmem:[%s9 + $0x18] sm:$0xff]
        %v1394 = vld [vmem:[%s9 + $0x20] sm:$0xff]
        %v1395 = vld [vmem:[%s9 + $0x28] sm:$0xff]
        %v1396 = vld [vmem:[%s9 + $0x30] sm:$0xff]
        %v1397 = vld [vmem:[%s9 + $0x38] sm:$0xff]
        %v1398 = vld [vmem:[%s10] sm:$0x1]
        %v1400 = vlaneseq
        %v1401 = vshrl.u32 %v1400, 7
        %v1402 = vsub.s32 0, %v1401
        %v1403 = vrot.slane %v1398, %v1402
        %vm1405 = vcmask 523264
        %v1407 = vsel %vm1405, %v1389, 0
        %1409 = vmatprep.subr.mxu0 0.0
        %1410 = vmatpush1.msra.mxu0 %v1390
        %1411 = vmatprep.subr.mxu0 0.0
        %1412 = vmatpush1.msra.mxu0 %v1391
        %1413 = vmatprep.subr.mxu0 0.0
        %1414 = vmatpush1.msra.mxu0 %v1392
        %1415 = vmatprep.subr.mxu0 0.0
        %1416 = vmatpush1.msra.mxu0 %v1393
        %1417 = vmatprep.subr.mxu0 0.0
        %1418 = vmatpush1.msra.mxu0 %v1394
        %1419 = vmatprep.subr.mxu0 0.0
        %1420 = vmatpush1.msra.mxu0 %v1395
        %1421 = vmatprep.subr.mxu0 0.0
        %1422 = vmatpush1.msra.mxu0 %v1396
        %1423 = vmatprep.subr.mxu0 0.0
        %1424 = vmatpush1.msra.mxu0 %v1397
        %1425 = vmatprep.subr.mxu0 0.0
        %1426 = vmatpush1.msra.mxu0 0.0
        %1427 = vmatprep.subr.mxu0 0.0
        %1428 = vmatpush1.msra.mxu0 0.0
        %1429 = vmatprep.subr.mxu0 0.0
        %1430 = vmatpush1.msra.mxu0 0.0
        %1431 = vmatprep.subr.mxu0 0.0
        %1432 = vmatpush1.msra.mxu0 0.0
        %1433 = vmatprep.subr.mxu0 0.0
        %1434 = vmatpush1.msra.mxu0 0.0
        %1435 = vmatprep.subr.mxu0 0.0
        %1436 = vmatpush1.msra.mxu0 0.0
        %1437 = vmatprep.subr.mxu0 0.0
        %1438 = vmatpush1.msra.mxu0 0.0
        %1439 = vmatprep.subr.mxu0 0.0
        %1440 = vmatpush1.msra.mxu0 0.0
        %1441 = vmatprep.subr.mxu0 0.0
        %1442 = vmatpush1.msra.mxu0 0.0
        %1443 = vmatprep.subr.mxu0 0.0
        %1444 = vmatpush1.msra.mxu0 0.0
        %1445 = vmatprep.subr.mxu0 0.0
        %1446 = vmatpush1.msra.mxu0 0.0
        %1447 = vmatprep.subr.mxu0 0.0
        %1448 = vmatpush1.msra.mxu0 0.0
        %1449 = vmatprep.subr.mxu0 0.0
        %1450 = vmatpush1.msra.mxu0 0.0
        %1451 = vmatprep.subr.mxu0 0.0
        %1452 = vmatpush1.msra.mxu0 0.0
        %1453 = vmatprep.subr.mxu0 0.0
        %1454 = vmatpush1.msra.mxu0 0.0
        %1455 = vmatprep.subr.mxu0 0.0
        %1456 = vmatpush1.msra.mxu0 0.0
        %1457 = vmatprep.subr.mxu0 0.0
        %1458 = vmatpush1.msra.mxu0 0.0
        %1459 = vmatprep.subr.mxu0 0.0
        %1460 = vmatpush1.msra.mxu0 0.0
        %1461 = vmatprep.subr.mxu0 0.0
        %1462 = vmatpush1.msra.mxu0 0.0
        %1463 = vmatprep.subr.mxu0 0.0
        %1464 = vmatpush1.msra.mxu0 0.0
        %1465 = vmatprep.subr.mxu0 0.0
        %1466 = vmatpush1.msra.mxu0 0.0
        %1467 = vmatprep.subr.mxu0 0.0
        %1468 = vmatpush1.msra.mxu0 0.0
        %1469 = vmatprep.subr.mxu0 0.0
        %1470 = vmatpush1.msra.mxu0 0.0
        %1471 = vmatprep.subr.mxu0 0.0
        %1472 = vmatpush1.msra.mxu0 0.0
        %1473 = vmatprep.mubr.f32.mxu0 0.0
        %1474 = vmatmul.mubr.f32.gmra.mrb[0].mxu0 %v1407
        %v1475 = vpop.f32.mrb[0].mxu0
        %v1476 = vadd.f32 %v1403, %v1475
        %v1477 = vpop.f32.mrb[0].mxu0
        %1478 = vdwg.mxu0
        %1479 = vst.msk [vmem:[%s379] sm:$0xff] %vm386, %v1476
        %s1480 = sand.u32 %s269, 1
        %s1481 = scalar_lea.sflag [#allocation3], %s1480
        %s1482 = sand.u32 %s269, 1
        %s1483 = smul.addr %s1482, 8
        %s1484 = scalar_lea.vmem [#allocation2], %s1483
        // Predicated region
        $region65: #{_encoder_impl.1} parent=63 // pred_check
          %p1485 = pneg %p279
        $region66: #{_encoder_impl.1} parent=63 // pred_check_branch
          %1487 = sbr.rel (%p1485) target = $region68
        $region67: #{_encoder_impl.1} parent=63 // pred_region
          %s1489 = ssub.s32 128, 128
          %1490 = vsyncadd %s1481, %s1489
          %s1491 = smul.addr %s25, 128
          %s1492 = scalar_lea.hbm %s11, %s1491
          %s1494 = sshll.u32 %s1484, 4
          %s1495 = int_to_ptr.vmem [resolvable:$true] %s1494
          %1497 = dma.vmem_to_hbm [thread:$0]  %s1495, 128, %s1492, %s1481
        $region68: #{_encoder_impl.1} parent=63 // pred_fallthru
          _
      $region64: #{_encoder_impl.1} parent=5 // pred_fallthru
        _
      %p1498 = scmp.le.s32.totalorder 2, %s20
      // Predicated region
      $region69: #{_encoder_impl.1} parent=5 // pred_check
        %p1499 = pneg %p1498
      $region70: #{_encoder_impl.1} parent=5 // pred_check_branch
        %1501 = sbr.rel (%p1499) target = $region72
      $region71: #{_encoder_impl.1} parent=5 // pred_region
        %s1502 = ssub.s32 %s20, 2
        // Predicated region
        $region73: #{_encoder_impl.1} parent=71 // pred_check
          %p1503 = pneg %p285
        $region74: #{_encoder_impl.1} parent=71 // pred_check_branch
          %1505 = sbr.rel (%p1503) target = $region76
        $region75: #{_encoder_impl.1} parent=71 // pred_region
          %s1506 = sand.u32 %s270, 1
          %s1507 = scalar_lea.sflag [#allocation3], %s1506
          %s1508 = sand.u32 %s270, 1
          %s1509 = smul.addr %s1508, 8
          %s1510 = scalar_lea.vmem [#allocation2], %s1509
          %1511 = dma.done %s1507, 128
        $region76: #{_encoder_impl.1} parent=71 // pred_fallthru
          _
      $region72: #{_encoder_impl.1} parent=5 // pred_fallthru
        _
    $region6: #{_encoder_impl.1} parent=1 // loop_footer
      %s24 = sadd.s32 1, %s20
    $region7: #{_encoder_impl.1} parent=1 // loop_footer_branch
      %19 = sbr.rel target = $region3
    $region8: #{_encoder_impl.1} parent=1 // loop_exit
      _
    %1512 = vsyncpa [#allocation3], 1
    %s1513 = scalar_lea.sflag [#allocation3], 1
    %1514 = vsyncpa %s1513, 1

</llo_original>
